<compile_context>
chip_gen: v7x
topology: tpu7x:2x2x1
jax: 0.10.0
libtpu: 0.0.40
codegen_flags: <defaults>
</compile_context>

<pallas_src>
import jax
import jax.numpy as jnp
from jax.experimental import pallas as pl
from jax.experimental.pallas import tpu as pltpu


def _round_up(v, m):
    return ((v + m - 1) // m) * m


# ----------------------------------------------------------------------------
# Kernel 1: fused 1x1-conv head, NCHW-direct / channel-major output.
#   x block   : (C, TS)            f32 (cast to bf16 in-kernel for the MXU)
#   w block   : (out_rows, C)      bf16   rows = [heat(2*nc pad->heat_p), emb/off(6 pad->8)]
#   heat out  : (heat_p, TS)       bf16, sigmoid fused (only on heat rows -> EUP-light)
#   rest out  : (8, TS)            f32   rows: 0 tl_emb, 1 br_emb, 2-3 tl_off, 4-5 br_off
# ----------------------------------------------------------------------------
def _make_head_kernel(heat_p):
    def kernel(x_ref, w_ref, b_ref, heat_ref, rest_ref):
        x = x_ref[...].astype(jnp.bfloat16)                               # (C, TS)
        acc = jnp.dot(w_ref[...], x,
                      preferred_element_type=jnp.float32) + b_ref[...]    # (out_rows, TS)
        heat_ref[...] = jax.nn.sigmoid(acc[:heat_p]).astype(jnp.bfloat16)
        rest_ref[...] = acc[heat_p:]
    return kernel


def _pick_ts(HW, want_multi):
    cands = (2048, 1024, 512, 256, 128)
    if want_multi:
        for ts in cands:
            if HW % ts == 0 and HW // ts >= 2:
                return ts
    for ts in cands:
        if HW % ts == 0:
            return ts
    return HW


def head_conv1x1(feat_cm, w_packed, b_packed, heat_p):
    # feat_cm: (B, C, H*W) f32 (contiguous view of NCHW feat - no transpose).
    B, C, HW = feat_cm.shape
    out_rows = w_packed.shape[0]
    rest_rows = out_rows - heat_p
    TS = _pick_ts(HW, want_multi=(B == 1))   # keep >=2 parallel steps for v7x dual-TC
    grid = (B, HW // TS)
    return pl.pallas_call(
        _make_head_kernel(heat_p),
        out_shape=(jax.ShapeDtypeStruct((B, heat_p, HW), jnp.bfloat16),
                   jax.ShapeDtypeStruct((B, rest_rows, HW), jnp.float32)),
        grid_spec=pltpu.PrefetchScalarGridSpec(
            num_scalar_prefetch=0,
            grid=grid,
            in_specs=[pl.BlockSpec((None, C, TS), lambda b, s: (b, 0, s)),
                      pl.BlockSpec((out_rows, C), lambda b, s: (0, 0)),
                      pl.BlockSpec((out_rows, 1), lambda b, s: (0, 0))],
            out_specs=(pl.BlockSpec((None, heat_p, TS), lambda b, s: (b, 0, s)),
                       pl.BlockSpec((None, rest_rows, TS), lambda b, s: (b, 0, s)))),
        compiler_params=pltpu.CompilerParams(
            dimension_semantics=("parallel", "parallel")),
    )(feat_cm, w_packed, b_packed)


# ----------------------------------------------------------------------------
# Kernel 2: 3x3 local-maximum keep (separable max-pool, stride 1, -inf-style padding).
# Each row of the (maps, H*W) slab is one flattened sigmoided heatmap, so every
# neighbour fetch is a lane-axis roll (XLU) with boundary masks; compute in f32,
# traffic in bf16.
# ----------------------------------------------------------------------------
def _make_local_max_kernel(H, W, HW, ksize):
    pad = (ksize - 1) // 2

    def kernel(s_ref, o_ref):
        s = s_ref[...].astype(jnp.float32)                      # (R, HW)
        c = jax.lax.broadcasted_iota(jnp.int32, s.shape, 1)     # flat spatial index
        cx = c % W                                              # column within the map
        # Row pass (neighbours c +/- d inside the same image row).
        m = s
        for d in range(1, pad + 1):
            right = jnp.where(cx < W - d, pltpu.roll(s, (-d) % HW, 1), -1.0)
            left = jnp.where(cx >= d, pltpu.roll(s, d, 1), -1.0)
            m = jnp.maximum(m, jnp.maximum(right, left))
        # Column pass (neighbours c +/- d*W, masked at the top/bottom image rows).
        hm = m
        for d in range(1, pad + 1):
            down = jnp.where(c < HW - d * W, pltpu.roll(m, (-(d * W)) % HW, 1), -1.0)
            up = jnp.where(c >= d * W, pltpu.roll(m, d * W, 1), -1.0)
            hm = jnp.maximum(hm, jnp.maximum(down, up))
        o_ref[...] = jnp.where(hm == s, s, 0.0).astype(o_ref.dtype)

    return kernel


def _pick_rows(total, HW):
    # ~4 MiB bf16 blocks (~= 8 MiB f32 equivalent), >=2 grid steps, 16-row granularity.
    budget_rows = max(16, (4 * 1024 * 1024) // (HW * 2))
    best = None
    d = 16
    while d < total:
        if total % d == 0 and d <= budget_rows:
            best = d
        d += 16
    return best if best is not None else total


def local_max(heat_rows, H, W, ksize):
    # heat_rows: (n_maps, H*W) bf16, one sigmoided map per row.
    total, HW = heat_rows.shape
    R = _pick_rows(total, HW)
    grid_n = total // R
    return pl.pallas_call(
        _make_local_max_kernel(H, W, HW, ksize),
        out_shape=jax.ShapeDtypeStruct((total, HW), heat_rows.dtype),
        grid_spec=pltpu.PrefetchScalarGridSpec(
            num_scalar_prefetch=0,
            grid=(grid_n,),
            in_specs=[pl.BlockSpec((R, HW), lambda i: (i, 0))],
            out_specs=pl.BlockSpec((R, HW), lambda i: (i, 0))),
        compiler_params=pltpu.CompilerParams(
            dimension_semantics=("parallel",),
            vmem_limit_bytes=48 * 1024 * 1024),
    )(heat_rows)


# ----------------------------------------------------------------------------
# Kernel 3: pairwise KxK corner decode (scale, clamp, score fuse, neg-masking).
# One grid step per batch element (parallel); bbox written as 4 plane stores.
# TODO(synk): at production corner_topk (e.g. 100), pad K to 128 for lane-dense stores.
# ----------------------------------------------------------------------------
def _make_decode_kernel(w_ratio, h_ratio, x_off, y_off, dist_thr):
    def kernel(tl_ref, br_ref, scores_ref, clses_ref, bbox_ref):
        tl = tl_ref[...]                                   # (K, 5): x, y, score, cls, emb
        br = br_ref[...]                                   # (5, K)
        K = tl.shape[0]
        shp = (K, K)
        tl_x = jnp.maximum(tl[:, 0:1] * w_ratio - x_off, 0.0)
        tl_y = jnp.maximum(tl[:, 1:2] * h_ratio - y_off, 0.0)
        tl_s = tl[:, 2:3]
        tl_c = tl[:, 3:4]
        tl_e = tl[:, 4:5]
        br_x = jnp.maximum(br[0:1, :] * w_ratio - x_off, 0.0)
        br_y = jnp.maximum(br[1:2, :] * h_ratio - y_off, 0.0)
        br_s = br[2:3, :]
        br_c = br[3:4, :]
        br_e = br[4:5, :]

        scores = (tl_s + br_s) * 0.5
        dists = jnp.abs(tl_e - br_e)
        neg = (tl_c != br_c) | (dists > dist_thr) | (br_x <= tl_x) | (br_y <= tl_y)

        scores_ref[...] = jnp.where(neg, -1.0, scores)
        clses_ref[...] = jnp.broadcast_to(tl_c, shp)
        bbox_ref[0] = jnp.broadcast_to(tl_x, shp)
        bbox_ref[1] = jnp.broadcast_to(tl_y, shp)
        bbox_ref[2] = jnp.broadcast_to(br_x, shp)
        bbox_ref[3] = jnp.broadcast_to(br_y, shp)

    return kernel


def decode_pairs(tl_feat, br_feat, w_ratio, h_ratio, x_off, y_off, dist_thr):
    B, K, _ = tl_feat.shape
    kernel = _make_decode_kernel(w_ratio, h_ratio, x_off, y_off, dist_thr)
    return pl.pallas_call(
        kernel,
        out_shape=(jax.ShapeDtypeStruct((B, K, K), jnp.float32),
                   jax.ShapeDtypeStruct((B, K, K), jnp.float32),
                   jax.ShapeDtypeStruct((B, 4, K, K), jnp.float32)),
        grid_spec=pltpu.PrefetchScalarGridSpec(
            num_scalar_prefetch=0,
            grid=(B,),
            in_specs=[pl.BlockSpec((None, K, 5), lambda b: (b, 0, 0)),
                      pl.BlockSpec((None, 5, K), lambda b: (b, 0, 0))],
            out_specs=(pl.BlockSpec((None, K, K), lambda b: (b, 0, 0)),
                       pl.BlockSpec((None, K, K), lambda b: (b, 0, 0)),
                       pl.BlockSpec((None, 4, K, K), lambda b: (b, 0, 0, 0)))),
        compiler_params=pltpu.CompilerParams(dimension_semantics=("parallel",)),
    )(tl_feat, br_feat)


# ----------------------------------------------------------------------------
# Kernel 4: greedy class-aware batched NMS, fully VMEM-resident.
# Candidate slab cand: (nd, 8) = [x1, y1, x2, y2, score, cls, 0, 0]; candt is its
# transpose for lane-broadcast column vectors. Per pick: argmax (via max + iota-min),
# one dynamic-sublane gather, IoU of the selected box vs all candidates on the fly
# (no N^2 matrix, no per-class box replication).
# TODO(synk): stands in for the TensorRT BatchedNMS plugin.
# ----------------------------------------------------------------------------
def _make_nms_kernel(nd, score_thr, iou_thr, max_out):
    def kernel(cand_ref, candt_ref, det_ref):
        ct = candt_ref[...]                                   # (8, nd)
        x1 = ct[0:1, :]
        y1 = ct[1:2, :]
        x2 = ct[2:3, :]
        y2 = ct[3:4, :]
        sc_all = ct[4:5, :]
        cls_all = ct[5:6, :]
        areas = jnp.maximum(x2 - x1, 0.0) * jnp.maximum(y2 - y1, 0.0)
        col = jax.lax.broadcasted_iota(jnp.int32, (1, nd), 1)
        lane8 = jax.lax.broadcasted_iota(jnp.int32, (1, 8), 1)
        defrow = jnp.where(lane8 == 5, -1.0, 0.0)             # empty slot: cls = -1

        sc0 = jnp.where(sc_all > score_thr, sc_all, -jnp.inf)

        def body(i, sc):
            best = jnp.max(sc)
            valid = best > -jnp.inf
            idx = jnp.min(jnp.where(sc == best, col, nd))     # first-occurrence argmax
            sel = cand_ref[pl.ds(idx, 1), :]                  # (1, 8) dynamic row gather
            sx1 = sel[:, 0:1]
            sy1 = sel[:, 1:2]
            sx2 = sel[:, 2:3]
            sy2 = sel[:, 3:4]
            scls = sel[:, 5:6]
            ix1 = jnp.maximum(sx1, x1)
            iy1 = jnp.maximum(sy1, y1)
            ix2 = jnp.minimum(sx2, x2)
            iy2 = jnp.minimum(sy2, y2)
            inter = jnp.maximum(ix2 - ix1, 0.0) * jnp.maximum(iy2 - iy1, 0.0)
            sarea = jnp.maximum(sx2 - sx1, 0.0) * jnp.maximum(sy2 - sy1, 0.0)
            iou = inter / jnp.maximum(areas + sarea - inter, 1e-6)
            suppress = ((iou >= iou_thr) & (cls_all == scls)) | (col == idx)
            sc_new = jnp.where(jnp.logical_and(valid, suppress), -jnp.inf, sc)
            det_ref[pl.ds(i, 1), :] = jnp.where(valid, sel, defrow)
            return sc_new

        jax.lax.fori_loop(0, max_out, body, sc0)

    return kernel


def batched_nms(scores, boxes, clses, score_thr, iou_thr, max_out):
    # scores (B, nd), boxes (B, nd, 4), clses (B, nd) -- real per-candidate classes,
    # no per-class replication (equivalent to the cls_mask + per-class NMS path when
    # score_thr > 0, since wrong-class duplicates there carry zero score).
    B, nd = scores.shape
    cand = jnp.concatenate(
        [boxes, scores[..., None], clses[..., None],
         jnp.zeros((B, nd, 2), jnp.float32)], axis=-1)                  # (B, nd, 8)
    candt = jnp.transpose(cand, (0, 2, 1))                              # (B, 8, nd)
    det = pl.pallas_call(
        _make_nms_kernel(nd, score_thr, iou_thr, max_out),
        out_shape=jax.ShapeDtypeStruct((B, max_out, 8), jnp.float32),
        grid_spec=pltpu.PrefetchScalarGridSpec(
            num_scalar_prefetch=0,
            grid=(B,),
            in_specs=[pl.BlockSpec((None, nd, 8), lambda b: (b, 0, 0)),
                      pl.BlockSpec((None, 8, nd), lambda b: (b, 0, 0))],
            out_specs=pl.BlockSpec((None, max_out, 8), lambda b: (b, 0, 0))),
        compiler_params=pltpu.CompilerParams(dimension_semantics=("parallel",)),
    )(cand, candt)
    num_det = jnp.sum(det[:, :, 4] > score_thr, axis=1).astype(jnp.int32)
    return num_det, det[:, :, 0:4], det[:, :, 4], det[:, :, 5]


# ----------------------------------------------------------------------------
# Wrapper reproducing CornerHeadWraper.forward semantics.
# ----------------------------------------------------------------------------
class CornerHeadWrapperPallas:
    def __init__(self, num_classes, feat_channels, test_cfg, key):
        self.num_classes = num_classes
        self.cfg = dict(test_cfg)
        nc = num_classes
        heat_c = 2 * nc
        out_c = heat_c + 6                 # heats(tl,br) + embs(tl,br) + offs(tl,br x2)
        heat_p = _round_up(heat_c, 16)     # bf16-friendly heat row count
        out_rows = heat_p + 8
        # TODO(synk): real mmdet CornerHead uses corner pooling + conv towers per branch;
        # a single fused 1x1 conv head (synthetic weights) stands in for them here.
        w = jax.random.normal(key, (feat_channels, out_c), jnp.float32) * 0.1
        wp = jnp.zeros((out_rows, feat_channels), jnp.float32)
        wp = wp.at[:heat_c, :].set(w[:, :heat_c].T)
        wp = wp.at[heat_p:heat_p + 6, :].set(w[:, heat_c:heat_c + 6].T)
        bp = jnp.zeros((out_rows, 1), jnp.float32)
        bp = bp.at[:heat_c, 0].set(-2.19)          # focal-loss prior on heat branches
        bp = bp.at[heat_c:heat_p, 0].set(-30.0)    # pad heat rows -> sigmoid ~= 0
        self.w_packed = wp.astype(jnp.bfloat16)    # packed once (hoisted out of forward)
        self.b_packed = bp
        self.heat_c = heat_c
        self.heat_p = heat_p
        # rest-slab rows: 0 tl_emb, 1 br_emb, 2-3 tl_off(x,y), 4-5 br_off(x,y)

    def forward(self, feat, x):
        B, C, H, W = feat.shape
        HW = H * W
        inp_h, inp_w = x.shape[2], x.shape[3]      # img_meta['pad_shape']
        nc = self.num_classes
        cfg = self.cfg
        heat_c = self.heat_c

        # --- fused 1x1 conv head (NCHW-direct, channel-major outputs) ---
        heat_bf, rest = head_conv1x1(feat.reshape(B, C, HW),
                                     self.w_packed, self.b_packed, self.heat_p)
        heat_bf = heat_bf[:, :heat_c, :]           # drop pad rows (no-op if heat_p==2*nc)

        # --- 3x3 local maximum on the bf16 heat slab ---
        heat_keep = local_max(heat_bf.reshape(B * heat_c, HW),
                              H, W, cfg['local_maximum_kernel'])
        heat_keep = heat_keep.reshape(B, heat_c, H, W)
        tl_heat = heat_keep[:, :nc]
        br_heat = heat_keep[:, nc:heat_c]

        # --- _topk (plain JAX glue) ---
        K = cfg['corner_topk']

        def topk(hm):
            flat = hm.reshape(B, nc * H * W)
            sc, inds = jax.lax.top_k(flat, K)
            clses = inds // (H * W)
            sp = inds % (H * W)
            ys = (sp // W).astype(jnp.float32)
            xs = (sp % W).astype(jnp.float32)
            return sc.astype(jnp.float32), sp, clses, ys, xs

        tl_sc, tl_inds, tl_cls, tl_ys, tl_xs = topk(tl_heat)
        br_sc, br_inds, br_cls, br_ys, br_xs = topk(br_heat)

        def gather_rows(inds):   # _transpose_and_gather_feat on the channel-major slab
            idx = jnp.broadcast_to(inds[:, None, :], (B, rest.shape[1], K))
            return jnp.take_along_axis(rest, idx, axis=2)      # (B, 8, K)

        tg = gather_rows(tl_inds)
        bg = gather_rows(br_inds)
        tl_xs = tl_xs + tg[:, 2, :]
        tl_ys = tl_ys + tg[:, 3, :]
        br_xs = br_xs + bg[:, 4, :]
        br_ys = br_ys + bg[:, 5, :]
        tl_emb_g = tg[:, 0, :]
        br_emb_g = bg[:, 1, :]

        tl_feat_pk = jnp.stack(
            [tl_xs, tl_ys, tl_sc, tl_cls.astype(jnp.float32), tl_emb_g], axis=-1)  # (B,K,5)
        br_feat_pk = jnp.stack(
            [br_xs, br_ys, br_sc, br_cls.astype(jnp.float32), br_emb_g], axis=1)   # (B,5,K)

        w_ratio = float(inp_w) / float(W)
        h_ratio = float(inp_h) / float(H)
        x_off, y_off = 0.0, 0.0              # img_meta['border'] = (0, 0, 0, 0)

        scores_kk, clses_kk, bboxes_kk = decode_pairs(
            tl_feat_pk, br_feat_pk, w_ratio, h_ratio, x_off, y_off,
            float(cfg['distance_threshold']))

        num_dets = min(int(cfg['num_dets']), K * K)
        scores_flat = scores_kk.reshape(B, K * K)
        clses_flat = clses_kk.reshape(B, K * K)
        bboxes_flat = jnp.transpose(bboxes_kk, (0, 2, 3, 1)).reshape(B, K * K, 4)

        top_scores, top_inds = jax.lax.top_k(scores_flat, num_dets)
        batch_bboxes = jnp.take_along_axis(bboxes_flat, top_inds[..., None], axis=1)
        batch_clses = jnp.take_along_axis(clses_flat, top_inds, axis=1)

        # --- wrapper epilogue: class-aware batched NMS (real classes, no replication) ---
        return batched_nms(top_scores, batch_bboxes, batch_clses,
                           float(cfg['score_thr']), float(cfg['nms_iou_threshold']),
                           int(cfg['max_per_img']))


if __name__ == "__main__":
    key = jax.random.PRNGKey(0)
    k_feat, k_x, k_w = jax.random.split(key, 3)

    B, C, H, W = 2, 16, 16, 16
    IH = IW = 64
    feat = jax.random.normal(k_feat, (B, C, H, W), jnp.float32)
    x = jax.random.normal(k_x, (B, 3, IH, IW), jnp.float32)

    test_cfg = dict(
        corner_topk=8,
        local_maximum_kernel=3,
        distance_threshold=0.5,
        num_dets=32,          # scaled down from 1000 to fit corner_topk**2 = 64
        score_thr=0.05,
        nms_iou_threshold=0.5,
        max_per_img=16,
    )

    model = CornerHeadWrapperPallas(num_classes=8, feat_channels=C,
                                    test_cfg=test_cfg, key=k_w)
    fwd = jax.jit(model.forward)
    out = fwd(feat, x)
    jax.block_until_ready(out)
    print("KERNEL_OK")
</pallas_src>

<mosaic_0001>
module attributes {stable_mosaic.version = 11 : i64} {
  func.func @kernel(%arg0: i32, %arg1: i32, %arg2: memref<1x16x256xf32, #tpu.memory_space<vmem>>, %arg3: memref<24x16xbf16, #tpu.memory_space<vmem>>, %arg4: memref<24x1xf32, #tpu.memory_space<vmem>>, %arg5: memref<1x16x256xbf16, #tpu.memory_space<vmem>>, %arg6: memref<1x8x256xf32, #tpu.memory_space<vmem>>) attributes {dimension_semantics = [#tpu.dimension_semantics<parallel>, #tpu.dimension_semantics<parallel>], iteration_bounds = array<i64: 2, 1>, scalar_prefetch = 0 : i64, scratch_operands = 0 : i64, tpu.core_type = #tpu.core_type<tc>, window_params = [{transform_indices = @transform_0, window_bounds = array<i64: 1, 16, 256>}, {pipeline_mode = #tpu.pipeline_mode<synchronous>, transform_indices = @transform_1, window_bounds = array<i64: 24, 16>}, {pipeline_mode = #tpu.pipeline_mode<synchronous>, transform_indices = @transform_2, window_bounds = array<i64: 24, 1>}, {transform_indices = @transform_3, window_bounds = array<i64: 1, 16, 256>}, {transform_indices = @transform_4, window_bounds = array<i64: 1, 8, 256>}]} {
    %c0 = arith.constant 0 : index
    %c0_0 = arith.constant 0 : index
    %c0_1 = arith.constant 0 : index
    %0 = vector.load %arg2[%c0, %c0_0, %c0_1] : memref<1x16x256xf32, #tpu.memory_space<vmem>>, vector<1x16x256xf32>
    %1 = vector.shape_cast %0 : vector<1x16x256xf32> to vector<16x256xf32>
    %2 = arith.truncf %1 : vector<16x256xf32> to vector<16x256xbf16>
    %c0_2 = arith.constant 0 : index
    %c0_3 = arith.constant 0 : index
    %3 = vector.load %arg3[%c0_2, %c0_3] : memref<24x16xbf16, #tpu.memory_space<vmem>>, vector<24x16xbf16>
    %cst = arith.constant dense<0.000000e+00> : vector<24x256xf32>
    %4 = tpu.matmul %3, %2, %cst {dimension_numbers = #tpu.dot_dimension_numbers<[1], [0], [0], [1], [0, 0, 1, 1], [], []>} : vector<24x16xbf16>, vector<16x256xbf16>, vector<24x256xf32> -> vector<24x256xf32>
    %c0_4 = arith.constant 0 : index
    %c0_5 = arith.constant 0 : index
    %5 = vector.load %arg4[%c0_4, %c0_5] : memref<24x1xf32, #tpu.memory_space<vmem>>, vector<24x1xf32>
    %6 = vector.broadcast %5 : vector<24x1xf32> to vector<24x256xf32>
    %7 = arith.addf %4, %6 : vector<24x256xf32>
    %8 = vector.extract_strided_slice %7 {offsets = [0, 0], sizes = [16, 256], strides = [1, 1]} : vector<24x256xf32> to vector<16x256xf32>
    %9 = arith.negf %8 : vector<16x256xf32>
    %10 = math.exp %9 : vector<16x256xf32>
    %cst_6 = arith.constant 1.000000e+00 : f32
    %11 = vector.broadcast %cst_6 : f32 to vector<16x256xf32>
    %12 = arith.addf %11, %10 : vector<16x256xf32>
    %13 = arith.divf %11, %12 : vector<16x256xf32>
    %14 = arith.truncf %13 : vector<16x256xf32> to vector<16x256xbf16>
    %c0_7 = arith.constant 0 : index
    %c0_8 = arith.constant 0 : index
    %c0_9 = arith.constant 0 : index
    %15 = vector.load %arg5[%c0_7, %c0_8, %c0_9] : memref<1x16x256xbf16, #tpu.memory_space<vmem>>, vector<1x16x256xbf16>
    %16 = vector.shape_cast %15 : vector<1x16x256xbf16> to vector<16x256xbf16>
    %17 = vector.shape_cast %14 : vector<16x256xbf16> to vector<1x16x256xbf16>
    tpu.vector_store %arg5[%c0_7, %c0_8, %c0_9], %17 {strides = array<i32>} : memref<1x16x256xbf16, #tpu.memory_space<vmem>>, vector<1x16x256xbf16>,
    %18 = vector.extract_strided_slice %7 {offsets = [16, 0], sizes = [8, 256], strides = [1, 1]} : vector<24x256xf32> to vector<8x256xf32>
    %c0_10 = arith.constant 0 : index
    %c0_11 = arith.constant 0 : index
    %c0_12 = arith.constant 0 : index
    %19 = vector.load %arg6[%c0_10, %c0_11, %c0_12] : memref<1x8x256xf32, #tpu.memory_space<vmem>>, vector<1x8x256xf32>
    %20 = vector.shape_cast %19 : vector<1x8x256xf32> to vector<8x256xf32>
    %21 = vector.shape_cast %18 : vector<8x256xf32> to vector<1x8x256xf32>
    tpu.vector_store %arg6[%c0_10, %c0_11, %c0_12], %21 {strides = array<i32>} : memref<1x8x256xf32, #tpu.memory_space<vmem>>, vector<1x8x256xf32>,
    return
  }
  func.func @transform_0(%arg0: i32, %arg1: i32) -> (i32, i32, i32) {
    %c0_i32 = arith.constant 0 : i32
    %c0_i32_0 = arith.constant 0 : i32
    return %arg0, %c0_i32, %arg1 : i32, i32, i32
  }
  func.func @transform_1(%arg0: i32, %arg1: i32) -> (i32, i32) {
    %c0_i32 = arith.constant 0 : i32
    %c0_i32_0 = arith.constant 0 : i32
    %c0_i32_1 = arith.constant 0 : i32
    return %c0_i32, %c0_i32_0 : i32, i32
  }
  func.func @transform_2(%arg0: i32, %arg1: i32) -> (i32, i32) {
    %c0_i32 = arith.constant 0 : i32
    %c0_i32_0 = arith.constant 0 : i32
    %c0_i32_1 = arith.constant 0 : i32
    return %c0_i32, %c0_i32_0 : i32, i32
  }
  func.func @transform_3(%arg0: i32, %arg1: i32) -> (i32, i32, i32) {
    %c0_i32 = arith.constant 0 : i32
    %c0_i32_0 = arith.constant 0 : i32
    return %arg0, %c0_i32, %arg1 : i32, i32, i32
  }
  func.func @transform_4(%arg0: i32, %arg1: i32) -> (i32, i32, i32) {
    %c0_i32 = arith.constant 0 : i32
    %c0_i32_0 = arith.constant 0 : i32
    return %arg0, %c0_i32, %arg1 : i32, i32, i32
  }
}

module attributes {stable_mosaic.version = 11 : i64} {
  func.func @kernel(%arg0: i32, %arg1: memref<16x256xbf16, #tpu.memory_space<vmem>>, %arg2: memref<16x256xbf16, #tpu.memory_space<vmem>>) attributes {dimension_semantics = [#tpu.dimension_semantics<parallel>], iteration_bounds = array<i64: 2>, scalar_prefetch = 0 : i64, scratch_operands = 0 : i64, tpu.core_type = #tpu.core_type<tc>, window_params = [{transform_indices = @transform_0, window_bounds = array<i64: 16, 256>}, {transform_indices = @transform_1, window_bounds = array<i64: 16, 256>}]} {
    %c0 = arith.constant 0 : index
    %c0_0 = arith.constant 0 : index
    %0 = vector.load %arg1[%c0, %c0_0] : memref<16x256xbf16, #tpu.memory_space<vmem>>, vector<16x256xbf16>
    %1 = arith.extf %0 : vector<16x256xbf16> to vector<16x256xf32>
    %2 = tpu.iota {dimensions = array<i32: 1>} : vector<16x256xi32>
    %c16_i32 = arith.constant 16 : i32
    %c0_i32 = arith.constant 0 : i32
    %3 = arith.cmpi eq, %c16_i32, %c0_i32 : i32
    %c1_i32 = arith.constant 1 : i32
    %4 = arith.select %3, %c1_i32, %c16_i32 : i32
    %5 = vector.broadcast %4 : i32 to vector<16x256xi32>
    %6 = arith.remsi %2, %5 : vector<16x256xi32>
    %c0_i32_1 = arith.constant 0 : i32
    %7 = vector.broadcast %c0_i32_1 : i32 to vector<16x256xi32>
    %8 = arith.cmpi ne, %6, %7 : vector<16x256xi32>
    %c0_i32_2 = arith.constant 0 : i32
    %9 = vector.broadcast %c0_i32_2 : i32 to vector<16x256xi32>
    %10 = arith.cmpi slt, %6, %9 : vector<16x256xi32>
    %c0_i32_3 = arith.constant 0 : i32
    %11 = arith.cmpi slt, %4, %c0_i32_3 : i32
    %12 = vector.broadcast %11 : i1 to vector<16x256xi1>
    %13 = vector.broadcast %12 : vector<16x256xi1> to vector<16x256xi1>
    %14 = arith.xori %10, %13 : vector<16x256xi1>
    %15 = arith.andi %14, %8 : vector<16x256xi1>
    %16 = vector.broadcast %4 : i32 to vector<16x256xi32>
    %17 = arith.addi %6, %16 : vector<16x256xi32>
    %18 = arith.select %15, %17, %6 : vector<16x256xi1>, vector<16x256xi32>
    %c15_i32 = arith.constant 15 : i32
    %19 = vector.broadcast %c15_i32 : i32 to vector<16x256xi32>
    %20 = arith.cmpi slt, %18, %19 : vector<16x256xi32>
    %c255_i32 = arith.constant 255 : i32
    %21 = tpu.dynamic_rotate %1 by %c255_i32 dim 1 : vector<16x256xf32>, i32 -> vector<16x256xf32>
    %cst = arith.constant -1.000000e+00 : f32
    %22 = vector.broadcast %cst : f32 to vector<16x256xf32>
    %23 = arith.select %20, %21, %22 : vector<16x256xi1>, vector<16x256xf32>
    %c1_i32_4 = arith.constant 1 : i32
    %24 = vector.broadcast %c1_i32_4 : i32 to vector<16x256xi32>
    %25 = arith.cmpi sge, %18, %24 : vector<16x256xi32>
    %c1_i32_5 = arith.constant 1 : i32
    %26 = tpu.dynamic_rotate %1 by %c1_i32_5 dim 1 : vector<16x256xf32>, i32 -> vector<16x256xf32>
    %cst_6 = arith.constant -1.000000e+00 : f32
    %27 = vector.broadcast %cst_6 : f32 to vector<16x256xf32>
    %28 = arith.select %25, %26, %27 : vector<16x256xi1>, vector<16x256xf32>
    %29 = arith.maximumf %23, %28 : vector<16x256xf32>
    %30 = arith.maximumf %1, %29 : vector<16x256xf32>
    %c240_i32 = arith.constant 240 : i32
    %31 = vector.broadcast %c240_i32 : i32 to vector<16x256xi32>
    %32 = arith.cmpi slt, %2, %31 : vector<16x256xi32>
    %c240_i32_7 = arith.constant 240 : i32
    %33 = tpu.dynamic_rotate %30 by %c240_i32_7 dim 1 : vector<16x256xf32>, i32 -> vector<16x256xf32>
    %cst_8 = arith.constant -1.000000e+00 : f32
    %34 = vector.broadcast %cst_8 : f32 to vector<16x256xf32>
    %35 = arith.select %32, %33, %34 : vector<16x256xi1>, vector<16x256xf32>
    %c16_i32_9 = arith.constant 16 : i32
    %36 = vector.broadcast %c16_i32_9 : i32 to vector<16x256xi32>
    %37 = arith.cmpi sge, %2, %36 : vector<16x256xi32>
    %c16_i32_10 = arith.constant 16 : i32
    %38 = tpu.dynamic_rotate %30 by %c16_i32_10 dim 1 : vector<16x256xf32>, i32 -> vector<16x256xf32>
    %cst_11 = arith.constant -1.000000e+00 : f32
    %39 = vector.broadcast %cst_11 : f32 to vector<16x256xf32>
    %40 = arith.select %37, %38, %39 : vector<16x256xi1>, vector<16x256xf32>
    %41 = arith.maximumf %35, %40 : vector<16x256xf32>
    %42 = arith.maximumf %30, %41 : vector<16x256xf32>
    %43 = arith.cmpf oeq, %42, %1 : vector<16x256xf32>
    %cst_12 = arith.constant 0.000000e+00 : f32
    %44 = vector.broadcast %cst_12 : f32 to vector<16x256xf32>
    %45 = arith.select %43, %1, %44 : vector<16x256xi1>, vector<16x256xf32>
    %46 = arith.truncf %45 : vector<16x256xf32> to vector<16x256xbf16>
    %c0_13 = arith.constant 0 : index
    %c0_14 = arith.constant 0 : index
    %47 = vector.load %arg2[%c0_13, %c0_14] : memref<16x256xbf16, #tpu.memory_space<vmem>>, vector<16x256xbf16>
    tpu.vector_store %arg2[%c0_13, %c0_14], %46 {strides = array<i32>} : memref<16x256xbf16, #tpu.memory_space<vmem>>, vector<16x256xbf16>,
    return
  }
  func.func @transform_0(%arg0: i32) -> (i32, i32) {
    %c0_i32 = arith.constant 0 : i32
    %c0_i32_0 = arith.constant 0 : i32
    return %arg0, %c0_i32 : i32, i32
  }
  func.func @transform_1(%arg0: i32) -> (i32, i32) {
    %c0_i32 = arith.constant 0 : i32
    %c0_i32_0 = arith.constant 0 : i32
    return %arg0, %c0_i32 : i32, i32
  }
}

module attributes {stable_mosaic.version = 11 : i64} {
  func.func @kernel(%arg0: i32, %arg1: memref<1x8x5xf32, #tpu.memory_space<vmem>>, %arg2: memref<1x5x8xf32, #tpu.memory_space<vmem>>, %arg3: memref<1x8x8xf32, #tpu.memory_space<vmem>>, %arg4: memref<1x8x8xf32, #tpu.memory_space<vmem>>, %arg5: memref<1x4x8x8xf32, #tpu.memory_space<vmem>>) attributes {dimension_semantics = [#tpu.dimension_semantics<parallel>], iteration_bounds = array<i64: 2>, scalar_prefetch = 0 : i64, scratch_operands = 0 : i64, tpu.core_type = #tpu.core_type<tc>, window_params = [{transform_indices = @transform_0, window_bounds = array<i64: 1, 8, 5>}, {transform_indices = @transform_1, window_bounds = array<i64: 1, 5, 8>}, {transform_indices = @transform_2, window_bounds = array<i64: 1, 8, 8>}, {transform_indices = @transform_3, window_bounds = array<i64: 1, 8, 8>}, {transform_indices = @transform_4, window_bounds = array<i64: 1, 4, 8, 8>}]} {
    %c0 = arith.constant 0 : index
    %c0_0 = arith.constant 0 : index
    %c0_1 = arith.constant 0 : index
    %0 = vector.load %arg1[%c0, %c0_0, %c0_1] : memref<1x8x5xf32, #tpu.memory_space<vmem>>, vector<1x8x5xf32>
    %1 = vector.shape_cast %0 : vector<1x8x5xf32> to vector<8x5xf32>
    %c0_2 = arith.constant 0 : index
    %c0_3 = arith.constant 0 : index
    %c0_4 = arith.constant 0 : index
    %2 = vector.load %arg2[%c0_2, %c0_3, %c0_4] : memref<1x5x8xf32, #tpu.memory_space<vmem>>, vector<1x5x8xf32>
    %3 = vector.shape_cast %2 : vector<1x5x8xf32> to vector<5x8xf32>
    %4 = vector.extract_strided_slice %1 {offsets = [0, 0], sizes = [8, 1], strides = [1, 1]} : vector<8x5xf32> to vector<8x1xf32>
    %cst = arith.constant 4.000000e+00 : f32
    %5 = vector.broadcast %cst : f32 to vector<8x1xf32>
    %6 = arith.mulf %4, %5 : vector<8x1xf32>
    %cst_5 = arith.constant 0.000000e+00 : f32
    %7 = vector.broadcast %cst_5 : f32 to vector<8x1xf32>
    %8 = arith.subf %6, %7 : vector<8x1xf32>
    %cst_6 = arith.constant 0.000000e+00 : f32
    %9 = vector.broadcast %cst_6 : f32 to vector<8x1xf32>
    %10 = arith.maximumf %8, %9 : vector<8x1xf32>
    %11 = vector.extract_strided_slice %1 {offsets = [0, 1], sizes = [8, 1], strides = [1, 1]} : vector<8x5xf32> to vector<8x1xf32>
    %cst_7 = arith.constant 4.000000e+00 : f32
    %12 = vector.broadcast %cst_7 : f32 to vector<8x1xf32>
    %13 = arith.mulf %11, %12 : vector<8x1xf32>
    %cst_8 = arith.constant 0.000000e+00 : f32
    %14 = vector.broadcast %cst_8 : f32 to vector<8x1xf32>
    %15 = arith.subf %13, %14 : vector<8x1xf32>
    %cst_9 = arith.constant 0.000000e+00 : f32
    %16 = vector.broadcast %cst_9 : f32 to vector<8x1xf32>
    %17 = arith.maximumf %15, %16 : vector<8x1xf32>
    %18 = vector.extract_strided_slice %1 {offsets = [0, 2], sizes = [8, 1], strides = [1, 1]} : vector<8x5xf32> to vector<8x1xf32>
    %19 = vector.extract_strided_slice %1 {offsets = [0, 3], sizes = [8, 1], strides = [1, 1]} : vector<8x5xf32> to vector<8x1xf32>
    %20 = vector.extract_strided_slice %1 {offsets = [0, 4], sizes = [8, 1], strides = [1, 1]} : vector<8x5xf32> to vector<8x1xf32>
    %21 = vector.extract_strided_slice %3 {offsets = [0, 0], sizes = [1, 8], strides = [1, 1]} : vector<5x8xf32> to vector<1x8xf32>
    %cst_10 = arith.constant 4.000000e+00 : f32
    %22 = vector.broadcast %cst_10 : f32 to vector<1x8xf32>
    %23 = arith.mulf %21, %22 : vector<1x8xf32>
    %cst_11 = arith.constant 0.000000e+00 : f32
    %24 = vector.broadcast %cst_11 : f32 to vector<1x8xf32>
    %25 = arith.subf %23, %24 : vector<1x8xf32>
    %cst_12 = arith.constant 0.000000e+00 : f32
    %26 = vector.broadcast %cst_12 : f32 to vector<1x8xf32>
    %27 = arith.maximumf %25, %26 : vector<1x8xf32>
    %28 = vector.extract_strided_slice %3 {offsets = [1, 0], sizes = [1, 8], strides = [1, 1]} : vector<5x8xf32> to vector<1x8xf32>
    %cst_13 = arith.constant 4.000000e+00 : f32
    %29 = vector.broadcast %cst_13 : f32 to vector<1x8xf32>
    %30 = arith.mulf %28, %29 : vector<1x8xf32>
    %cst_14 = arith.constant 0.000000e+00 : f32
    %31 = vector.broadcast %cst_14 : f32 to vector<1x8xf32>
    %32 = arith.subf %30, %31 : vector<1x8xf32>
    %cst_15 = arith.constant 0.000000e+00 : f32
    %33 = vector.broadcast %cst_15 : f32 to vector<1x8xf32>
    %34 = arith.maximumf %32, %33 : vector<1x8xf32>
    %35 = vector.extract_strided_slice %3 {offsets = [2, 0], sizes = [1, 8], strides = [1, 1]} : vector<5x8xf32> to vector<1x8xf32>
    %36 = vector.extract_strided_slice %3 {offsets = [3, 0], sizes = [1, 8], strides = [1, 1]} : vector<5x8xf32> to vector<1x8xf32>
    %37 = vector.extract_strided_slice %3 {offsets = [4, 0], sizes = [1, 8], strides = [1, 1]} : vector<5x8xf32> to vector<1x8xf32>
    %38 = vector.broadcast %18 : vector<8x1xf32> to vector<8x8xf32>
    %39 = vector.broadcast %35 : vector<1x8xf32> to vector<8x8xf32>
    %40 = arith.addf %38, %39 : vector<8x8xf32>
    %cst_16 = arith.constant 5.000000e-01 : f32
    %41 = vector.broadcast %cst_16 : f32 to vector<8x8xf32>
    %42 = arith.mulf %40, %41 : vector<8x8xf32>
    %43 = vector.broadcast %20 : vector<8x1xf32> to vector<8x8xf32>
    %44 = vector.broadcast %37 : vector<1x8xf32> to vector<8x8xf32>
    %45 = arith.subf %43, %44 : vector<8x8xf32>
    %46 = math.absf %45 : vector<8x8xf32>
    %47 = vector.broadcast %19 : vector<8x1xf32> to vector<8x8xf32>
    %48 = vector.broadcast %36 : vector<1x8xf32> to vector<8x8xf32>
    %49 = arith.cmpf one, %47, %48 : vector<8x8xf32>
    %cst_17 = arith.constant 5.000000e-01 : f32
    %50 = vector.broadcast %cst_17 : f32 to vector<8x8xf32>
    %51 = arith.cmpf ogt, %46, %50 : vector<8x8xf32>
    %52 = arith.ori %49, %51 : vector<8x8xi1>
    %53 = vector.broadcast %27 : vector<1x8xf32> to vector<8x8xf32>
    %54 = vector.broadcast %10 : vector<8x1xf32> to vector<8x8xf32>
    %55 = arith.cmpf ole, %53, %54 : vector<8x8xf32>
    %56 = arith.ori %52, %55 : vector<8x8xi1>
    %57 = vector.broadcast %34 : vector<1x8xf32> to vector<8x8xf32>
    %58 = vector.broadcast %17 : vector<8x1xf32> to vector<8x8xf32>
    %59 = arith.cmpf ole, %57, %58 : vector<8x8xf32>
    %60 = arith.ori %56, %59 : vector<8x8xi1>
    %cst_18 = arith.constant -1.000000e+00 : f32
    %61 = vector.broadcast %cst_18 : f32 to vector<8x8xf32>
    %62 = arith.select %60, %61, %42 : vector<8x8xi1>, vector<8x8xf32>
    %c0_19 = arith.constant 0 : index
    %c0_20 = arith.constant 0 : index
    %c0_21 = arith.constant 0 : index
    %63 = vector.load %arg3[%c0_19, %c0_20, %c0_21] : memref<1x8x8xf32, #tpu.memory_space<vmem>>, vector<1x8x8xf32>
    %64 = vector.shape_cast %63 : vector<1x8x8xf32> to vector<8x8xf32>
    %65 = vector.shape_cast %62 : vector<8x8xf32> to vector<1x8x8xf32>
    tpu.vector_store %arg3[%c0_19, %c0_20, %c0_21], %65 {strides = array<i32>} : memref<1x8x8xf32, #tpu.memory_space<vmem>>, vector<1x8x8xf32>,
    %66 = vector.shape_cast %19 : vector<8x1xf32> to vector<8x1xf32>
    %67 = vector.broadcast %66 : vector<8x1xf32> to vector<8x8xf32>
    %c0_22 = arith.constant 0 : index
    %c0_23 = arith.constant 0 : index
    %c0_24 = arith.constant 0 : index
    %68 = vector.load %arg4[%c0_22, %c0_23, %c0_24] : memref<1x8x8xf32, #tpu.memory_space<vmem>>, vector<1x8x8xf32>
    %69 = vector.shape_cast %68 : vector<1x8x8xf32> to vector<8x8xf32>
    %70 = vector.shape_cast %67 : vector<8x8xf32> to vector<1x8x8xf32>
    tpu.vector_store %arg4[%c0_22, %c0_23, %c0_24], %70 {strides = array<i32>} : memref<1x8x8xf32, #tpu.memory_space<vmem>>, vector<1x8x8xf32>,
    %71 = vector.shape_cast %10 : vector<8x1xf32> to vector<8x1xf32>
    %72 = vector.broadcast %71 : vector<8x1xf32> to vector<8x8xf32>
    %c0_25 = arith.constant 0 : index
    %c0_26 = arith.constant 0 : index
    %c0_27 = arith.constant 0 : index
    %c0_28 = arith.constant 0 : index
    %73 = vector.load %arg5[%c0_25, %c0_26, %c0_27, %c0_28] : memref<1x4x8x8xf32, #tpu.memory_space<vmem>>, vector<1x1x8x8xf32>
    %74 = vector.shape_cast %73 : vector<1x1x8x8xf32> to vector<8x8xf32>
    %75 = vector.shape_cast %72 : vector<8x8xf32> to vector<1x1x8x8xf32>
    tpu.vector_store %arg5[%c0_25, %c0_26, %c0_27, %c0_28], %75 {strides = array<i32>} : memref<1x4x8x8xf32, #tpu.memory_space<vmem>>, vector<1x1x8x8xf32>,
    %76 = vector.shape_cast %17 : vector<8x1xf32> to vector<8x1xf32>
    %77 = vector.broadcast %76 : vector<8x1xf32> to vector<8x8xf32>
    %c0_29 = arith.constant 0 : index
    %c1 = arith.constant 1 : index
    %c0_30 = arith.constant 0 : index
    %c0_31 = arith.constant 0 : index
    %78 = vector.load %arg5[%c0_29, %c1, %c0_30, %c0_31] : memref<1x4x8x8xf32, #tpu.memory_space<vmem>>, vector<1x1x8x8xf32>
    %79 = vector.shape_cast %78 : vector<1x1x8x8xf32> to vector<8x8xf32>
    %80 = vector.shape_cast %77 : vector<8x8xf32> to vector<1x1x8x8xf32>
    tpu.vector_store %arg5[%c0_29, %c1, %c0_30, %c0_31], %80 {strides = array<i32>} : memref<1x4x8x8xf32, #tpu.memory_space<vmem>>, vector<1x1x8x8xf32>,
    %81 = vector.shape_cast %27 : vector<1x8xf32> to vector<1x8xf32>
    %82 = vector.broadcast %81 : vector<1x8xf32> to vector<8x8xf32>
    %c0_32 = arith.constant 0 : index
    %c2 = arith.constant 2 : index
    %c0_33 = arith.constant 0 : index
    %c0_34 = arith.constant 0 : index
    %83 = vector.load %arg5[%c0_32, %c2, %c0_33, %c0_34] : memref<1x4x8x8xf32, #tpu.memory_space<vmem>>, vector<1x1x8x8xf32>
    %84 = vector.shape_cast %83 : vector<1x1x8x8xf32> to vector<8x8xf32>
    %85 = vector.shape_cast %82 : vector<8x8xf32> to vector<1x1x8x8xf32>
    tpu.vector_store %arg5[%c0_32, %c2, %c0_33, %c0_34], %85 {strides = array<i32>} : memref<1x4x8x8xf32, #tpu.memory_space<vmem>>, vector<1x1x8x8xf32>,
    %86 = vector.shape_cast %34 : vector<1x8xf32> to vector<1x8xf32>
    %87 = vector.broadcast %86 : vector<1x8xf32> to vector<8x8xf32>
    %c0_35 = arith.constant 0 : index
    %c3 = arith.constant 3 : index
    %c0_36 = arith.constant 0 : index
    %c0_37 = arith.constant 0 : index
    %88 = vector.load %arg5[%c0_35, %c3, %c0_36, %c0_37] : memref<1x4x8x8xf32, #tpu.memory_space<vmem>>, vector<1x1x8x8xf32>
    %89 = vector.shape_cast %88 : vector<1x1x8x8xf32> to vector<8x8xf32>
    %90 = vector.shape_cast %87 : vector<8x8xf32> to vector<1x1x8x8xf32>
    tpu.vector_store %arg5[%c0_35, %c3, %c0_36, %c0_37], %90 {strides = array<i32>} : memref<1x4x8x8xf32, #tpu.memory_space<vmem>>, vector<1x1x8x8xf32>,
    return
  }
  func.func @transform_0(%arg0: i32) -> (i32, i32, i32) {
    %c0_i32 = arith.constant 0 : i32
    %c0_i32_0 = arith.constant 0 : i32
    %c0_i32_1 = arith.constant 0 : i32
    return %arg0, %c0_i32, %c0_i32_0 : i32, i32, i32
  }
  func.func @transform_1(%arg0: i32) -> (i32, i32, i32) {
    %c0_i32 = arith.constant 0 : i32
    %c0_i32_0 = arith.constant 0 : i32
    %c0_i32_1 = arith.constant 0 : i32
    return %arg0, %c0_i32, %c0_i32_0 : i32, i32, i32
  }
  func.func @transform_2(%arg0: i32) -> (i32, i32, i32) {
    %c0_i32 = arith.constant 0 : i32
    %c0_i32_0 = arith.constant 0 : i32
    %c0_i32_1 = arith.constant 0 : i32
    return %arg0, %c0_i32, %c0_i32_0 : i32, i32, i32
  }
  func.func @transform_3(%arg0: i32) -> (i32, i32, i32) {
    %c0_i32 = arith.constant 0 : i32
    %c0_i32_0 = arith.constant 0 : i32
    %c0_i32_1 = arith.constant 0 : i32
    return %arg0, %c0_i32, %c0_i32_0 : i32, i32, i32
  }
  func.func @transform_4(%arg0: i32) -> (i32, i32, i32, i32) {
    %c0_i32 = arith.constant 0 : i32
    %c0_i32_0 = arith.constant 0 : i32
    %c0_i32_1 = arith.constant 0 : i32
    %c0_i32_2 = arith.constant 0 : i32
    return %arg0, %c0_i32, %c0_i32_0, %c0_i32_1 : i32, i32, i32, i32
  }
}

module attributes {stable_mosaic.version = 11 : i64} {
  func.func @kernel(%arg0: i32, %arg1: memref<1x32x8xf32, #tpu.memory_space<vmem>>, %arg2: memref<1x8x32xf32, #tpu.memory_space<vmem>>, %arg3: memref<1x16x8xf32, #tpu.memory_space<vmem>>) attributes {dimension_semantics = [#tpu.dimension_semantics<parallel>], iteration_bounds = array<i64: 2>, scalar_prefetch = 0 : i64, scratch_operands = 0 : i64, tpu.core_type = #tpu.core_type<tc>, window_params = [{transform_indices = @transform_0, window_bounds = array<i64: 1, 32, 8>}, {transform_indices = @transform_1, window_bounds = array<i64: 1, 8, 32>}, {transform_indices = @transform_2, window_bounds = array<i64: 1, 16, 8>}]} {
    %c0 = arith.constant 0 : index
    %c0_0 = arith.constant 0 : index
    %c0_1 = arith.constant 0 : index
    %0 = vector.load %arg2[%c0, %c0_0, %c0_1] : memref<1x8x32xf32, #tpu.memory_space<vmem>>, vector<1x8x32xf32>
    %1 = vector.shape_cast %0 : vector<1x8x32xf32> to vector<8x32xf32>
    %2 = vector.extract_strided_slice %1 {offsets = [0, 0], sizes = [1, 32], strides = [1, 1]} : vector<8x32xf32> to vector<1x32xf32>
    %3 = vector.extract_strided_slice %1 {offsets = [1, 0], sizes = [1, 32], strides = [1, 1]} : vector<8x32xf32> to vector<1x32xf32>
    %4 = vector.extract_strided_slice %1 {offsets = [2, 0], sizes = [1, 32], strides = [1, 1]} : vector<8x32xf32> to vector<1x32xf32>
    %5 = vector.extract_strided_slice %1 {offsets = [3, 0], sizes = [1, 32], strides = [1, 1]} : vector<8x32xf32> to vector<1x32xf32>
    %6 = vector.extract_strided_slice %1 {offsets = [4, 0], sizes = [1, 32], strides = [1, 1]} : vector<8x32xf32> to vector<1x32xf32>
    %7 = vector.extract_strided_slice %1 {offsets = [5, 0], sizes = [1, 32], strides = [1, 1]} : vector<8x32xf32> to vector<1x32xf32>
    %8 = arith.subf %4, %2 : vector<1x32xf32>
    %cst = arith.constant 0.000000e+00 : f32
    %9 = vector.broadcast %cst : f32 to vector<1x32xf32>
    %10 = arith.maximumf %8, %9 : vector<1x32xf32>
    %11 = arith.subf %5, %3 : vector<1x32xf32>
    %cst_2 = arith.constant 0.000000e+00 : f32
    %12 = vector.broadcast %cst_2 : f32 to vector<1x32xf32>
    %13 = arith.maximumf %11, %12 : vector<1x32xf32>
    %14 = arith.mulf %10, %13 : vector<1x32xf32>
    %15 = tpu.iota {dimensions = array<i32: 1>} : vector<1x32xi32>
    %16 = tpu.iota {dimensions = array<i32: 1>} : vector<1x8xi32>
    %c5_i32 = arith.constant 5 : i32
    %17 = vector.broadcast %c5_i32 : i32 to vector<1x8xi32>
    %18 = arith.cmpi eq, %16, %17 : vector<1x8xi32>
    %cst_3 = arith.constant -1.000000e+00 : f32
    %cst_4 = arith.constant 0.000000e+00 : f32
    %19 = vector.broadcast %cst_3 : f32 to vector<1x8xf32>
    %20 = vector.broadcast %cst_4 : f32 to vector<1x8xf32>
    %21 = arith.select %18, %19, %20 : vector<1x8xi1>, vector<1x8xf32>
    %cst_5 = arith.constant 5.000000e-02 : f32
    %22 = vector.broadcast %cst_5 : f32 to vector<1x32xf32>
    %23 = arith.cmpf ogt, %6, %22 : vector<1x32xf32>
    %cst_6 = arith.constant 0xFF800000 : f32
    %24 = vector.broadcast %cst_6 : f32 to vector<1x32xf32>
    %25 = arith.select %23, %6, %24 : vector<1x32xi1>, vector<1x32xf32>
    %c0_i32 = arith.constant 0 : i32
    %c16_i32 = arith.constant 16 : i32
    %26 = arith.addi %c0_i32, %c16_i32 : i32
    %c1_i32 = arith.constant 1 : i32
    %27 = scf.for %arg4 = %c0_i32 to %26 step %c1_i32 iter_args(%arg5 = %25) -> (vector<1x32xf32>)  : i32 {
      %28 = vector.shape_cast %arg5 : vector<1x32xf32> to vector<1x1x32xf32>
      %cst_8 = arith.constant dense<0xFF800000> : vector<1xf32>
      %29 = vector.multi_reduction <maximumf>, %28, %cst_8 [1, 2] : vector<1x1x32xf32> to vector<1xf32>
      %30 = vector.shape_cast %29 : vector<1xf32> to vector<1x1x1xf32>
      %31 = vector.extract %30[0, 0, 0] : f32 from vector<1x1x1xf32>
      %cst_9 = arith.constant 0xFF800000 : f32
      %32 = arith.cmpf ogt, %31, %cst_9 : f32
      %33 = vector.broadcast %31 : f32 to vector<1x32xf32>
      %34 = arith.cmpf oeq, %arg5, %33 : vector<1x32xf32>
      %c32_i32 = arith.constant 32 : i32
      %35 = vector.broadcast %c32_i32 : i32 to vector<1x32xi32>
      %36 = arith.select %34, %15, %35 : vector<1x32xi1>, vector<1x32xi32>
      %37 = vector.shape_cast %36 : vector<1x32xi32> to vector<1x1x32xi32>
      %cst_10 = arith.constant dense<2147483647> : vector<1xi32>
      %38 = vector.multi_reduction <minsi>, %37, %cst_10 [1, 2] : vector<1x1x32xi32> to vector<1xi32>
      %39 = vector.shape_cast %38 : vector<1xi32> to vector<1x1x1xi32>
      %40 = vector.extract %39[0, 0, 0] : i32 from vector<1x1x1xi32>
      %c0_11 = arith.constant 0 : index
      %41 = arith.index_cast %40 : i32 to index
      %c0_12 = arith.constant 0 : index
      %42 = vector.load %arg1[%c0_11, %41, %c0_12] : memref<1x32x8xf32, #tpu.memory_space<vmem>>, vector<1x1x8xf32>
      %43 = vector.shape_cast %42 : vector<1x1x8xf32> to vector<1x8xf32>
      %44 = vector.extract_strided_slice %43 {offsets = [0, 0], sizes = [1, 1], strides = [1, 1]} : vector<1x8xf32> to vector<1x1xf32>
      %45 = vector.extract_strided_slice %43 {offsets = [0, 1], sizes = [1, 1], strides = [1, 1]} : vector<1x8xf32> to vector<1x1xf32>
      %46 = vector.extract_strided_slice %43 {offsets = [0, 2], sizes = [1, 1], strides = [1, 1]} : vector<1x8xf32> to vector<1x1xf32>
      %47 = vector.extract_strided_slice %43 {offsets = [0, 3], sizes = [1, 1], strides = [1, 1]} : vector<1x8xf32> to vector<1x1xf32>
      %48 = vector.extract_strided_slice %43 {offsets = [0, 5], sizes = [1, 1], strides = [1, 1]} : vector<1x8xf32> to vector<1x1xf32>
      %49 = vector.broadcast %44 : vector<1x1xf32> to vector<1x32xf32>
      %50 = arith.maximumf %49, %2 : vector<1x32xf32>
      %51 = vector.broadcast %45 : vector<1x1xf32> to vector<1x32xf32>
      %52 = arith.maximumf %51, %3 : vector<1x32xf32>
      %53 = vector.broadcast %46 : vector<1x1xf32> to vector<1x32xf32>
      %54 = arith.minimumf %53, %4 : vector<1x32xf32>
      %55 = vector.broadcast %47 : vector<1x1xf32> to vector<1x32xf32>
      %56 = arith.minimumf %55, %5 : vector<1x32xf32>
      %57 = arith.subf %54, %50 : vector<1x32xf32>
      %cst_13 = arith.constant 0.000000e+00 : f32
      %58 = vector.broadcast %cst_13 : f32 to vector<1x32xf32>
      %59 = arith.maximumf %57, %58 : vector<1x32xf32>
      %60 = arith.subf %56, %52 : vector<1x32xf32>
      %cst_14 = arith.constant 0.000000e+00 : f32
      %61 = vector.broadcast %cst_14 : f32 to vector<1x32xf32>
      %62 = arith.maximumf %60, %61 : vector<1x32xf32>
      %63 = arith.mulf %59, %62 : vector<1x32xf32>
      %64 = arith.subf %46, %44 : vector<1x1xf32>
      %cst_15 = arith.constant 0.000000e+00 : f32
      %65 = vector.broadcast %cst_15 : f32 to vector<1x1xf32>
      %66 = arith.maximumf %64, %65 : vector<1x1xf32>
      %67 = arith.subf %47, %45 : vector<1x1xf32>
      %cst_16 = arith.constant 0.000000e+00 : f32
      %68 = vector.broadcast %cst_16 : f32 to vector<1x1xf32>
      %69 = arith.maximumf %67, %68 : vector<1x1xf32>
      %70 = arith.mulf %66, %69 : vector<1x1xf32>
      %71 = vector.broadcast %70 : vector<1x1xf32> to vector<1x32xf32>
      %72 = arith.addf %14, %71 : vector<1x32xf32>
      %73 = arith.subf %72, %63 : vector<1x32xf32>
      %cst_17 = arith.constant 9.99999997E-7 : f32
      %74 = vector.broadcast %cst_17 : f32 to vector<1x32xf32>
      %75 = arith.maximumf %73, %74 : vector<1x32xf32>
      %76 = arith.divf %63, %75 : vector<1x32xf32>
      %cst_18 = arith.constant 5.000000e-01 : f32
      %77 = vector.broadcast %cst_18 : f32 to vector<1x32xf32>
      %78 = arith.cmpf oge, %76, %77 : vector<1x32xf32>
      %79 = vector.broadcast %48 : vector<1x1xf32> to vector<1x32xf32>
      %80 = arith.cmpf oeq, %7, %79 : vector<1x32xf32>
      %81 = arith.andi %78, %80 : vector<1x32xi1>
      %82 = vector.broadcast %40 : i32 to vector<1x32xi32>
      %83 = arith.cmpi eq, %15, %82 : vector<1x32xi32>
      %84 = arith.ori %81, %83 : vector<1x32xi1>
      %85 = vector.broadcast %32 : i1 to vector<1x32xi1>
      %86 = arith.andi %85, %84 : vector<1x32xi1>
      %cst_19 = arith.constant 0xFF800000 : f32
      %87 = vector.broadcast %cst_19 : f32 to vector<1x32xf32>
      %88 = arith.select %86, %87, %arg5 : vector<1x32xi1>, vector<1x32xf32>
      %89 = arith.select %32, %43, %21 : vector<1x8xf32>
      %c0_20 = arith.constant 0 : index
      %90 = arith.index_cast %arg4 : i32 to index
      %c0_21 = arith.constant 0 : index
      %91 = vector.load %arg3[%c0_20, %90, %c0_21] : memref<1x16x8xf32, #tpu.memory_space<vmem>>, vector<1x1x8xf32>
      %92 = vector.shape_cast %91 : vector<1x1x8xf32> to vector<1x8xf32>
      %93 = vector.shape_cast %89 : vector<1x8xf32> to vector<1x1x8xf32>
      tpu.vector_store %arg3[%c0_20, %90, %c0_21], %93 {strides = array<i32>} : memref<1x16x8xf32, #tpu.memory_space<vmem>>, vector<1x1x8xf32>,
      scf.yield %88 : vector<1x32xf32>
    }
    %c16_i32_7 = arith.constant 16 : i32
    return
  }
  func.func @transform_0(%arg0: i32) -> (i32, i32, i32) {
    %c0_i32 = arith.constant 0 : i32
    %c0_i32_0 = arith.constant 0 : i32
    %c0_i32_1 = arith.constant 0 : i32
    return %arg0, %c0_i32, %c0_i32_0 : i32, i32, i32
  }
  func.func @transform_1(%arg0: i32) -> (i32, i32, i32) {
    %c0_i32 = arith.constant 0 : i32
    %c0_i32_0 = arith.constant 0 : i32
    %c0_i32_1 = arith.constant 0 : i32
    return %arg0, %c0_i32, %c0_i32_0 : i32, i32, i32
  }
  func.func @transform_2(%arg0: i32) -> (i32, i32, i32) {
    %c0_i32 = arith.constant 0 : i32
    %c0_i32_0 = arith.constant 0 : i32
    %c0_i32_1 = arith.constant 0 : i32
    return %arg0, %c0_i32, %c0_i32_0 : i32, i32, i32
  }
}

</mosaic_0001>

<llo_original>
// kernel: forward.5
$region0: #{forward.5}
  #allocation0 [shape = 'u32[]', space=smem, size = 0x4, offset = 0x4, fixed_abs, tag = 'smem constant byte address 0x4 - core index']
  #allocation1 [shape = 'u32[144,128]{1,0:T(1,128)}', space=vmem, size = 0x12000, scoped, tag = 'internal scratch']
  %s0 = inlined_call_operand.vmem [shape: bf16[32,256], index: 0, kind: input, shape index: {}]
  %s1 = inlined_call_operand.vmem [shape: bf16[32,256], index: 1, kind: output, shape index: {}]
  %s2 = sld [smem:[#allocation0]]
  $region37: #{forward.5} parent=0
    _
  %s4 = ssub.s32 1, %s2
  %s5 = scalar_select 0, %s4, %s2
  loop: start=0, step=1, limit=4
  $region2: #{forward.5} parent=0 // loop_pre_header
    _
  $region3: #{forward.5} parent=0 // loop_header
    %s7 = sphi 0, %s11
    %p8 = scmp.ge.s32.totalorder %s7, 4
    %s17 = sphi 0, %s19
    %s20 = sphi 0, %s17
    %s21 = sphi 0, %s20
    %s37 = sphi 0, %s21
    %s43 = sphi 0, %s45
    %s46 = sphi 0, %s43
    %s47 = sphi 0, %s46
    %s63 = sphi 0, %s47
  $region4: #{forward.5} parent=0 // loop_header_branch
    %10 = sbr.rel (%p8) target = $region8
  $region5: #{forward.5} parent=0 // loop_body
    %s12 = ssub.s32 %s7, 1
    %s13 = ssub.s32 %s7, 2
    %s14 = sadd.s32 %s7, 1
    %s15 = ssub.s32 %s7, %s14
    %p16 = scmp.eq.s32.totalorder %s15, 0
    %s18 = sadd.s32 %s17, 1
    %s19 = scalar_select %p16, %s17, %s18
    %p22 = pneg %p16
    %p23 = scmp.eq.s32.totalorder %s7, 1
    %p24 = por %p22, %p23
    %p25 = scmp.ne.s32.totalorder %s17, %s20
    %p26 = scmp.eq.s32.totalorder %s7, 0
    %p27 = por %p25, %p26
    %p28 = scmp.ne.s32.totalorder %s17, %s20
    %p29 = scmp.eq.s32.totalorder %s12, 1
    %p30 = por %p28, %p29
    %p31 = scmp.ne.s32.totalorder %s20, %s21
    %p32 = scmp.eq.s32.totalorder %s12, 0
    %p33 = por %p31, %p32
    %p34 = scmp.ne.s32.totalorder %s20, %s21
    %p35 = scmp.eq.s32.totalorder %s13, 1
    %p36 = por %p34, %p35
    %p38 = scmp.ne.s32.totalorder %s21, %s37
    %p39 = scmp.eq.s32.totalorder %s13, 0
    %p40 = por %p38, %p39
    %s41 = ssub.s32 %s7, %s14
    %p42 = scmp.eq.s32.totalorder %s41, 0
    %s44 = sadd.s32 %s43, 1
    %s45 = scalar_select %p42, %s43, %s44
    %p48 = pneg %p42
    %p49 = scmp.eq.s32.totalorder %s7, 1
    %p50 = por %p48, %p49
    %p51 = scmp.ne.s32.totalorder %s43, %s46
    %p52 = scmp.eq.s32.totalorder %s7, 0
    %p53 = por %p51, %p52
    %p54 = scmp.ne.s32.totalorder %s43, %s46
    %p55 = scmp.eq.s32.totalorder %s12, 1
    %p56 = por %p54, %p55
    %p57 = scmp.ne.s32.totalorder %s46, %s47
    %p58 = scmp.eq.s32.totalorder %s12, 0
    %p59 = por %p57, %p58
    %p60 = scmp.ne.s32.totalorder %s46, %s47
    %p61 = scmp.eq.s32.totalorder %s13, 1
    %p62 = por %p60, %p61
    %p64 = scmp.ne.s32.totalorder %s47, %s63
    %p65 = scmp.eq.s32.totalorder %s13, 0
    %p66 = por %p64, %p65
    %p67 = scmp.le.s32.totalorder 1, %s7
    %p68 = scmp.lt.s32.totalorder %s7, 3
    %p69 = pnand %p67, %p68
    %p70 = pneg %p69
    // Predicated region
    $region9: #{forward.5} parent=5 // pred_check
      _
    $region10: #{forward.5} parent=5 // pred_check_branch
      %72 = sbr.rel (%p69) target = $region12
    $region11: #{forward.5} parent=5 // pred_region
      %s73 = ssub.s32 %s7, 1
    $region12: #{forward.5} parent=5 // pred_fallthru
      _
    %p74 = scmp.lt.s32.totalorder %s7, 2
    // Predicated region
    $region13: #{forward.5} parent=5 // pred_check
      %p75 = pneg %p74
    $region14: #{forward.5} parent=5 // pred_check_branch
      %77 = sbr.rel (%p75) target = $region16
    $region15: #{forward.5} parent=5 // pred_region
      // Predicated region
      $region17: #{forward.5} parent=15 // pred_check
        %p78 = pneg %p27
      $region18: #{forward.5} parent=15 // pred_check_branch
        %80 = sbr.rel (%p78) target = $region20
      $region19: #{forward.5} parent=15 // pred_region
        %s81 = smul.u32 2, %s7
        %p82 = scmp.lt.s32.totalorder %s81, 3
        %s83 = scalar_select %p82, %s81, 3
        %s84 = smul.addr %s83, 2
        %s85 = smul.addr %s84, 4
        %s86 = scalar_lea.vmem %s0, %s85
        %s87 = smul.u32 2, %s7
      $region20: #{forward.5} parent=15 // pred_fallthru
        _
    $region16: #{forward.5} parent=5 // pred_fallthru
      _
    %p88 = scmp.le.s32.totalorder 1, %s7
    %p89 = scmp.lt.s32.totalorder %s7, 3
    %p90 = pnand %p88, %p89
    %p91 = pneg %p90
    // Predicated region
    $region21: #{forward.5} parent=5 // pred_check
      _
    $region22: #{forward.5} parent=5 // pred_check_branch
      %93 = sbr.rel (%p90) target = $region24
    $region23: #{forward.5} parent=5 // pred_region
      %s94 = ssub.s32 %s7, 1
      %s95 = smul.u32 2, %s12
      %p96 = scmp.lt.s32.totalorder %s95, 3
      %s97 = scalar_select %p96, %s95, 3
      %s98 = smul.addr %s97, 2
      %s99 = smul.addr %s98, 4
      %s100 = scalar_lea.vmem %s0, %s99
      %p101 = pneg %p33
      %p102 = pneg %p30
      %p103 = pneg %p59
      %p104 = pneg %p56
      %s105 = smul.u32 2, %s12
      %p106 = scmp.lt.s32.totalorder %s105, 3
      %s107 = scalar_select %p106, %s105, 3
      %s108 = smul.addr %s107, 2
      %s109 = smul.addr %s108, 4
      %s110 = scalar_lea.vmem %s1, %s109
      %s111 = smul.u32 2, %s12
      %p112 = scmp.lt.s32.totalorder %s111, 3
      %s113 = scalar_select %p112, %s111, 3
      %s114 = smul.addr %s113, 2
      %s115 = smul.addr %s114, 4
      %s116 = scalar_lea.vmem %s0, %s115
      %s117 = smul.u32 2, %s12
      %s118 = smul.u32 2, %s12
      %p119 = scmp.lt.s32.totalorder %s118, 3
      %s120 = scalar_select %p119, %s118, 3
      %s121 = smul.addr %s120, 2
      %s122 = smul.addr %s121, 4
      %s123 = scalar_lea.vmem %s1, %s122
      %s124 = smul.u32 2, %s12
      %v125 = vld [vmem:[%s116] sm:$0xff]
      %v126 = vld [vmem:[%s116 + $0x8] sm:$0xff]
      %v127 = vunpack.c.l.bf16 %v125
      %v128 = vunpack.c.h.bf16 %v125
      %v129 = vunpack.c.l.bf16 %v126
      %v130 = vunpack.c.h.bf16 %v126
      %v131 = vlaneseq
      %v132 = vand.u32 %v131, 127
      %v133 = vadd.s32 %v132, 128
      %vm134 = vcmp.lt.s32.totalorder %v132, 0
      %v135 = vsub.s32 0, %v132
      %v136 = vsel %vm134, %v135, %v132
      %v137 = vshrl.u32 %v136, 4
      %v138 = vand.u32 %v136, 15
      %v139 = vsub.s32 0, %v138
      %v140 = vsel %vm134, %v139, %v138
      %vm141 = vcmp.lt.s32.totalorder %v133, 0
      %v142 = vsub.s32 0, %v133
      %v143 = vsel %vm141, %v142, %v133
      %v144 = vshrl.u32 %v143, 4
      %v145 = vand.u32 %v143, 15
      %v146 = vsub.s32 0, %v145
      %v147 = vsel %vm141, %v146, %v145
      %vm148 = vcmp.ne.s32.totalorder %v140, 0
      %vm149 = vcmp.ne.s32.totalorder %v147, 0
      %vm150 = vcmp.lt.s32.totalorder %v140, 0
      %vm151 = vcmp.lt.s32.totalorder %v147, 0
      %vm152 = vmand %vm150, %vm148
      %vm153 = vmand %vm151, %vm149
      %v154 = vadd.s32 %v140, 16
      %v155 = vadd.s32 %v147, 16
      %v156 = vsel %vm152, %v154, %v140
      %v157 = vsel %vm153, %v155, %v147
      %vm158 = vcmp.lt.s32.totalorder %v156, 15
      %vm159 = vcmp.lt.s32.totalorder %v157, 15
      %160 = vrot.lane.b32.xlu0 %v127, 127
      %v161 = vpop.permute.xlu0 %160
      %162 = vrot.lane.b32.xlu0 %v129, 127
      %v163 = vpop.permute.xlu0 %162
      %164 = vrot.lane.b32.xlu0 %v128, 127
      %v165 = vpop.permute.xlu0 %164
      %166 = vrot.lane.b32.xlu0 %v130, 127
      %v167 = vpop.permute.xlu0 %166
      %vm168 = vcmp.lt.s32.totalorder %v132, 127
      %v169 = vsel %vm168, %v161, %v165
      %v170 = vsel %vm168, %v163, %v167
      %v171 = vsel %vm168, %v165, %v161
      %v172 = vsel %vm168, %v167, %v163
      %v173 = vsel %vm158, %v169, -1.0
      %v174 = vsel %vm159, %v171, -1.0
      %v175 = vsel %vm158, %v170, -1.0
      %v176 = vsel %vm159, %v172, -1.0
      %vm177 = vcmp.ge.s32.totalorder %v156, 1
      %vm178 = vcmp.ge.s32.totalorder %v157, 1
      %179 = vrot.lane.b32.xlu0 %v127, 1
      %v180 = vpop.permute.xlu0 %179
      %181 = vrot.lane.b32.xlu0 %v129, 1
      %v182 = vpop.permute.xlu0 %181
      %183 = vrot.lane.b32.xlu0 %v128, 1
      %v184 = vpop.permute.xlu0 %183
      %185 = vrot.lane.b32.xlu0 %v130, 1
      %v186 = vpop.permute.xlu0 %185
      %vm187 = vcmp.lt.s32.totalorder %v132, 1
      %v188 = vsel %vm187, %v180, %v184
      %v189 = vsel %vm187, %v182, %v186
      %v190 = vsel %vm187, %v184, %v180
      %v191 = vsel %vm187, %v186, %v182
      %v192 = vsel %vm177, %v190, -1.0
      %v193 = vsel %vm178, %v188, -1.0
      %v194 = vsel %vm177, %v191, -1.0
      %v195 = vsel %vm178, %v189, -1.0
      %v196 = vmax.f32 %v173, %v192
      %v197 = vmax.f32 %v174, %v193
      %v198 = vmax.f32 %v175, %v194
      %v199 = vmax.f32 %v176, %v195
      %v200 = vmax.f32 %v127, %v196
      %v201 = vmax.f32 %v128, %v197
      %v202 = vmax.f32 %v129, %v198
      %v203 = vmax.f32 %v130, %v199
      %vm204 = vcmp.lt.s32.totalorder %v132, 240
      %vm205 = vcmp.lt.s32.totalorder %v133, 240
      %206 = vrot.lane.b32.xlu0 %v200, 112
      %v207 = vpop.permute.xlu0 %206
      %208 = vrot.lane.b32.xlu0 %v202, 112
      %v209 = vpop.permute.xlu0 %208
      %210 = vrot.lane.b32.xlu0 %v201, 112
      %v211 = vpop.permute.xlu0 %210
      %212 = vrot.lane.b32.xlu0 %v203, 112
      %v213 = vpop.permute.xlu0 %212
      %vm214 = vcmp.lt.s32.totalorder %v132, 112
      %v215 = vsel %vm214, %v207, %v211
      %v216 = vsel %vm214, %v209, %v213
      %v217 = vsel %vm214, %v211, %v207
      %v218 = vsel %vm214, %v213, %v209
      %v219 = vsel %vm204, %v215, -1.0
      %v220 = vsel %vm205, %v217, -1.0
      %v221 = vsel %vm204, %v216, -1.0
      %v222 = vsel %vm205, %v218, -1.0
      %vm223 = vcmp.ge.s32.totalorder %v132, 16
      %vm224 = vcmp.ge.s32.totalorder %v133, 16
      %225 = vrot.lane.b32.xlu0 %v200, 16
      %v226 = vpop.permute.xlu0 %225
      %227 = vrot.lane.b32.xlu0 %v202, 16
      %v228 = vpop.permute.xlu0 %227
      %229 = vrot.lane.b32.xlu0 %v201, 16
      %v230 = vpop.permute.xlu0 %229
      %231 = vrot.lane.b32.xlu0 %v203, 16
      %v232 = vpop.permute.xlu0 %231
      %vm233 = vcmp.lt.s32.totalorder %v132, 16
      %v234 = vsel %vm233, %v226, %v230
      %v235 = vsel %vm233, %v228, %v232
      %v236 = vsel %vm233, %v230, %v226
      %v237 = vsel %vm233, %v232, %v228
      %v238 = vsel %vm223, %v236, -1.0
      %v239 = vsel %vm224, %v234, -1.0
      %v240 = vsel %vm223, %v237, -1.0
      %v241 = vsel %vm224, %v235, -1.0
      %v242 = vmax.f32 %v219, %v238
      %v243 = vmax.f32 %v220, %v239
      %v244 = vmax.f32 %v221, %v240
      %v245 = vmax.f32 %v222, %v241
      %v246 = vmax.f32 %v200, %v242
      %v247 = vmax.f32 %v201, %v243
      %v248 = vmax.f32 %v202, %v244
      %v249 = vmax.f32 %v203, %v245
      %vm250 = vcmp.eq.f32.partialorder %v246, %v127
      %vm251 = vcmp.eq.f32.partialorder %v247, %v128
      %vm252 = vcmp.eq.f32.partialorder %v248, %v129
      %vm253 = vcmp.eq.f32.partialorder %v249, %v130
      %v254 = vsel %vm250, %v127, 0.0
      %v255 = vsel %vm251, %v128, 0.0
      %v256 = vsel %vm252, %v129, 0.0
      %v257 = vsel %vm253, %v130, 0.0
      %v258 = vpack.c.bf16 %v256, %v254
      %v259 = vpack.c.bf16 %v257, %v255
      %v262 = vunpack.c.l.b16 %v258
      %v263 = vunpack.c.l.b16 %v259
      %v264 = vunpack.c.h.b16 %v258
      %v265 = vunpack.c.h.b16 %v259
      %v266 = vpack.c.b16 %v263, %v262
      %v267 = vpack.c.b16 %v265, %v264
      %270 = vst [vmem:[%s123] sm:$0xff] %v266
      %271 = vst [vmem:[%s123 + $0x8] sm:$0xff] %v267
      %s272 = smul.u32 2, %s12
      %p273 = scmp.lt.s32.totalorder %s272, 3
      %s274 = scalar_select %p273, %s272, 3
      %s275 = smul.addr %s274, 2
      %s276 = smul.addr %s275, 4
      %s277 = scalar_lea.vmem %s1, %s276
      // Predicated region
      $region25: #{forward.5} parent=23 // pred_check
        %p278 = pneg %p56
      $region26: #{forward.5} parent=23 // pred_check_branch
        %280 = sbr.rel (%p278) target = $region28
      $region27: #{forward.5} parent=23 // pred_region
        %s281 = smul.u32 2, %s12
      $region28: #{forward.5} parent=23 // pred_fallthru
        _
    $region24: #{forward.5} parent=5 // pred_fallthru
      _
    %p282 = scmp.le.s32.totalorder 2, %s7
    // Predicated region
    $region29: #{forward.5} parent=5 // pred_check
      %p283 = pneg %p282
    $region30: #{forward.5} parent=5 // pred_check_branch
      %285 = sbr.rel (%p283) target = $region32
    $region31: #{forward.5} parent=5 // pred_region
      %s286 = ssub.s32 %s7, 2
      // Predicated region
      $region33: #{forward.5} parent=31 // pred_check
        %p287 = pneg %p62
      $region34: #{forward.5} parent=31 // pred_check_branch
        %289 = sbr.rel (%p287) target = $region36
      $region35: #{forward.5} parent=31 // pred_region
        %s290 = smul.u32 2, %s13
        %p291 = scmp.lt.s32.totalorder %s290, 3
        %s292 = scalar_select %p291, %s290, 3
        %s293 = smul.addr %s292, 2
        %s294 = smul.addr %s293, 4
        %s295 = scalar_lea.vmem %s1, %s294
      $region36: #{forward.5} parent=31 // pred_fallthru
        _
    $region32: #{forward.5} parent=5 // pred_fallthru
      _
  $region6: #{forward.5} parent=0 // loop_footer
    %s11 = sadd.s32 1, %s7
  $region7: #{forward.5} parent=0 // loop_footer_branch
    %6 = sbr.rel target = $region3
  $region8: #{forward.5} parent=0 // loop_exit
    _

// kernel: forward.4
$region0: #{forward.4}
  #allocation0 [shape = 'u32[]', space=smem, size = 0x4, offset = 0x4, fixed_abs, tag = 'smem constant byte address 0x4 - core index']
  #allocation1 [shape = 'u32[144,128]{1,0:T(1,128)}', space=vmem, size = 0x12000, scoped, tag = 'internal scratch']
  %s0 = inlined_call_operand.vmem [shape: f32[2,16,256], index: 0, kind: input, shape index: {}]
  %s1 = inlined_call_operand.vmem [shape: bf16[24,16], index: 1, kind: input, shape index: {}]
  %s2 = inlined_call_operand.vmem [shape: f32[24,1], index: 2, kind: input, shape index: {}]
  %s3 = inlined_call_operand.vmem [shape: bf16[2,16,256], index: 3, kind: output, shape index: {0}]
  %s4 = inlined_call_operand.vmem [shape: f32[2,8,256], index: 4, kind: output, shape index: {1}]
  %5 = xla_tuple %s3, %s4
  %s6 = sld [smem:[#allocation0]]
  $region53: #{forward.4} parent=0
    _
  %s8 = ssub.s32 1, %s6
  %s9 = scalar_select 0, %s8, %s6
  loop: start=0, step=1, limit=4
  $region2: #{forward.4} parent=0 // loop_pre_header
    _
  $region3: #{forward.4} parent=0 // loop_header
    %s11 = sphi 0, %s15
    %p12 = scmp.ge.s32.totalorder %s11, 4
    %s18 = sphi 0, %s30
    %s19 = sphi 0, %s26
    %s20 = sphi 0, %s18
    %s21 = sphi 0, %s19
    %s22 = sphi 0, %s20
    %s23 = sphi 0, %s21
    %s35 = sphi 0, %s37
    %s38 = sphi 0, %s35
    %s39 = sphi 0, %s38
    %s55 = sphi 0, %s39
    %s59 = sphi 0, %s59
    %s61 = sphi 0, %s59
    %s62 = sphi 0, %s61
    %s76 = sphi 0, %s62
    %s80 = sphi 0, %s80
    %s82 = sphi 0, %s80
    %s83 = sphi 0, %s82
    %s97 = sphi 0, %s83
    %s105 = sphi 0, %s107
    %s108 = sphi 0, %s105
    %s109 = sphi 0, %s108
    %s125 = sphi 0, %s109
    %s133 = sphi 0, %s135
    %s136 = sphi 0, %s133
    %s137 = sphi 0, %s136
    %s153 = sphi 0, %s137
  $region4: #{forward.4} parent=0 // loop_header_branch
    %14 = sbr.rel (%p12) target = $region8
  $region5: #{forward.4} parent=0 // loop_body
    %s16 = ssub.s32 %s11, 1
    %s17 = ssub.s32 %s11, 2
    %s24 = sadd.s32 1, %s19
    %p25 = scmp.ge.s32.totalorder %s24, 1
    %s26 = scalar_select %p25, 0, %s24
    %s27 = sadd.s32 1, %s18
    %s28 = scalar_select %p25, %s27, %s18
    %p29 = scmp.ge.s32.totalorder %s28, 2
    %s30 = scalar_select %p29, 0, %s28
    %s31 = ssub.s32 %s18, %s30
    %s32 = ssub.s32 %s19, %s26
    %s33 = sor.u32 %s31, %s32
    %p34 = scmp.eq.s32.totalorder %s33, 0
    %s36 = sadd.s32 %s35, 1
    %s37 = scalar_select %p34, %s35, %s36
    %p40 = pneg %p34
    %p41 = scmp.eq.s32.totalorder %s11, 1
    %p42 = por %p40, %p41
    %p43 = scmp.ne.s32.totalorder %s35, %s38
    %p44 = scmp.eq.s32.totalorder %s11, 0
    %p45 = por %p43, %p44
    %p46 = scmp.ne.s32.totalorder %s35, %s38
    %p47 = scmp.eq.s32.totalorder %s16, 1
    %p48 = por %p46, %p47
    %p49 = scmp.ne.s32.totalorder %s38, %s39
    %p50 = scmp.eq.s32.totalorder %s16, 0
    %p51 = por %p49, %p50
    %p52 = scmp.ne.s32.totalorder %s38, %s39
    %p53 = scmp.eq.s32.totalorder %s17, 1
    %p54 = por %p52, %p53
    %p56 = scmp.ne.s32.totalorder %s39, %s55
    %p57 = scmp.eq.s32.totalorder %s17, 0
    %p58 = por %p56, %p57
    %s60 = sadd.s32 %s59, 1
    %p63 = scmp.eq.s32.totalorder %s11, 1
    %p64 = scmp.ne.s32.totalorder %s59, %s61
    %p65 = scmp.eq.s32.totalorder %s11, 0
    %p66 = por %p64, %p65
    %p67 = scmp.ne.s32.totalorder %s59, %s61
    %p68 = scmp.eq.s32.totalorder %s16, 1
    %p69 = por %p67, %p68
    %p70 = scmp.ne.s32.totalorder %s61, %s62
    %p71 = scmp.eq.s32.totalorder %s16, 0
    %p72 = por %p70, %p71
    %p73 = scmp.ne.s32.totalorder %s61, %s62
    %p74 = scmp.eq.s32.totalorder %s17, 1
    %p75 = por %p73, %p74
    %p77 = scmp.ne.s32.totalorder %s62, %s76
    %p78 = scmp.eq.s32.totalorder %s17, 0
    %p79 = por %p77, %p78
    %s81 = sadd.s32 %s80, 1
    %p84 = scmp.eq.s32.totalorder %s11, 1
    %p85 = scmp.ne.s32.totalorder %s80, %s82
    %p86 = scmp.eq.s32.totalorder %s11, 0
    %p87 = por %p85, %p86
    %p88 = scmp.ne.s32.totalorder %s80, %s82
    %p89 = scmp.eq.s32.totalorder %s16, 1
    %p90 = por %p88, %p89
    %p91 = scmp.ne.s32.totalorder %s82, %s83
    %p92 = scmp.eq.s32.totalorder %s16, 0
    %p93 = por %p91, %p92
    %p94 = scmp.ne.s32.totalorder %s82, %s83
    %p95 = scmp.eq.s32.totalorder %s17, 1
    %p96 = por %p94, %p95
    %p98 = scmp.ne.s32.totalorder %s83, %s97
    %p99 = scmp.eq.s32.totalorder %s17, 0
    %p100 = por %p98, %p99
    %s101 = ssub.s32 %s18, %s30
    %s102 = ssub.s32 %s19, %s26
    %s103 = sor.u32 %s101, %s102
    %p104 = scmp.eq.s32.totalorder %s103, 0
    %s106 = sadd.s32 %s105, 1
    %s107 = scalar_select %p104, %s105, %s106
    %p110 = pneg %p104
    %p111 = scmp.eq.s32.totalorder %s11, 1
    %p112 = por %p110, %p111
    %p113 = scmp.ne.s32.totalorder %s105, %s108
    %p114 = scmp.eq.s32.totalorder %s11, 0
    %p115 = por %p113, %p114
    %p116 = scmp.ne.s32.totalorder %s105, %s108
    %p117 = scmp.eq.s32.totalorder %s16, 1
    %p118 = por %p116, %p117
    %p119 = scmp.ne.s32.totalorder %s108, %s109
    %p120 = scmp.eq.s32.totalorder %s16, 0
    %p121 = por %p119, %p120
    %p122 = scmp.ne.s32.totalorder %s108, %s109
    %p123 = scmp.eq.s32.totalorder %s17, 1
    %p124 = por %p122, %p123
    %p126 = scmp.ne.s32.totalorder %s109, %s125
    %p127 = scmp.eq.s32.totalorder %s17, 0
    %p128 = por %p126, %p127
    %s129 = ssub.s32 %s18, %s30
    %s130 = ssub.s32 %s19, %s26
    %s131 = sor.u32 %s129, %s130
    %p132 = scmp.eq.s32.totalorder %s131, 0
    %s134 = sadd.s32 %s133, 1
    %s135 = scalar_select %p132, %s133, %s134
    %p138 = pneg %p132
    %p139 = scmp.eq.s32.totalorder %s11, 1
    %p140 = por %p138, %p139
    %p141 = scmp.ne.s32.totalorder %s133, %s136
    %p142 = scmp.eq.s32.totalorder %s11, 0
    %p143 = por %p141, %p142
    %p144 = scmp.ne.s32.totalorder %s133, %s136
    %p145 = scmp.eq.s32.totalorder %s16, 1
    %p146 = por %p144, %p145
    %p147 = scmp.ne.s32.totalorder %s136, %s137
    %p148 = scmp.eq.s32.totalorder %s16, 0
    %p149 = por %p147, %p148
    %p150 = scmp.ne.s32.totalorder %s136, %s137
    %p151 = scmp.eq.s32.totalorder %s17, 1
    %p152 = por %p150, %p151
    %p154 = scmp.ne.s32.totalorder %s137, %s153
    %p155 = scmp.eq.s32.totalorder %s17, 0
    %p156 = por %p154, %p155
    %p157 = scmp.le.s32.totalorder 1, %s11
    %p158 = scmp.lt.s32.totalorder %s11, 3
    %p159 = pnand %p157, %p158
    %p160 = pneg %p159
    // Predicated region
    $region9: #{forward.4} parent=5 // pred_check
      _
    $region10: #{forward.4} parent=5 // pred_check_branch
      %162 = sbr.rel (%p159) target = $region12
    $region11: #{forward.4} parent=5 // pred_region
      %s163 = ssub.s32 %s11, 1
      // Predicated region
      $region13: #{forward.4} parent=11 // pred_check
        %p164 = pneg %p72
      $region14: #{forward.4} parent=11 // pred_check_branch
        %166 = sbr.rel (%p164) target = $region16
      $region15: #{forward.4} parent=11 // pred_region
        _
      $region16: #{forward.4} parent=11 // pred_fallthru
        _
      // Predicated region
      $region17: #{forward.4} parent=11 // pred_check
        %p167 = pneg %p93
      $region18: #{forward.4} parent=11 // pred_check_branch
        %169 = sbr.rel (%p167) target = $region20
      $region19: #{forward.4} parent=11 // pred_region
        _
      $region20: #{forward.4} parent=11 // pred_fallthru
        _
    $region12: #{forward.4} parent=5 // pred_fallthru
      _
    %p170 = scmp.lt.s32.totalorder %s11, 2
    // Predicated region
    $region21: #{forward.4} parent=5 // pred_check
      %p171 = pneg %p170
    $region22: #{forward.4} parent=5 // pred_check_branch
      %173 = sbr.rel (%p171) target = $region24
    $region23: #{forward.4} parent=5 // pred_region
      // Predicated region
      $region25: #{forward.4} parent=23 // pred_check
        %p174 = pneg %p45
      $region26: #{forward.4} parent=23 // pred_check_branch
        %176 = sbr.rel (%p174) target = $region28
      $region27: #{forward.4} parent=23 // pred_region
        %s177 = smul.u32 2, %s19
        %p178 = scmp.lt.s32.totalorder %s18, 1
        %s179 = scalar_select %p178, %s18, 1
        %p180 = scmp.lt.s32.totalorder %s177, 1
        %s181 = scalar_select %p180, %s177, 1
        %s182 = smul.addr %s179, 4
        %s183 = sadd.s32 %s181, %s182
        %s184 = smul.addr %s183, 8
        %s185 = scalar_lea.vmem %s0, %s184
        %s186 = smul.u32 2, %s19
      $region28: #{forward.4} parent=23 // pred_fallthru
        _
    $region24: #{forward.4} parent=5 // pred_fallthru
      _
    %p187 = scmp.le.s32.totalorder 1, %s11
    %p188 = scmp.lt.s32.totalorder %s11, 3
    %p189 = pnand %p187, %p188
    %p190 = pneg %p189
    // Predicated region
    $region29: #{forward.4} parent=5 // pred_check
      _
    $region30: #{forward.4} parent=5 // pred_check_branch
      %192 = sbr.rel (%p189) target = $region32
    $region31: #{forward.4} parent=5 // pred_region
      %s193 = ssub.s32 %s11, 1
      %s194 = smul.u32 2, %s21
      %p195 = scmp.lt.s32.totalorder %s20, 1
      %s196 = scalar_select %p195, %s20, 1
      %p197 = scmp.lt.s32.totalorder %s194, 1
      %s198 = scalar_select %p197, %s194, 1
      %s199 = smul.addr %s196, 4
      %s200 = sadd.s32 %s198, %s199
      %s201 = smul.addr %s200, 8
      %s202 = scalar_lea.vmem %s0, %s201
      %p203 = pneg %p51
      %p204 = pneg %p48
      %p205 = pneg %p72
      %p206 = pneg %p69
      %p207 = pneg %p93
      %p208 = pneg %p90
      %p209 = pneg %p121
      %p210 = pneg %p118
      %s211 = smul.u32 2, %s21
      %p212 = scmp.lt.s32.totalorder %s20, 1
      %s213 = scalar_select %p212, %s20, 1
      %p214 = scmp.lt.s32.totalorder %s211, 1
      %s215 = scalar_select %p214, %s211, 1
      %s216 = smul.addr %s213, 4
      %s217 = sadd.s32 %s215, %s216
      %s218 = smul.addr %s217, 4
      %s219 = scalar_lea.vmem %s3, %s218
      %p220 = pneg %p149
      %p221 = pneg %p146
      %s222 = smul.u32 2, %s21
      %p223 = scmp.lt.s32.totalorder %s20, 1
      %s224 = scalar_select %p223, %s20, 1
      %p225 = scmp.lt.s32.totalorder %s222, 1
      %s226 = scalar_select %p225, %s222, 1
      %s227 = smul.addr %s224, 2
      %s228 = sadd.s32 %s226, %s227
      %s229 = smul.addr %s228, 8
      %s230 = scalar_lea.vmem %s4, %s229
      %s231 = smul.u32 2, %s21
      %p232 = scmp.lt.s32.totalorder %s20, 1
      %s233 = scalar_select %p232, %s20, 1
      %p234 = scmp.lt.s32.totalorder %s231, 1
      %s235 = scalar_select %p234, %s231, 1
      %s236 = smul.addr %s233, 4
      %s237 = sadd.s32 %s235, %s236
      %s238 = smul.addr %s237, 8
      %s239 = scalar_lea.vmem %s0, %s238
      %s240 = smul.u32 2, %s21
      %s241 = smul.u32 2, %s21
      %p242 = scmp.lt.s32.totalorder %s20, 1
      %s243 = scalar_select %p242, %s20, 1
      %p244 = scmp.lt.s32.totalorder %s241, 1
      %s245 = scalar_select %p244, %s241, 1
      %s246 = smul.addr %s243, 4
      %s247 = sadd.s32 %s245, %s246
      %s248 = smul.addr %s247, 4
      %s249 = scalar_lea.vmem %s3, %s248
      %s250 = smul.u32 2, %s21
      %s251 = smul.u32 2, %s21
      %p252 = scmp.lt.s32.totalorder %s20, 1
      %s253 = scalar_select %p252, %s20, 1
      %p254 = scmp.lt.s32.totalorder %s251, 1
      %s255 = scalar_select %p254, %s251, 1
      %s256 = smul.addr %s253, 2
      %s257 = sadd.s32 %s255, %s256
      %s258 = smul.addr %s257, 8
      %s259 = scalar_lea.vmem %s4, %s258
      %s260 = smul.u32 2, %s21
      %v262 = vld [vmem:[%s239] sm:$0xff]
      %v263 = vld [vmem:[%s239 + $0x8] sm:$0xff]
      %v264 = vld [vmem:[%s239 + $0x10] sm:$0xff]
      %v265 = vld [vmem:[%s239 + $0x18] sm:$0xff]
      %v266 = vpack.c.bf16 %v264, %v262
      %v267 = vpack.c.bf16 %v265, %v263
      %v268 = vld [vmem:[%s1] sm:$0xf]
      %v269 = vld [vmem:[%s1 + $0x4] sm:$0xf]
      %v270 = vld [vmem:[%s1 + $0x8] sm:$0xf]
      %v271 = vld [vmem:[%s2] sm:$0xff]
      %v272 = vld [vmem:[%s2 + $0x8] sm:$0xff]
      %v273 = vld [vmem:[%s2 + $0x10] sm:$0xff]
      %275 = vset.pattern.permute.xlu0 0
      %276 = vperm.xlu0 %275, %v271
      %v277 = vpop.permute.xlu0 %276
      %280 = vset.pattern.permute.xlu0 0
      %281 = vperm.xlu0 %280, %v272
      %v282 = vpop.permute.xlu0 %281
      %285 = vset.pattern.permute.xlu0 0
      %286 = vperm.xlu0 %285, %v273
      %v287 = vpop.permute.xlu0 %286
      %v292 = vunpack.c.l.b16 %v268
      %v293 = vunpack.c.l.b16 %v269
      %v294 = vunpack.c.l.b16 %v270
      %v295 = vpack.c.b16 %v293, %v292
      %v296 = vpack.c.b16 %v294, %v294
      %vm297 = vcmask 130048
      %v299 = vsel %vm297, %v295, 0
      %v302 = vsel %vm297, %v296, 0
      %304 = vmatprep.subr.bf16.mxu0 %v267
      %305 = vmatpush1.bf16.msra.mxu0 %v266
      %306 = vmatprep.subr.bf16.mxu0 0
      %307 = vmatpush1.bf16.msra.mxu0 0
      %308 = vmatprep.subr.bf16.mxu0 0
      %309 = vmatpush1.bf16.msra.mxu0 0
      %310 = vmatprep.subr.bf16.mxu0 0
      %311 = vmatpush1.bf16.msra.mxu0 0
      %312 = vmatprep.subr.bf16.mxu0 0
      %313 = vmatpush1.bf16.msra.mxu0 0
      %314 = vmatprep.subr.bf16.mxu0 0
      %315 = vmatpush1.bf16.msra.mxu0 0
      %316 = vmatprep.subr.bf16.mxu0 0
      %317 = vmatpush1.bf16.msra.mxu0 0
      %318 = vmatprep.subr.bf16.mxu0 0
      %319 = vmatpush1.bf16.msra.mxu0 0
      %320 = vmatprep.subr.bf16.mxu0 0
      %321 = vmatpush1.bf16.msra.mxu0 0
      %322 = vmatprep.subr.bf16.mxu0 0
      %323 = vmatpush1.bf16.msra.mxu0 0
      %324 = vmatprep.subr.bf16.mxu0 0
      %325 = vmatpush1.bf16.msra.mxu0 0
      %326 = vmatprep.subr.bf16.mxu0 0
      %327 = vmatpush1.bf16.msra.mxu0 0
      %328 = vmatprep.subr.bf16.mxu0 0
      %329 = vmatpush1.bf16.msra.mxu0 0
      %330 = vmatprep.subr.bf16.mxu0 0
      %331 = vmatpush1.bf16.msra.mxu0 0
      %332 = vmatprep.subr.bf16.mxu0 0
      %333 = vmatpush1.bf16.msra.mxu0 0
      %334 = vmatprep.subr.bf16.mxu0 0
      %335 = vmatpush1.bf16.msra.mxu0 0
      %336 = vmatprep.mubr.bf16.mxu0 0
      %337 = vmatmul.mubr.bf16.gmra.mrb[0].mxu0 %v299
      %v338 = vpop.f32.mrb[0].mxu0
      %v339 = vadd.f32 %v277, %v338
      %v340 = vpop.f32.mrb[0].mxu0
      %v341 = vadd.f32 %v277, %v340
      %v342 = vpop.f32.mrb[0].mxu0
      %v343 = vadd.f32 %v282, %v342
      %v344 = vpop.f32.mrb[0].mxu0
      %v345 = vadd.f32 %v282, %v344
      %346 = vmatprep.mubr.bf16.mxu0 0
      %347 = vmatmul.mubr.bf16.gmra.mrb[0].mxu0 %v302
      %v348 = vpop.f32.mrb[0].mxu0
      %v349 = vadd.f32 %v287, %v348
      %v350 = vpop.f32.mrb[0].mxu0
      %v351 = vadd.f32 %v287, %v350
      %v352 = vpop.f32.mrb[0].mxu0
      %v353 = vpop.f32.mrb[0].mxu0
      %354 = vdwg.mxu0
      %v355 = vxor.u32 %v339, 2147483648
      %v356 = vxor.u32 %v341, 2147483648
      %v357 = vxor.u32 %v343, 2147483648
      %v358 = vxor.u32 %v345, 2147483648
      %v359 = vmul.f32 %v355, 1.442695
      %v360 = vpow.pop %v359
      %v361 = vmul.f32 %v356, 1.442695
      %v362 = vpow.pop %v361
      %v363 = vmul.f32 %v357, 1.442695
      %v364 = vpow.pop %v363
      %v365 = vmul.f32 %v358, 1.442695
      %v366 = vpow.pop %v365
      %v367 = vadd.f32 %v360, 1.0
      %v368 = vadd.f32 %v362, 1.0
      %v369 = vadd.f32 %v364, 1.0
      %v370 = vadd.f32 %v366, 1.0
      %v371 = vrcp.pop %v367
      %v372 = vmul.f32 1.0, %v371
      %v373 = vrcp.pop %v368
      %v374 = vmul.f32 1.0, %v373
      %v375 = vrcp.pop %v369
      %v376 = vmul.f32 1.0, %v375
      %v377 = vrcp.pop %v370
      %v378 = vmul.f32 1.0, %v377
      %v379 = vpack.c.bf16 %v376, %v372
      %v380 = vpack.c.bf16 %v378, %v374
      %v383 = vunpack.c.l.b16 %v379
      %v384 = vunpack.c.l.b16 %v380
      %v385 = vunpack.c.h.b16 %v379
      %v386 = vunpack.c.h.b16 %v380
      %v387 = vpack.c.b16 %v384, %v383
      %v388 = vpack.c.b16 %v386, %v385
      %391 = vst [vmem:[%s249] sm:$0xff] %v387
      %392 = vst [vmem:[%s249 + $0x8] sm:$0xff] %v388
      %393 = vst [vmem:[%s259] sm:$0xff] %v349
      %394 = vst [vmem:[%s259 + $0x8] sm:$0xff] %v351
      %s395 = smul.u32 2, %s21
      %p396 = scmp.lt.s32.totalorder %s20, 1
      %s397 = scalar_select %p396, %s20, 1
      %p398 = scmp.lt.s32.totalorder %s395, 1
      %s399 = scalar_select %p398, %s395, 1
      %s400 = smul.addr %s397, 4
      %s401 = sadd.s32 %s399, %s400
      %s402 = smul.addr %s401, 4
      %s403 = scalar_lea.vmem %s3, %s402
      %s404 = smul.u32 2, %s21
      %p405 = scmp.lt.s32.totalorder %s20, 1
      %s406 = scalar_select %p405, %s20, 1
      %p407 = scmp.lt.s32.totalorder %s404, 1
      %s408 = scalar_select %p407, %s404, 1
      %s409 = smul.addr %s406, 2
      %s410 = sadd.s32 %s408, %s409
      %s411 = smul.addr %s410, 8
      %s412 = scalar_lea.vmem %s4, %s411
      // Predicated region
      $region33: #{forward.4} parent=31 // pred_check
        %p413 = pneg %p118
      $region34: #{forward.4} parent=31 // pred_check_branch
        %415 = sbr.rel (%p413) target = $region36
      $region35: #{forward.4} parent=31 // pred_region
        %s416 = smul.u32 2, %s21
      $region36: #{forward.4} parent=31 // pred_fallthru
        _
      // Predicated region
      $region37: #{forward.4} parent=31 // pred_check
        %p417 = pneg %p146
      $region38: #{forward.4} parent=31 // pred_check_branch
        %419 = sbr.rel (%p417) target = $region40
      $region39: #{forward.4} parent=31 // pred_region
        %s420 = smul.u32 2, %s21
      $region40: #{forward.4} parent=31 // pred_fallthru
        _
    $region32: #{forward.4} parent=5 // pred_fallthru
      _
    %p421 = scmp.le.s32.totalorder 2, %s11
    // Predicated region
    $region41: #{forward.4} parent=5 // pred_check
      %p422 = pneg %p421
    $region42: #{forward.4} parent=5 // pred_check_branch
      %424 = sbr.rel (%p422) target = $region44
    $region43: #{forward.4} parent=5 // pred_region
      %s425 = ssub.s32 %s11, 2
      // Predicated region
      $region45: #{forward.4} parent=43 // pred_check
        %p426 = pneg %p124
      $region46: #{forward.4} parent=43 // pred_check_branch
        %428 = sbr.rel (%p426) target = $region48
      $region47: #{forward.4} parent=43 // pred_region
        %s429 = smul.u32 2, %s23
        %p430 = scmp.lt.s32.totalorder %s22, 1
        %s431 = scalar_select %p430, %s22, 1
        %p432 = scmp.lt.s32.totalorder %s429, 1
        %s433 = scalar_select %p432, %s429, 1
        %s434 = smul.addr %s431, 4
        %s435 = sadd.s32 %s433, %s434
        %s436 = smul.addr %s435, 4
        %s437 = scalar_lea.vmem %s3, %s436
      $region48: #{forward.4} parent=43 // pred_fallthru
        _
      // Predicated region
      $region49: #{forward.4} parent=43 // pred_check
        %p438 = pneg %p152
      $region50: #{forward.4} parent=43 // pred_check_branch
        %440 = sbr.rel (%p438) target = $region52
      $region51: #{forward.4} parent=43 // pred_region
        %s441 = smul.u32 2, %s23
        %p442 = scmp.lt.s32.totalorder %s22, 1
        %s443 = scalar_select %p442, %s22, 1
        %p444 = scmp.lt.s32.totalorder %s441, 1
        %s445 = scalar_select %p444, %s441, 1
        %s446 = smul.addr %s443, 2
        %s447 = sadd.s32 %s445, %s446
        %s448 = smul.addr %s447, 8
        %s449 = scalar_lea.vmem %s4, %s448
      $region52: #{forward.4} parent=43 // pred_fallthru
        _
    $region44: #{forward.4} parent=5 // pred_fallthru
      _
  $region6: #{forward.4} parent=0 // loop_footer
    %s15 = sadd.s32 1, %s11
  $region7: #{forward.4} parent=0 // loop_footer_branch
    %10 = sbr.rel target = $region3
  $region8: #{forward.4} parent=0 // loop_exit
    _

// kernel: custom-call.1
$region0: #{custom-call.1}
  #allocation0 [shape = 'u32[8,128]{1,0}', space=vmem, size = 0x1000, scoped, tag = 'scratch']
  #allocation1 [shape = 'u32[8,128]{1,0}', space=vmem, size = 0x1000, scoped, tag = 'scratch']
  #allocation2 [shape = 'u32[8,128]{1,0}', space=vmem, size = 0x1000, scoped, tag = 'scratch']
  #allocation3 [shape = 'u32[8,128]{1,0}', space=vmem, size = 0x1000, scoped, tag = 'scratch']
  #allocation4 [shape = 'u32[8,128]{1,0}', space=vmem, size = 0x1000, scoped, tag = 'scratch']
  #allocation5 [shape = 'u32[8,128]{1,0}', space=vmem, size = 0x1000, scoped, tag = 'scratch']
  #allocation6 [shape = 'u32[8,128]{1,0}', space=vmem, size = 0x1000, scoped, tag = 'scratch']
  %s0 = inlined_call_operand.vmem [shape: bf16[2,2048], index: 0, kind: input, shape index: {}]
  %s1 = inlined_call_operand.vmem [shape: bf16[2,8], index: 1, kind: output, shape index: {0}]
  %s2 = inlined_call_operand.vmem [shape: s32[2,8], index: 2, kind: output, shape index: {1}]
  %3 = xla_tuple %s1, %s2
  %4 = xla_tuple 2147483648, 2147483647
  $region1: #{custom-call.1} parent=0
    #allocation7 [shape = 'u8[4096]{0}', space=vmem, size = 0x1000, scoped, tag = 'operand span for operand 1']
    #allocation8 [shape = 'u8[512]{0}', space=vmem, size = 0x400, scoped, tag = 'packed  for operand 1']
    #allocation9 [shape = 'u8[4096]{0}', space=vmem, size = 0x1000, scoped, tag = 'operand span for operand 2']
    #allocation10 [shape = 'u8[1024]{0}', space=vmem, size = 0x400, scoped, tag = 'packed  for operand 2']
    #allocation11 [shape = 'f32[8,2]{1,0:T(8,128)}', space=vmem, size = 0x1000, scoped, tag = 'scoped memory for custom-call.1']
    #allocation12 [shape = 'f32[8,2]{1,0:T(8,128)}', space=vmem, size = 0x1000, scoped, tag = 'scoped memory for custom-call.1']
    #allocation13 [shape = 's32[8,2]{1,0:T(8,128)}', space=vmem, size = 0x1000, scoped, tag = 'scoped memory for custom-call.1']
    #allocation14 [shape = 's32[8,2]{1,0:T(8,128)}', space=vmem, size = 0x1000, scoped, tag = 'scoped memory for custom-call.1']
    %5 = xla_tuple [#allocation7], [#allocation9]
    %6 = vst [vmem:[#allocation11] sm:$0xff] 2147483648
    %7 = vst [vmem:[#allocation13] sm:$0xff] 2147483647
    %8 = xla_tuple [#allocation11], [#allocation13]
    %9 = xla_tuple [#allocation12], [#allocation14]
    $region2: #{custom-call.1} parent=1
      #allocation15 [shape = 'u8[16384]{0}', space=vmem, size = 0x4000, scoped, tag = 'operand span for operand 0']
      #allocation16 [shape = 'u8[8192]{0}', space=vmem, size = 0x2000, scoped, tag = 'packed  for operand 0']
      #allocation17 [shape = 's32[4096]{0}', space=vmem, size = 0x4000, scoped, tag = 'scoped memory for custom-call.1']
      // Predicated region
      $region3: #{custom-call.1} parent=2 // pred_check
        _
      $region4: #{custom-call.1} parent=2 // pred_check_branch
        %11 = sbr.rel (0) target = $region6
      $region5: #{custom-call.1} parent=2 // pred_region
        // Predicated region
        $region7: #{custom-call.1} parent=5 // pred_check
          _
        $region8: #{custom-call.1} parent=5 // pred_check_branch
          %13 = sbr.rel (0) target = $region10
        $region9: #{custom-call.1} parent=5 // pred_region
          // Predicated region
          $region11: #{custom-call.1} parent=9 // pred_check
            _
          $region12: #{custom-call.1} parent=9 // pred_check_branch
            %15 = sbr.rel (0) target = $region14
          $region13: #{custom-call.1} parent=9 // pred_region
            loop: start=0, step=1, limit=1
            $region15: #{custom-call.1} parent=13 // loop_pre_header
              _
            $region16: #{custom-call.1} parent=13 // loop_header
              %s17 = sphi 0, %s21
              %p18 = scmp.ge.s32.totalorder %s17, 1
              %s22 = sphi %s0, %s0
              %s23 = sphi [#allocation16], [#allocation16]
            $region17: #{custom-call.1} parent=13 // loop_header_branch
              %20 = sbr.rel (%p18) target = $region21
            $region18: #{custom-call.1} parent=13 // loop_body
              %v24 = vld [vmem:[%s22] sm:$0xff]
              %25 = vst [vmem:[%s23] sm:$0xff] %v24
              %v26 = vld [vmem:[%s22 + $0x8] sm:$0xff]
              %27 = vst [vmem:[%s23 + $0x8] sm:$0xff] %v26
            $region19: #{custom-call.1} parent=13 // loop_footer
              %s21 = sadd.s32 1, %s17
            $region20: #{custom-call.1} parent=13 // loop_footer_branch
              %16 = sbr.rel target = $region16
            $region21: #{custom-call.1} parent=13 // loop_exit
              _
          $region14: #{custom-call.1} parent=9 // pred_fallthru
            _
          // Predicated region
          $region22: #{custom-call.1} parent=9 // pred_check
            _
          $region23: #{custom-call.1} parent=9 // pred_check_branch
            %29 = sbr.rel target = $region25
          $region24: #{custom-call.1} parent=9 // pred_region
            _
          $region25: #{custom-call.1} parent=9 // pred_fallthru
            _
        $region10: #{custom-call.1} parent=5 // pred_fallthru
          _
        %30 = vnop
      $region6: #{custom-call.1} parent=2 // pred_fallthru
        _
      // Predicated region
      $region26: #{custom-call.1} parent=2 // pred_check
        _
      $region27: #{custom-call.1} parent=2 // pred_check_branch
        %32 = sbr.rel (0) target = $region29
      $region28: #{custom-call.1} parent=2 // pred_region
        _
      $region29: #{custom-call.1} parent=2 // pred_fallthru
        _
      %s34 = smul.u32 4, 2
      %s35 = sshllo.u32 0, %s34
      %s36 = smul.addr 4, 3
      %s37 = scalar_lea.vmem [#allocation16], %s36
      %s38 = sshrl.u32 %s35, 1
      %s39 = sor.u32 %s35, %s38
      %s40 = sand.u32 %s39, 85
      %s41 = sshrl.u32 %s40, 1
      %s42 = sor.u32 %s40, %s41
      %s43 = sand.u32 51, %s42
      %s44 = sshrl.u32 %s43, 2
      %s45 = sor.u32 %s43, %s44
      %s46 = sand.u32 15, %s45
      %v47 = vld [vmem:[%s37] sm:%s46]
      %v48 = vunpack.c.l.bf16 %v47
      %v49 = vunpack.c.h.bf16 %v47
      %s50 = scalar_lea.vmem [#allocation15], 24
      %51 = vst [vmem:[%s50] sm:%s35] %v48
      %s52 = smul.addr 4, 2
      %s53 = scalar_lea.vmem [#allocation16], %s52
      %s54 = sshrl.u32 %s35, 1
      %s55 = sor.u32 %s35, %s54
      %s56 = sand.u32 %s55, 85
      %s57 = sshrl.u32 %s56, 1
      %s58 = sor.u32 %s56, %s57
      %s59 = sand.u32 51, %s58
      %s60 = sshrl.u32 %s59, 2
      %s61 = sor.u32 %s59, %s60
      %s62 = sand.u32 15, %s61
      %v63 = vld [vmem:[%s53] sm:%s62]
      %v64 = vunpack.c.l.bf16 %v63
      %v65 = vunpack.c.h.bf16 %v63
      %s66 = scalar_lea.vmem [#allocation15], 16
      %67 = vst [vmem:[%s66] sm:%s35] %v64
      %s68 = scalar_lea.vmem [#allocation16], 4
      %s69 = sshrl.u32 %s35, 1
      %s70 = sor.u32 %s35, %s69
      %s71 = sand.u32 %s70, 85
      %s72 = sshrl.u32 %s71, 1
      %s73 = sor.u32 %s71, %s72
      %s74 = sand.u32 51, %s73
      %s75 = sshrl.u32 %s74, 2
      %s76 = sor.u32 %s74, %s75
      %s77 = sand.u32 15, %s76
      %v78 = vld [vmem:[%s68] sm:%s77]
      %v79 = vunpack.c.l.bf16 %v78
      %v80 = vunpack.c.h.bf16 %v78
      %s81 = scalar_lea.vmem [#allocation15], 8
      %82 = vst [vmem:[%s81] sm:%s35] %v79
      %s83 = sshrl.u32 %s35, 1
      %s84 = sor.u32 %s35, %s83
      %s85 = sand.u32 %s84, 85
      %s86 = sshrl.u32 %s85, 1
      %s87 = sor.u32 %s85, %s86
      %s88 = sand.u32 51, %s87
      %s89 = sshrl.u32 %s88, 2
      %s90 = sor.u32 %s88, %s89
      %s91 = sand.u32 15, %s90
      %v92 = vld [vmem:[#allocation16] sm:%s91]
      %v93 = vunpack.c.l.bf16 %v92
      %v94 = vunpack.c.h.bf16 %v92
      %95 = vst [vmem:[#allocation15] sm:%s35] %v93
      %v96 = vlaneseq
      %v97 = vand.u32 %v96, 127
      %v98 = vlaneseq
      %v99 = vshrl.u32 %v98, 7
      %v100 = vshrl.u32 %v99, 1
      %v101 = vand.u32 %v99, 1
      %v102 = vmul.u32 %v100, 128
      %v103 = vadd.s32 %v97, %v102
      %v105 = vld [vmem:[#allocation15] sm:$0xff]
      %vm106 = vcmp.lt.s32.totalorder %v105, 0
      %v107 = vsub.s32 2147483647, %v105
      %v108 = vsel %vm106, %v107, %v105
      %vm110 = vcmp.lt.s32.totalorder %v103, 2048
      %v111 = vsel %vm110, %v108, 2147483648
      %112 = vst [vmem:[#allocation15] sm:$0xff] %v111
      %s113 = scalar_lea.vmem [#allocation15], 8
      %v114 = vld [vmem:[%s113] sm:$0xff]
      %vm115 = vcmp.lt.s32.totalorder %v114, 0
      %v116 = vsub.s32 2147483647, %v114
      %v117 = vsel %vm115, %v116, %v114
      %v118 = vadd.s32 %v103, 512
      %vm119 = vcmp.lt.s32.totalorder %v118, 2048
      %v120 = vsel %vm119, %v117, 2147483648
      %121 = vst [vmem:[%s113] sm:$0xff] %v120
      %s122 = scalar_lea.vmem [#allocation15], 16
      %v123 = vld [vmem:[%s122] sm:$0xff]
      %vm124 = vcmp.lt.s32.totalorder %v123, 0
      %v125 = vsub.s32 2147483647, %v123
      %v126 = vsel %vm124, %v125, %v123
      %v127 = vadd.s32 %v103, 1024
      %vm128 = vcmp.lt.s32.totalorder %v127, 2048
      %v129 = vsel %vm128, %v126, 2147483648
      %130 = vst [vmem:[%s122] sm:$0xff] %v129
      %s131 = scalar_lea.vmem [#allocation15], 24
      %v132 = vld [vmem:[%s131] sm:$0xff]
      %vm133 = vcmp.lt.s32.totalorder %v132, 0
      %v134 = vsub.s32 2147483647, %v132
      %v135 = vsel %vm133, %v134, %v132
      %v136 = vadd.s32 %v103, 1536
      %vm137 = vcmp.lt.s32.totalorder %v136, 2048
      %v138 = vsel %vm137, %v135, 2147483648
      %139 = vst [vmem:[%s131] sm:$0xff] %v138
      %v140 = vlaneseq
      %v141 = vand.u32 %v140, 127
      %v142 = vlaneseq
      %v143 = vshrl.u32 %v142, 7
      %v144 = vshrl.u32 %v143, 1
      %v145 = vand.u32 %v143, 1
      %v146 = vmul.u32 %v144, 128
      %v147 = vadd.s32 %v141, %v146
      %150 = vst [vmem:[#allocation17] sm:$0xff] %v147
      %v151 = vadd.s32 %v147, 512
      %s152 = scalar_lea.vmem [#allocation17], 8
      %153 = vst [vmem:[%s152] sm:$0xff] %v151
      %v154 = vadd.s32 %v147, 1024
      %s155 = scalar_lea.vmem [#allocation17], 16
      %156 = vst [vmem:[%s155] sm:$0xff] %v154
      %v157 = vadd.s32 %v147, 1536
      %s158 = scalar_lea.vmem [#allocation17], 24
      %159 = vst [vmem:[%s158] sm:$0xff] %v157
      %160 = xla_tuple [#allocation15], [#allocation17]
      %161 = vst [vmem:[#allocation12] sm:$0xff] 2147483648
      %162 = vst [vmem:[#allocation14] sm:$0xff] 2147483647
      %163 = xla_tuple [#allocation12], [#allocation14]
      loop: start=0, step=1, limit=8
      $region30: #{custom-call.1} parent=2 // loop_pre_header
        _
      $region31: #{custom-call.1} parent=2 // loop_header
        %s165 = sphi 0, %s169
        %p166 = scmp.ge.s32.totalorder %s165, 8
      $region32: #{custom-call.1} parent=2 // loop_header_branch
        %168 = sbr.rel (%p166) target = $region36
      $region33: #{custom-call.1} parent=2 // loop_body
        %v170 = vld [vmem:[#allocation15] sm:$0xff]
        %v171 = vld [vmem:[#allocation17] sm:$0xff]
        %172 = xla_tuple %v170, %v171
        %s173 = scalar_lea.vmem [#allocation15], 8
        %v174 = vld [vmem:[%s173] sm:$0xff]
        %s175 = scalar_lea.vmem [#allocation17], 8
        %v176 = vld [vmem:[%s175] sm:$0xff]
        %177 = xla_tuple %v174, %v176
        %vm178 = vcmp.gt.s32.totalorder %v174, %v170
        %vm179 = vcmp.eq.s32.totalorder %v174, %v170
        %vm180 = vcmp.lt.s32.totalorder %v176, %v171
        %vm181 = vmand %vm179, %vm180
        %vm182 = vmor %vm178, %vm181
        %v183 = vsel %vm182, %v174, %v170
        %v184 = vsel %vm182, %v176, %v171
        %185 = xla_tuple %v183, %v184
        %s186 = scalar_lea.vmem [#allocation15], 16
        %v187 = vld [vmem:[%s186] sm:$0xff]
        %s188 = scalar_lea.vmem [#allocation17], 16
        %v189 = vld [vmem:[%s188] sm:$0xff]
        %190 = xla_tuple %v187, %v189
        %vm191 = vcmp.gt.s32.totalorder %v187, %v183
        %vm192 = vcmp.eq.s32.totalorder %v187, %v183
        %vm193 = vcmp.lt.s32.totalorder %v189, %v184
        %vm194 = vmand %vm192, %vm193
        %vm195 = vmor %vm191, %vm194
        %v196 = vsel %vm195, %v187, %v183
        %v197 = vsel %vm195, %v189, %v184
        %198 = xla_tuple %v196, %v197
        %s199 = scalar_lea.vmem [#allocation15], 24
        %v200 = vld [vmem:[%s199] sm:$0xff]
        %s201 = scalar_lea.vmem [#allocation17], 24
        %v202 = vld [vmem:[%s201] sm:$0xff]
        %203 = xla_tuple %v200, %v202
        %vm204 = vcmp.gt.s32.totalorder %v200, %v196
        %vm205 = vcmp.eq.s32.totalorder %v200, %v196
        %vm206 = vcmp.lt.s32.totalorder %v202, %v197
        %vm207 = vmand %vm205, %vm206
        %vm208 = vmor %vm204, %vm207
        %v209 = vsel %vm208, %v200, %v196
        %v210 = vsel %vm208, %v202, %v197
        %211 = xla_tuple %v209, %v210
        %v212 = vrot.slane %v209, 2
        %v213 = vrot.slane %v210, 2
        %214 = xla_tuple %v212, %v213
        %vm215 = vcmp.gt.s32.totalorder %v212, %v209
        %vm216 = vcmp.eq.s32.totalorder %v212, %v209
        %vm217 = vcmp.lt.s32.totalorder %v213, %v210
        %vm218 = vmand %vm216, %vm217
        %vm219 = vmor %vm215, %vm218
        %v220 = vsel %vm219, %v212, %v209
        %v221 = vsel %vm219, %v213, %v210
        %222 = xla_tuple %v220, %v221
        %v223 = vrot.slane %v220, 2
        %v224 = vrot.slane %v221, 2
        %225 = xla_tuple %v223, %v224
        %vm226 = vcmp.gt.s32.totalorder %v223, %v220
        %vm227 = vcmp.eq.s32.totalorder %v223, %v220
        %vm228 = vcmp.lt.s32.totalorder %v224, %v221
        %vm229 = vmand %vm227, %vm228
        %vm230 = vmor %vm226, %vm229
        %v231 = vsel %vm230, %v223, %v220
        %v232 = vsel %vm230, %v224, %v221
        %233 = xla_tuple %v231, %v232
        %v234 = vrot.slane %v231, 2
        %v235 = vrot.slane %v232, 2
        %236 = xla_tuple %v234, %v235
        %vm237 = vcmp.gt.s32.totalorder %v234, %v231
        %vm238 = vcmp.eq.s32.totalorder %v234, %v231
        %vm239 = vcmp.lt.s32.totalorder %v235, %v232
        %vm240 = vmand %vm238, %vm239
        %vm241 = vmor %vm237, %vm240
        %v242 = vsel %vm241, %v234, %v231
        %v243 = vsel %vm241, %v235, %v232
        %244 = xla_tuple %v242, %v243
        %245 = vxpose.xlu0.b32.start [1/16] %v242, 128
        %246 = vxpose.xlu0.b32.cont [2/16] %v242, 128
        %247 = vxpose.xlu0.b32.cont [3/16] %v242, 128
        %248 = vxpose.xlu0.b32.cont [4/16] %v242, 128
        %249 = vxpose.xlu0.b32.cont [5/16] %v242, 128
        %250 = vxpose.xlu0.b32.cont [6/16] %v242, 128
        %251 = vxpose.xlu0.b32.cont [7/16] %v242, 128
        %252 = vxpose.xlu0.b32.cont [8/16] %v242, 128
        %253 = vxpose.xlu0.b32.cont [9/16] %v242, 128
        %254 = vxpose.xlu0.b32.cont [10/16] %v242, 128
        %255 = vxpose.xlu0.b32.cont [11/16] %v242, 128
        %256 = vxpose.xlu0.b32.cont [12/16] %v242, 128
        %257 = vxpose.xlu0.b32.cont [13/16] %v242, 128
        %258 = vxpose.xlu0.b32.cont [14/16] %v242, 128
        %259 = vxpose.xlu0.b32.cont [15/16] %v242, 128
        %260 = vxpose.xlu0.b32.end [16/16] %v242, 128
        %v261 = vpop.trf.xlu0
        %v262 = vpop.trf.xlu0
        %v263 = vpop.trf.xlu0
        %v264 = vpop.trf.xlu0
        %v265 = vpop.trf.xlu0
        %v266 = vpop.trf.xlu0
        %v267 = vpop.trf.xlu0
        %v268 = vpop.trf.xlu0
        %v269 = vpop.trf.xlu0
        %v270 = vpop.trf.xlu0
        %v271 = vpop.trf.xlu0
        %v272 = vpop.trf.xlu0
        %v273 = vpop.trf.xlu0
        %v274 = vpop.trf.xlu0
        %v275 = vpop.trf.xlu0
        %v276 = vpop.trf.xlu0
        %277 = vxpose.xlu0.b32.start [1/16] %v243, 128
        %278 = vxpose.xlu0.b32.cont [2/16] %v243, 128
        %279 = vxpose.xlu0.b32.cont [3/16] %v243, 128
        %280 = vxpose.xlu0.b32.cont [4/16] %v243, 128
        %281 = vxpose.xlu0.b32.cont [5/16] %v243, 128
        %282 = vxpose.xlu0.b32.cont [6/16] %v243, 128
        %283 = vxpose.xlu0.b32.cont [7/16] %v243, 128
        %284 = vxpose.xlu0.b32.cont [8/16] %v243, 128
        %285 = vxpose.xlu0.b32.cont [9/16] %v243, 128
        %286 = vxpose.xlu0.b32.cont [10/16] %v243, 128
        %287 = vxpose.xlu0.b32.cont [11/16] %v243, 128
        %288 = vxpose.xlu0.b32.cont [12/16] %v243, 128
        %289 = vxpose.xlu0.b32.cont [13/16] %v243, 128
        %290 = vxpose.xlu0.b32.cont [14/16] %v243, 128
        %291 = vxpose.xlu0.b32.cont [15/16] %v243, 128
        %292 = vxpose.xlu0.b32.end [16/16] %v243, 128
        %v293 = vpop.trf.xlu0
        %v294 = vpop.trf.xlu0
        %v295 = vpop.trf.xlu0
        %v296 = vpop.trf.xlu0
        %v297 = vpop.trf.xlu0
        %v298 = vpop.trf.xlu0
        %v299 = vpop.trf.xlu0
        %v300 = vpop.trf.xlu0
        %v301 = vpop.trf.xlu0
        %v302 = vpop.trf.xlu0
        %v303 = vpop.trf.xlu0
        %v304 = vpop.trf.xlu0
        %v305 = vpop.trf.xlu0
        %v306 = vpop.trf.xlu0
        %v307 = vpop.trf.xlu0
        %v308 = vpop.trf.xlu0
        %309 = xla_tuple %v261, %v293
        %310 = xla_tuple %v262, %v294
        %vm311 = vcmp.gt.s32.totalorder %v262, %v261
        %vm312 = vcmp.eq.s32.totalorder %v262, %v261
        %vm313 = vcmp.lt.s32.totalorder %v294, %v293
        %vm314 = vmand %vm312, %vm313
        %vm315 = vmor %vm311, %vm314
        %v316 = vsel %vm315, %v262, %v261
        %v317 = vsel %vm315, %v294, %v293
        %318 = xla_tuple %v316, %v317
        %319 = xla_tuple %v263, %v295
        %vm320 = vcmp.gt.s32.totalorder %v263, %v316
        %vm321 = vcmp.eq.s32.totalorder %v263, %v316
        %vm322 = vcmp.lt.s32.totalorder %v295, %v317
        %vm323 = vmand %vm321, %vm322
        %vm324 = vmor %vm320, %vm323
        %v325 = vsel %vm324, %v263, %v316
        %v326 = vsel %vm324, %v295, %v317
        %327 = xla_tuple %v325, %v326
        %328 = xla_tuple %v264, %v296
        %vm329 = vcmp.gt.s32.totalorder %v264, %v325
        %vm330 = vcmp.eq.s32.totalorder %v264, %v325
        %vm331 = vcmp.lt.s32.totalorder %v296, %v326
        %vm332 = vmand %vm330, %vm331
        %vm333 = vmor %vm329, %vm332
        %v334 = vsel %vm333, %v264, %v325
        %v335 = vsel %vm333, %v296, %v326
        %336 = xla_tuple %v334, %v335
        %337 = xla_tuple %v265, %v297
        %vm338 = vcmp.gt.s32.totalorder %v265, %v334
        %vm339 = vcmp.eq.s32.totalorder %v265, %v334
        %vm340 = vcmp.lt.s32.totalorder %v297, %v335
        %vm341 = vmand %vm339, %vm340
        %vm342 = vmor %vm338, %vm341
        %v343 = vsel %vm342, %v265, %v334
        %v344 = vsel %vm342, %v297, %v335
        %345 = xla_tuple %v343, %v344
        %346 = xla_tuple %v266, %v298
        %vm347 = vcmp.gt.s32.totalorder %v266, %v343
        %vm348 = vcmp.eq.s32.totalorder %v266, %v343
        %vm349 = vcmp.lt.s32.totalorder %v298, %v344
        %vm350 = vmand %vm348, %vm349
        %vm351 = vmor %vm347, %vm350
        %v352 = vsel %vm351, %v266, %v343
        %v353 = vsel %vm351, %v298, %v344
        %354 = xla_tuple %v352, %v353
        %355 = xla_tuple %v267, %v299
        %vm356 = vcmp.gt.s32.totalorder %v267, %v352
        %vm357 = vcmp.eq.s32.totalorder %v267, %v352
        %vm358 = vcmp.lt.s32.totalorder %v299, %v353
        %vm359 = vmand %vm357, %vm358
        %vm360 = vmor %vm356, %vm359
        %v361 = vsel %vm360, %v267, %v352
        %v362 = vsel %vm360, %v299, %v353
        %363 = xla_tuple %v361, %v362
        %364 = xla_tuple %v268, %v300
        %vm365 = vcmp.gt.s32.totalorder %v268, %v361
        %vm366 = vcmp.eq.s32.totalorder %v268, %v361
        %vm367 = vcmp.lt.s32.totalorder %v300, %v362
        %vm368 = vmand %vm366, %vm367
        %vm369 = vmor %vm365, %vm368
        %v370 = vsel %vm369, %v268, %v361
        %v371 = vsel %vm369, %v300, %v362
        %372 = xla_tuple %v370, %v371
        %373 = xla_tuple %v269, %v301
        %vm374 = vcmp.gt.s32.totalorder %v269, %v370
        %vm375 = vcmp.eq.s32.totalorder %v269, %v370
        %vm376 = vcmp.lt.s32.totalorder %v301, %v371
        %vm377 = vmand %vm375, %vm376
        %vm378 = vmor %vm374, %vm377
        %v379 = vsel %vm378, %v269, %v370
        %v380 = vsel %vm378, %v301, %v371
        %381 = xla_tuple %v379, %v380
        %382 = xla_tuple %v270, %v302
        %vm383 = vcmp.gt.s32.totalorder %v270, %v379
        %vm384 = vcmp.eq.s32.totalorder %v270, %v379
        %vm385 = vcmp.lt.s32.totalorder %v302, %v380
        %vm386 = vmand %vm384, %vm385
        %vm387 = vmor %vm383, %vm386
        %v388 = vsel %vm387, %v270, %v379
        %v389 = vsel %vm387, %v302, %v380
        %390 = xla_tuple %v388, %v389
        %391 = xla_tuple %v271, %v303
        %vm392 = vcmp.gt.s32.totalorder %v271, %v388
        %vm393 = vcmp.eq.s32.totalorder %v271, %v388
        %vm394 = vcmp.lt.s32.totalorder %v303, %v389
        %vm395 = vmand %vm393, %vm394
        %vm396 = vmor %vm392, %vm395
        %v397 = vsel %vm396, %v271, %v388
        %v398 = vsel %vm396, %v303, %v389
        %399 = xla_tuple %v397, %v398
        %400 = xla_tuple %v272, %v304
        %vm401 = vcmp.gt.s32.totalorder %v272, %v397
        %vm402 = vcmp.eq.s32.totalorder %v272, %v397
        %vm403 = vcmp.lt.s32.totalorder %v304, %v398
        %vm404 = vmand %vm402, %vm403
        %vm405 = vmor %vm401, %vm404
        %v406 = vsel %vm405, %v272, %v397
        %v407 = vsel %vm405, %v304, %v398
        %408 = xla_tuple %v406, %v407
        %409 = xla_tuple %v273, %v305
        %vm410 = vcmp.gt.s32.totalorder %v273, %v406
        %vm411 = vcmp.eq.s32.totalorder %v273, %v406
        %vm412 = vcmp.lt.s32.totalorder %v305, %v407
        %vm413 = vmand %vm411, %vm412
        %vm414 = vmor %vm410, %vm413
        %v415 = vsel %vm414, %v273, %v406
        %v416 = vsel %vm414, %v305, %v407
        %417 = xla_tuple %v415, %v416
        %418 = xla_tuple %v274, %v306
        %vm419 = vcmp.gt.s32.totalorder %v274, %v415
        %vm420 = vcmp.eq.s32.totalorder %v274, %v415
        %vm421 = vcmp.lt.s32.totalorder %v306, %v416
        %vm422 = vmand %vm420, %vm421
        %vm423 = vmor %vm419, %vm422
        %v424 = vsel %vm423, %v274, %v415
        %v425 = vsel %vm423, %v306, %v416
        %426 = xla_tuple %v424, %v425
        %427 = xla_tuple %v275, %v307
        %vm428 = vcmp.gt.s32.totalorder %v275, %v424
        %vm429 = vcmp.eq.s32.totalorder %v275, %v424
        %vm430 = vcmp.lt.s32.totalorder %v307, %v425
        %vm431 = vmand %vm429, %vm430
        %vm432 = vmor %vm428, %vm431
        %v433 = vsel %vm432, %v275, %v424
        %v434 = vsel %vm432, %v307, %v425
        %435 = xla_tuple %v433, %v434
        %436 = xla_tuple %v276, %v308
        %vm437 = vcmp.gt.s32.totalorder %v276, %v433
        %vm438 = vcmp.eq.s32.totalorder %v276, %v433
        %vm439 = vcmp.lt.s32.totalorder %v308, %v434
        %vm440 = vmand %vm438, %vm439
        %vm441 = vmor %vm437, %vm440
        %v442 = vsel %vm441, %v276, %v433
        %v443 = vsel %vm441, %v308, %v434
        %444 = xla_tuple %v442, %v443
        %v445 = vrot.slane %v442, 1
        %v446 = vrot.slane %v443, 1
        %447 = xla_tuple %v445, %v446
        %vm448 = vcmp.gt.s32.totalorder %v445, %v442
        %vm449 = vcmp.eq.s32.totalorder %v445, %v442
        %vm450 = vcmp.lt.s32.totalorder %v446, %v443
        %vm451 = vmand %vm449, %vm450
        %vm452 = vmor %vm448, %vm451
        %v453 = vsel %vm452, %v445, %v442
        %v454 = vsel %vm452, %v446, %v443
        %455 = xla_tuple %v453, %v454
        %v456 = vrot.slane %v453, 1
        %v457 = vrot.slane %v454, 1
        %458 = xla_tuple %v456, %v457
        %vm459 = vcmp.gt.s32.totalorder %v456, %v453
        %vm460 = vcmp.eq.s32.totalorder %v456, %v453
        %vm461 = vcmp.lt.s32.totalorder %v457, %v454
        %vm462 = vmand %vm460, %vm461
        %vm463 = vmor %vm459, %vm462
        %v464 = vsel %vm463, %v456, %v453
        %v465 = vsel %vm463, %v457, %v454
        %466 = xla_tuple %v464, %v465
        %v467 = vrot.slane %v464, 1
        %v468 = vrot.slane %v465, 1
        %469 = xla_tuple %v467, %v468
        %vm470 = vcmp.gt.s32.totalorder %v467, %v464
        %vm471 = vcmp.eq.s32.totalorder %v467, %v464
        %vm472 = vcmp.lt.s32.totalorder %v468, %v465
        %vm473 = vmand %vm471, %vm472
        %vm474 = vmor %vm470, %vm473
        %v475 = vsel %vm474, %v467, %v464
        %v476 = vsel %vm474, %v468, %v465
        %477 = xla_tuple %v475, %v476
        %v478 = vrot.slane %v475, 1
        %v479 = vrot.slane %v476, 1
        %480 = xla_tuple %v478, %v479
        %vm481 = vcmp.gt.s32.totalorder %v478, %v475
        %vm482 = vcmp.eq.s32.totalorder %v478, %v475
        %vm483 = vcmp.lt.s32.totalorder %v479, %v476
        %vm484 = vmand %vm482, %vm483
        %vm485 = vmor %vm481, %vm484
        %v486 = vsel %vm485, %v478, %v475
        %v487 = vsel %vm485, %v479, %v476
        %488 = xla_tuple %v486, %v487
        %v489 = vrot.slane %v486, 1
        %v490 = vrot.slane %v487, 1
        %491 = xla_tuple %v489, %v490
        %vm492 = vcmp.gt.s32.totalorder %v489, %v486
        %vm493 = vcmp.eq.s32.totalorder %v489, %v486
        %vm494 = vcmp.lt.s32.totalorder %v490, %v487
        %vm495 = vmand %vm493, %vm494
        %vm496 = vmor %vm492, %vm495
        %v497 = vsel %vm496, %v489, %v486
        %v498 = vsel %vm496, %v490, %v487
        %499 = xla_tuple %v497, %v498
        %v500 = vrot.slane %v497, 1
        %v501 = vrot.slane %v498, 1
        %502 = xla_tuple %v500, %v501
        %vm503 = vcmp.gt.s32.totalorder %v500, %v497
        %vm504 = vcmp.eq.s32.totalorder %v500, %v497
        %vm505 = vcmp.lt.s32.totalorder %v501, %v498
        %vm506 = vmand %vm504, %vm505
        %vm507 = vmor %vm503, %vm506
        %v508 = vsel %vm507, %v500, %v497
        %v509 = vsel %vm507, %v501, %v498
        %510 = xla_tuple %v508, %v509
        %v511 = vrot.slane %v508, 1
        %v512 = vrot.slane %v509, 1
        %513 = xla_tuple %v511, %v512
        %vm514 = vcmp.gt.s32.totalorder %v511, %v508
        %vm515 = vcmp.eq.s32.totalorder %v511, %v508
        %vm516 = vcmp.lt.s32.totalorder %v512, %v509
        %vm517 = vmand %vm515, %vm516
        %vm518 = vmor %vm514, %vm517
        %v519 = vsel %vm518, %v511, %v508
        %v520 = vsel %vm518, %v512, %v509
        %521 = xla_tuple %v519, %v520
        %s522 = scalar_lea.vmem [#allocation12], %s165
        %523 = vst [vmem:[%s522] sm:$0x1] %v519
        %s524 = scalar_lea.vmem [#allocation14], %s165
        %525 = vst [vmem:[%s524] sm:$0x1] %v520
        %526 = xla_tuple %523, %525
        %527 = vxpose.xlu0.b32.start [1/16] %v520, 128
        %528 = vxpose.xlu0.b32.cont [2/16] 0.0, 128
        %529 = vxpose.xlu0.b32.cont [3/16] 0.0, 128
        %530 = vxpose.xlu0.b32.cont [4/16] 0.0, 128
        %531 = vxpose.xlu0.b32.cont [5/16] 0.0, 128
        %532 = vxpose.xlu0.b32.cont [6/16] 0.0, 128
        %533 = vxpose.xlu0.b32.cont [7/16] 0.0, 128
        %534 = vxpose.xlu0.b32.cont [8/16] 0.0, 128
        %535 = vxpose.xlu0.b32.cont [9/16] 0.0, 128
        %536 = vxpose.xlu0.b32.cont [10/16] 0.0, 128
        %537 = vxpose.xlu0.b32.cont [11/16] 0.0, 128
        %538 = vxpose.xlu0.b32.cont [12/16] 0.0, 128
        %539 = vxpose.xlu0.b32.cont [13/16] 0.0, 128
        %540 = vxpose.xlu0.b32.cont [14/16] 0.0, 128
        %541 = vxpose.xlu0.b32.cont [15/16] 0.0, 128
        %542 = vxpose.xlu0.b32.end [16/16] 0.0, 128
        %v543 = vpop.trf.xlu0
        %v544 = vpop.trf.xlu0
        %v545 = vpop.trf.xlu0
        %v546 = vpop.trf.xlu0
        %v547 = vpop.trf.xlu0
        %v548 = vpop.trf.xlu0
        %v549 = vpop.trf.xlu0
        %v550 = vpop.trf.xlu0
        %v551 = vpop.trf.xlu0
        %v552 = vpop.trf.xlu0
        %v553 = vpop.trf.xlu0
        %v554 = vpop.trf.xlu0
        %v555 = vpop.trf.xlu0
        %v556 = vpop.trf.xlu0
        %v557 = vpop.trf.xlu0
        %v558 = vpop.trf.xlu0
        %s559 = vtos %v543
        %s560 = sshrl.u32 %s559, 9
        %p561 = scmp.lt.s32.totalorder %s559, 0
        %s562 = ssub.s32 0, %s559
        %s563 = scalar_select %p561, %s562, %s559
        %s564 = sand.u32 %s563, 511
        %s565 = ssub.s32 0, %s564
        %s566 = scalar_select %p561, %s565, %s564
        %s567 = sshrl.u32 %s566, 7
        %s568 = smul.u32 %s567, 256
        %s569 = sand.u32 %s566, 127
        %s570 = sadd.s32 %s568, %s569
        %v571 = vlaneseq
        %v572 = vstv %s570
        %vm574 = vcmp.eq.s32.totalorder %v571, %v572
        %s575 = smul.addr %s560, 8
        %s576 = scalar_lea.vmem [#allocation15], %s575
        %577 = vst.msk [vmem:[%s576] sm:$0xff] %vm574, 2147483648
        %s578 = smul.addr %s560, 8
        %s579 = scalar_lea.vmem [#allocation17], %s578
        %580 = vst.msk [vmem:[%s579] sm:$0xff] %vm574, 2147483647
        %581 = xla_tuple %577, %580
        %v582 = vrot.slane %v543, 1
        %s583 = vtos %v582
        %s584 = sshrl.u32 %s583, 9
        %p585 = scmp.lt.s32.totalorder %s583, 0
        %s586 = ssub.s32 0, %s583
        %s587 = scalar_select %p585, %s586, %s583
        %s588 = sand.u32 %s587, 511
        %s589 = ssub.s32 0, %s588
        %s590 = scalar_select %p585, %s589, %s588
        %s591 = sshrl.u32 %s590, 7
        %s592 = smul.u32 %s591, 256
        %s593 = sand.u32 %s590, 127
        %s594 = sadd.s32 %s592, %s593
        %v595 = vlaneseq
        %v596 = vstv %s594
        %v597 = vadd.s32 %v596, 128
        %vm598 = vcmp.eq.s32.totalorder %v595, %v597
        %s599 = smul.addr %s584, 8
        %s600 = scalar_lea.vmem [#allocation15], %s599
        %601 = vst.msk [vmem:[%s600] sm:$0xff] %vm598, 2147483648
        %s602 = smul.addr %s584, 8
        %s603 = scalar_lea.vmem [#allocation17], %s602
        %604 = vst.msk [vmem:[%s603] sm:$0xff] %vm598, 2147483647
        %605 = xla_tuple %601, %604
        %v606 = vrot.slane %v582, 1
      $region34: #{custom-call.1} parent=2 // loop_footer
        %s169 = sadd.s32 1, %s165
      $region35: #{custom-call.1} parent=2 // loop_footer_branch
        %164 = sbr.rel target = $region31
      $region36: #{custom-call.1} parent=2 // loop_exit
        _
      %s607 = scalar_lea.vmem [#allocation12], 7
      %v608 = vld [vmem:[%s607] ss:$-1 sm:$0xff]
      %s609 = scalar_lea.vmem [#allocation12], 7
      %v610 = vld [vmem:[%s609] ss:$-1 sm:$0xff]
      %611 = vst [vmem:[#allocation12] sm:$0xff] %v610
      %612 = vst [vmem:[#allocation12] sm:$0xff] %v608
      %s613 = scalar_lea.vmem [#allocation14], 7
      %v614 = vld [vmem:[%s613] ss:$-1 sm:$0xff]
      %s615 = scalar_lea.vmem [#allocation14], 7
      %v616 = vld [vmem:[%s615] ss:$-1 sm:$0xff]
      %617 = vst [vmem:[#allocation14] sm:$0xff] %v616
      %618 = vst [vmem:[#allocation14] sm:$0xff] %v614
      %619 = xla_tuple %612, %618
      %v620 = vld [vmem:[#allocation11] sm:$0xff]
      %v621 = vld [vmem:[#allocation13] sm:$0xff]
      %622 = xla_tuple %v620, %v621
      %v623 = vld [vmem:[#allocation12] sm:$0xff]
      %v624 = vld [vmem:[#allocation14] sm:$0xff]
      %625 = xla_tuple %v623, %v624
      %vm626 = vcmp.gt.s32.totalorder %v620, %v623
      %vm627 = vcmp.eq.s32.totalorder %v620, %v623
      %vm628 = vcmp.lt.s32.totalorder %v621, %v624
      %vm629 = vmand %vm627, %vm628
      %vm630 = vmor %vm626, %vm629
      %v631 = vsel %vm630, %v620, %v623
      %632 = vst [vmem:[#allocation11] sm:$0xff] %v631
      %v633 = vsel %vm630, %v623, %v620
      %634 = vst [vmem:[#allocation12] sm:$0xff] %v633
      %v635 = vsel %vm630, %v621, %v624
      %636 = vst [vmem:[#allocation13] sm:$0xff] %v635
      %v637 = vsel %vm630, %v624, %v621
      %638 = vst [vmem:[#allocation14] sm:$0xff] %v637
      %639 = xla_tuple %634, %638
      %640 = xla_tuple [#allocation11], [#allocation13]
      %v641 = vld [vmem:[#allocation11] sm:$0xff]
      %v642 = vld [vmem:[#allocation13] sm:$0xff]
      %643 = xla_tuple %v641, %v642
      %v645 = vunpack.c.l.s4 839939668
      %v646 = vunpack.c.0.s8 %v645
      %v647 = vlaneseq
      %v648 = vshrl.u32 %v647, 7
      %v649 = vsub.s32 %v646, %v648
      %v650 = vrot.slane %v641, %v649
      %v652 = vunpack.c.l.s4 839939668
      %v653 = vunpack.c.0.s8 %v652
      %v654 = vlaneseq
      %v655 = vshrl.u32 %v654, 7
      %v656 = vsub.s32 %v653, %v655
      %v657 = vrot.slane %v642, %v656
      %658 = xla_tuple %v650, %v657
      %vm659 = vcmp.gt.s32.totalorder %v641, %v650
      %vm660 = vcmp.eq.s32.totalorder %v641, %v650
      %vm661 = vcmp.lt.s32.totalorder %v642, %v657
      %vm662 = vmand %vm660, %vm661
      %vm663 = vmor %vm659, %vm662
      %v664 = vlaneseq
      %v665 = vshrl.u32 %v664, 7
      %v666 = vand.u32 %v665, 4
      %vm667 = vcmp.ne.s32.totalorder %v666, 0
      %vm668 = vmxor %vm663, %vm667
      %v669 = vsel %vm668, %v641, %v650
      %v670 = vsel %vm668, %v642, %v657
      %671 = xla_tuple %v669, %v670
      %v673 = vunpack.c.l.s4 1417023538
      %v674 = vunpack.c.0.s8 %v673
      %v675 = vlaneseq
      %v676 = vshrl.u32 %v675, 7
      %v677 = vsub.s32 %v674, %v676
      %v678 = vrot.slane %v669, %v677
      %v680 = vunpack.c.l.s4 1417023538
      %v681 = vunpack.c.0.s8 %v680
      %v682 = vlaneseq
      %v683 = vshrl.u32 %v682, 7
      %v684 = vsub.s32 %v681, %v683
      %v685 = vrot.slane %v670, %v684
      %686 = xla_tuple %v678, %v685
      %vm687 = vcmp.gt.s32.totalorder %v669, %v678
      %vm688 = vcmp.eq.s32.totalorder %v669, %v678
      %vm689 = vcmp.lt.s32.totalorder %v670, %v685
      %vm690 = vmand %vm688, %vm689
      %vm691 = vmor %vm687, %vm690
      %v692 = vlaneseq
      %v693 = vshrl.u32 %v692, 7
      %v694 = vand.u32 %v693, 2
      %vm695 = vcmp.ne.s32.totalorder %v694, 0
      %vm696 = vmxor %vm691, %vm695
      %v697 = vsel %vm696, %v669, %v678
      %v698 = vsel %vm696, %v670, %v685
      %699 = xla_tuple %v697, %v698
      %v701 = vunpack.c.l.s4 1732584193
      %v702 = vunpack.c.0.s8 %v701
      %v703 = vlaneseq
      %v704 = vshrl.u32 %v703, 7
      %v705 = vsub.s32 %v702, %v704
      %v706 = vrot.slane %v697, %v705
      %v708 = vunpack.c.l.s4 1732584193
      %v709 = vunpack.c.0.s8 %v708
      %v710 = vlaneseq
      %v711 = vshrl.u32 %v710, 7
      %v712 = vsub.s32 %v709, %v711
      %v713 = vrot.slane %v698, %v712
      %714 = xla_tuple %v706, %v713
      %vm715 = vcmp.gt.s32.totalorder %v697, %v706
      %vm716 = vcmp.eq.s32.totalorder %v697, %v706
      %vm717 = vcmp.lt.s32.totalorder %v698, %v713
      %vm718 = vmand %vm716, %vm717
      %vm719 = vmor %vm715, %vm718
      %v720 = vlaneseq
      %v721 = vshrl.u32 %v720, 7
      %v722 = vand.u32 %v721, 1
      %vm723 = vcmp.ne.s32.totalorder %v722, 0
      %vm724 = vmxor %vm719, %vm723
      %v725 = vsel %vm724, %v697, %v706
      %v726 = vsel %vm724, %v698, %v713
      %727 = xla_tuple %v725, %v726
      %728 = vst [vmem:[#allocation11] sm:$0xff] %v725
      %729 = vst [vmem:[#allocation13] sm:$0xff] %v726
      %730 = xla_tuple %728, %729
      %v731 = vld [vmem:[#allocation11] sm:$0xff]
      %v732 = vld [vmem:[#allocation13] sm:$0xff]
      %733 = xla_tuple %v731, %v732
      %v735 = vunpack.c.l.s4 839939668
      %v736 = vunpack.c.0.s8 %v735
      %v737 = vlaneseq
      %v738 = vshrl.u32 %v737, 7
      %v739 = vsub.s32 %v736, %v738
      %v740 = vrot.slane %v731, %v739
      %v742 = vunpack.c.l.s4 839939668
      %v743 = vunpack.c.0.s8 %v742
      %v744 = vlaneseq
      %v745 = vshrl.u32 %v744, 7
      %v746 = vsub.s32 %v743, %v745
      %v747 = vrot.slane %v732, %v746
      %748 = xla_tuple %v740, %v747
      %vm749 = vcmp.gt.s32.totalorder %v731, %v740
      %vm750 = vcmp.eq.s32.totalorder %v731, %v740
      %vm751 = vcmp.lt.s32.totalorder %v732, %v747
      %vm752 = vmand %vm750, %vm751
      %vm753 = vmor %vm749, %vm752
      %v754 = vlaneseq
      %v755 = vshrl.u32 %v754, 7
      %v756 = vand.u32 %v755, 4
      %vm757 = vcmp.ne.s32.totalorder %v756, 0
      %vm758 = vmxor %vm753, %vm757
      %v759 = vsel %vm758, %v731, %v740
      %v760 = vsel %vm758, %v732, %v747
      %761 = xla_tuple %v759, %v760
      %v763 = vunpack.c.l.s4 1417023538
      %v764 = vunpack.c.0.s8 %v763
      %v765 = vlaneseq
      %v766 = vshrl.u32 %v765, 7
      %v767 = vsub.s32 %v764, %v766
      %v768 = vrot.slane %v759, %v767
      %v770 = vunpack.c.l.s4 1417023538
      %v771 = vunpack.c.0.s8 %v770
      %v772 = vlaneseq
      %v773 = vshrl.u32 %v772, 7
      %v774 = vsub.s32 %v771, %v773
      %v775 = vrot.slane %v760, %v774
      %776 = xla_tuple %v768, %v775
      %vm777 = vcmp.gt.s32.totalorder %v759, %v768
      %vm778 = vcmp.eq.s32.totalorder %v759, %v768
      %vm779 = vcmp.lt.s32.totalorder %v760, %v775
      %vm780 = vmand %vm778, %vm779
      %vm781 = vmor %vm777, %vm780
      %v782 = vlaneseq
      %v783 = vshrl.u32 %v782, 7
      %v784 = vand.u32 %v783, 2
      %vm785 = vcmp.ne.s32.totalorder %v784, 0
      %vm786 = vmxor %vm781, %vm785
      %v787 = vsel %vm786, %v759, %v768
      %v788 = vsel %vm786, %v760, %v775
      %789 = xla_tuple %v787, %v788
      %v791 = vunpack.c.l.s4 1732584193
      %v792 = vunpack.c.0.s8 %v791
      %v793 = vlaneseq
      %v794 = vshrl.u32 %v793, 7
      %v795 = vsub.s32 %v792, %v794
      %v796 = vrot.slane %v787, %v795
      %v798 = vunpack.c.l.s4 1732584193
      %v799 = vunpack.c.0.s8 %v798
      %v800 = vlaneseq
      %v801 = vshrl.u32 %v800, 7
      %v802 = vsub.s32 %v799, %v801
      %v803 = vrot.slane %v788, %v802
      %804 = xla_tuple %v796, %v803
      %vm805 = vcmp.gt.s32.totalorder %v787, %v796
      %vm806 = vcmp.eq.s32.totalorder %v787, %v796
      %vm807 = vcmp.lt.s32.totalorder %v788, %v803
      %vm808 = vmand %vm806, %vm807
      %vm809 = vmor %vm805, %vm808
      %v810 = vlaneseq
      %v811 = vshrl.u32 %v810, 7
      %v812 = vand.u32 %v811, 1
      %vm813 = vcmp.ne.s32.totalorder %v812, 0
      %vm814 = vmxor %vm809, %vm813
      %v815 = vsel %vm814, %v787, %v796
      %v816 = vsel %vm814, %v788, %v803
      %817 = xla_tuple %v815, %v816
      %818 = vst [vmem:[#allocation11] sm:$0xff] %v815
      %819 = vst [vmem:[#allocation13] sm:$0xff] %v816
      %820 = xla_tuple %818, %819
      %821 = xla_tuple [#allocation12], [#allocation14]
      %v822 = vld [vmem:[#allocation12] sm:$0xff]
      %v823 = vld [vmem:[#allocation14] sm:$0xff]
      %824 = xla_tuple %v822, %v823
      %v826 = vunpack.c.l.s4 839939668
      %v827 = vunpack.c.0.s8 %v826
      %v828 = vlaneseq
      %v829 = vshrl.u32 %v828, 7
      %v830 = vsub.s32 %v827, %v829
      %v831 = vrot.slane %v822, %v830
      %v833 = vunpack.c.l.s4 839939668
      %v834 = vunpack.c.0.s8 %v833
      %v835 = vlaneseq
      %v836 = vshrl.u32 %v835, 7
      %v837 = vsub.s32 %v834, %v836
      %v838 = vrot.slane %v823, %v837
      %839 = xla_tuple %v831, %v838
      %vm840 = vcmp.gt.s32.totalorder %v822, %v831
      %vm841 = vcmp.eq.s32.totalorder %v822, %v831
      %vm842 = vcmp.lt.s32.totalorder %v823, %v838
      %vm843 = vmand %vm841, %vm842
      %vm844 = vmor %vm840, %vm843
      %v845 = vlaneseq
      %v846 = vshrl.u32 %v845, 7
      %v847 = vand.u32 %v846, 4
      %vm848 = vcmp.ne.s32.totalorder %v847, 0
      %vm849 = vmxor %vm844, %vm848
      %v850 = vsel %vm849, %v822, %v831
      %v851 = vsel %vm849, %v823, %v838
      %852 = xla_tuple %v850, %v851
      %v854 = vunpack.c.l.s4 1417023538
      %v855 = vunpack.c.0.s8 %v854
      %v856 = vlaneseq
      %v857 = vshrl.u32 %v856, 7
      %v858 = vsub.s32 %v855, %v857
      %v859 = vrot.slane %v850, %v858
      %v861 = vunpack.c.l.s4 1417023538
      %v862 = vunpack.c.0.s8 %v861
      %v863 = vlaneseq
      %v864 = vshrl.u32 %v863, 7
      %v865 = vsub.s32 %v862, %v864
      %v866 = vrot.slane %v851, %v865
      %867 = xla_tuple %v859, %v866
      %vm868 = vcmp.gt.s32.totalorder %v850, %v859
      %vm869 = vcmp.eq.s32.totalorder %v850, %v859
      %vm870 = vcmp.lt.s32.totalorder %v851, %v866
      %vm871 = vmand %vm869, %vm870
      %vm872 = vmor %vm868, %vm871
      %v873 = vlaneseq
      %v874 = vshrl.u32 %v873, 7
      %v875 = vand.u32 %v874, 2
      %vm876 = vcmp.ne.s32.totalorder %v875, 0
      %vm877 = vmxor %vm872, %vm876
      %v878 = vsel %vm877, %v850, %v859
      %v879 = vsel %vm877, %v851, %v866
      %880 = xla_tuple %v878, %v879
      %v882 = vunpack.c.l.s4 1732584193
      %v883 = vunpack.c.0.s8 %v882
      %v884 = vlaneseq
      %v885 = vshrl.u32 %v884, 7
      %v886 = vsub.s32 %v883, %v885
      %v887 = vrot.slane %v878, %v886
      %v889 = vunpack.c.l.s4 1732584193
      %v890 = vunpack.c.0.s8 %v889
      %v891 = vlaneseq
      %v892 = vshrl.u32 %v891, 7
      %v893 = vsub.s32 %v890, %v892
      %v894 = vrot.slane %v879, %v893
      %895 = xla_tuple %v887, %v894
      %vm896 = vcmp.gt.s32.totalorder %v878, %v887
      %vm897 = vcmp.eq.s32.totalorder %v878, %v887
      %vm898 = vcmp.lt.s32.totalorder %v879, %v894
      %vm899 = vmand %vm897, %vm898
      %vm900 = vmor %vm896, %vm899
      %v901 = vlaneseq
      %v902 = vshrl.u32 %v901, 7
      %v903 = vand.u32 %v902, 1
      %vm904 = vcmp.ne.s32.totalorder %v903, 0
      %vm905 = vmxor %vm900, %vm904
      %v906 = vsel %vm905, %v878, %v887
      %v907 = vsel %vm905, %v879, %v894
      %908 = xla_tuple %v906, %v907
      %909 = vst [vmem:[#allocation12] sm:$0xff] %v906
      %910 = vst [vmem:[#allocation14] sm:$0xff] %v907
      %911 = xla_tuple %909, %910
      %v912 = vld [vmem:[#allocation12] sm:$0xff]
      %v913 = vld [vmem:[#allocation14] sm:$0xff]
      %914 = xla_tuple %v912, %v913
      %v916 = vunpack.c.l.s4 839939668
      %v917 = vunpack.c.0.s8 %v916
      %v918 = vlaneseq
      %v919 = vshrl.u32 %v918, 7
      %v920 = vsub.s32 %v917, %v919
      %v921 = vrot.slane %v912, %v920
      %v923 = vunpack.c.l.s4 839939668
      %v924 = vunpack.c.0.s8 %v923
      %v925 = vlaneseq
      %v926 = vshrl.u32 %v925, 7
      %v927 = vsub.s32 %v924, %v926
      %v928 = vrot.slane %v913, %v927
      %929 = xla_tuple %v921, %v928
      %vm930 = vcmp.gt.s32.totalorder %v912, %v921
      %vm931 = vcmp.eq.s32.totalorder %v912, %v921
      %vm932 = vcmp.lt.s32.totalorder %v913, %v928
      %vm933 = vmand %vm931, %vm932
      %vm934 = vmor %vm930, %vm933
      %v935 = vlaneseq
      %v936 = vshrl.u32 %v935, 7
      %v937 = vand.u32 %v936, 4
      %vm938 = vcmp.ne.s32.totalorder %v937, 0
      %vm939 = vmxor %vm934, %vm938
      %v940 = vsel %vm939, %v912, %v921
      %v941 = vsel %vm939, %v913, %v928
      %942 = xla_tuple %v940, %v941
      %v944 = vunpack.c.l.s4 1417023538
      %v945 = vunpack.c.0.s8 %v944
      %v946 = vlaneseq
      %v947 = vshrl.u32 %v946, 7
      %v948 = vsub.s32 %v945, %v947
      %v949 = vrot.slane %v940, %v948
      %v951 = vunpack.c.l.s4 1417023538
      %v952 = vunpack.c.0.s8 %v951
      %v953 = vlaneseq
      %v954 = vshrl.u32 %v953, 7
      %v955 = vsub.s32 %v952, %v954
      %v956 = vrot.slane %v941, %v955
      %957 = xla_tuple %v949, %v956
      %vm958 = vcmp.gt.s32.totalorder %v940, %v949
      %vm959 = vcmp.eq.s32.totalorder %v940, %v949
      %vm960 = vcmp.lt.s32.totalorder %v941, %v956
      %vm961 = vmand %vm959, %vm960
      %vm962 = vmor %vm958, %vm961
      %v963 = vlaneseq
      %v964 = vshrl.u32 %v963, 7
      %v965 = vand.u32 %v964, 2
      %vm966 = vcmp.ne.s32.totalorder %v965, 0
      %vm967 = vmxor %vm962, %vm966
      %v968 = vsel %vm967, %v940, %v949
      %v969 = vsel %vm967, %v941, %v956
      %970 = xla_tuple %v968, %v969
      %v972 = vunpack.c.l.s4 1732584193
      %v973 = vunpack.c.0.s8 %v972
      %v974 = vlaneseq
      %v975 = vshrl.u32 %v974, 7
      %v976 = vsub.s32 %v973, %v975
      %v977 = vrot.slane %v968, %v976
      %v979 = vunpack.c.l.s4 1732584193
      %v980 = vunpack.c.0.s8 %v979
      %v981 = vlaneseq
      %v982 = vshrl.u32 %v981, 7
      %v983 = vsub.s32 %v980, %v982
      %v984 = vrot.slane %v969, %v983
      %985 = xla_tuple %v977, %v984
      %vm986 = vcmp.gt.s32.totalorder %v968, %v977
      %vm987 = vcmp.eq.s32.totalorder %v968, %v977
      %vm988 = vcmp.lt.s32.totalorder %v969, %v984
      %vm989 = vmand %vm987, %vm988
      %vm990 = vmor %vm986, %vm989
      %v991 = vlaneseq
      %v992 = vshrl.u32 %v991, 7
      %v993 = vand.u32 %v992, 1
      %vm994 = vcmp.ne.s32.totalorder %v993, 0
      %vm995 = vmxor %vm990, %vm994
      %v996 = vsel %vm995, %v968, %v977
      %v997 = vsel %vm995, %v969, %v984
      %998 = xla_tuple %v996, %v997
      %999 = vst [vmem:[#allocation12] sm:$0xff] %v996
      %1000 = vst [vmem:[#allocation14] sm:$0xff] %v997
      %1001 = xla_tuple %999, %1000
    %v1002 = vld [vmem:[#allocation11] sm:$0xff]
    %vm1003 = vcmp.lt.s32.totalorder %v1002, 0
    %v1004 = vsub.s32 2147483647, %v1002
    %v1005 = vsel %vm1003, %v1004, %v1002
    %1006 = vst [vmem:[#allocation11] sm:$0xff] %v1005
    %v1007 = vld [vmem:[#allocation11] sm:$0xff]
    %1008 = vxpose.xlu0.b32.start.end [1/1] (short) %v1007, 128
    %v1009 = vpop.trf.xlu0
    %v1010 = vpop.trf.xlu0
    %v1011 = vpop.trf.xlu0
    %v1012 = vpop.trf.xlu0
    %v1013 = vpop.trf.xlu0
    %v1014 = vpop.trf.xlu0
    %v1015 = vpop.trf.xlu0
    %v1016 = vpop.trf.xlu0
    %v1017 = vpop.trf.xlu0
    %v1018 = vpop.trf.xlu0
    %v1019 = vpop.trf.xlu0
    %v1020 = vpop.trf.xlu0
    %v1021 = vpop.trf.xlu0
    %v1022 = vpop.trf.xlu0
    %v1023 = vpop.trf.xlu0
    %v1024 = vpop.trf.xlu0
    %1025 = vst [vmem:[#allocation7] sm:$0xff] %v1009
    %v1026 = vld [vmem:[#allocation13] sm:$0xff]
    %1027 = vxpose.xlu0.b32.start.end [1/1] (short) %v1026, 128
    %v1028 = vpop.trf.xlu0
    %v1029 = vpop.trf.xlu0
    %v1030 = vpop.trf.xlu0
    %v1031 = vpop.trf.xlu0
    %v1032 = vpop.trf.xlu0
    %v1033 = vpop.trf.xlu0
    %v1034 = vpop.trf.xlu0
    %v1035 = vpop.trf.xlu0
    %v1036 = vpop.trf.xlu0
    %v1037 = vpop.trf.xlu0
    %v1038 = vpop.trf.xlu0
    %v1039 = vpop.trf.xlu0
    %v1040 = vpop.trf.xlu0
    %v1041 = vpop.trf.xlu0
    %v1042 = vpop.trf.xlu0
    %v1043 = vpop.trf.xlu0
    %1044 = vst [vmem:[#allocation9] sm:$0xff] %v1028
    %s1046 = smul.u32 1, 2
    %s1047 = sshllo.u32 0, %s1046
    %s1048 = sshrl.u32 %s1046, 1
    %v1049 = vld [vmem:[#allocation7] sm:%s1047]
    %v1050 = vpack.c.bf16 0.0, %v1049
    %s1051 = sshllo.u32 0, %s1048
    %1052 = vst [vmem:[#allocation8] sm:%s1051] %v1050
    %s1054 = sshllo.u32 0, 2
    %v1056 = vld [vmem:[#allocation9] sm:%s1054]
    %s1057 = sshllo.u32 0, 2
    %1058 = vst [vmem:[#allocation10] sm:%s1057] %v1056
    // Predicated region
    $region37: #{custom-call.1} parent=1 // pred_check
      _
    $region38: #{custom-call.1} parent=1 // pred_check_branch
      %1060 = sbr.rel (0) target = $region40
    $region39: #{custom-call.1} parent=1 // pred_region
      // Predicated region
      $region41: #{custom-call.1} parent=39 // pred_check
        _
      $region42: #{custom-call.1} parent=39 // pred_check_branch
        %1062 = sbr.rel target = $region44
      $region43: #{custom-call.1} parent=39 // pred_region
        // Predicated region
        $region56: #{custom-call.1} parent=43 // pred_check
          _
        $region57: #{custom-call.1} parent=43 // pred_check_branch
          %1077 = sbr.rel (0) target = $region59
        $region58: #{custom-call.1} parent=43 // pred_region
          loop: start=0, step=1, limit=1
          $region60: #{custom-call.1} parent=58 // loop_pre_header
            _
          $region61: #{custom-call.1} parent=58 // loop_header
            %s1080 = sphi 0, %s1084
            %p1081 = scmp.ge.s32.totalorder %s1080, 1
            %s1085 = sphi [#allocation8], [#allocation8]
            %s1086 = sphi %s1, %s1
          $region62: #{custom-call.1} parent=58 // loop_header_branch
            %1083 = sbr.rel (%p1081) target = $region66
          $region63: #{custom-call.1} parent=58 // loop_body
            %v1087 = vld [vmem:[%s1085] sm:$0x1]
            %1088 = vst [vmem:[%s1086] sm:$0x1] %v1087
          $region64: #{custom-call.1} parent=58 // loop_footer
            %s1084 = sadd.s32 1, %s1080
          $region65: #{custom-call.1} parent=58 // loop_footer_branch
            %1079 = sbr.rel target = $region61
          $region66: #{custom-call.1} parent=58 // loop_exit
            _
        $region59: #{custom-call.1} parent=43 // pred_fallthru
          _
      $region44: #{custom-call.1} parent=39 // pred_fallthru
        _
      // Predicated region
      $region45: #{custom-call.1} parent=39 // pred_check
        _
      $region46: #{custom-call.1} parent=39 // pred_check_branch
        %1064 = sbr.rel (0) target = $region48
      $region47: #{custom-call.1} parent=39 // pred_region
        loop: start=0, step=1, limit=1
        $region49: #{custom-call.1} parent=47 // loop_pre_header
          _
        $region50: #{custom-call.1} parent=47 // loop_header
          %s1067 = sphi 0, %s1071
          %p1068 = scmp.ge.s32.totalorder %s1067, 1
          %s1072 = sphi [#allocation8], [#allocation8]
          %s1073 = sphi %s1, %s1
        $region51: #{custom-call.1} parent=47 // loop_header_branch
          %1070 = sbr.rel (%p1068) target = $region55
        $region52: #{custom-call.1} parent=47 // loop_body
          %v1074 = vld [vmem:[%s1072] sm:$0x1]
          %1075 = vst [vmem:[%s1073] sm:$0x1] %v1074
        $region53: #{custom-call.1} parent=47 // loop_footer
          %s1071 = sadd.s32 1, %s1067
        $region54: #{custom-call.1} parent=47 // loop_footer_branch
          %1066 = sbr.rel target = $region50
        $region55: #{custom-call.1} parent=47 // loop_exit
          _
      $region48: #{custom-call.1} parent=39 // pred_fallthru
        _
    $region40: #{custom-call.1} parent=1 // pred_fallthru
      _
    %1089 = vnop
    // Predicated region
    $region67: #{custom-call.1} parent=1 // pred_check
      _
    $region68: #{custom-call.1} parent=1 // pred_check_branch
      %1091 = sbr.rel (0) target = $region70
    $region69: #{custom-call.1} parent=1 // pred_region
      // Predicated region
      $region71: #{custom-call.1} parent=69 // pred_check
        _
      $region72: #{custom-call.1} parent=69 // pred_check_branch
        %1093 = sbr.rel target = $region74
      $region73: #{custom-call.1} parent=69 // pred_region
        // Predicated region
        $region86: #{custom-call.1} parent=73 // pred_check
          _
        $region87: #{custom-call.1} parent=73 // pred_check_branch
          %1108 = sbr.rel (0) target = $region89
        $region88: #{custom-call.1} parent=73 // pred_region
          loop: start=0, step=1, limit=1
          $region90: #{custom-call.1} parent=88 // loop_pre_header
            _
          $region91: #{custom-call.1} parent=88 // loop_header
            %s1111 = sphi 0, %s1115
            %p1112 = scmp.ge.s32.totalorder %s1111, 1
            %s1116 = sphi [#allocation10], [#allocation10]
            %s1117 = sphi %s2, %s2
          $region92: #{custom-call.1} parent=88 // loop_header_branch
            %1114 = sbr.rel (%p1112) target = $region96
          $region93: #{custom-call.1} parent=88 // loop_body
            %v1118 = vld [vmem:[%s1116] sm:$0x3]
            %1119 = vst [vmem:[%s1117] sm:$0x3] %v1118
          $region94: #{custom-call.1} parent=88 // loop_footer
            %s1115 = sadd.s32 1, %s1111
          $region95: #{custom-call.1} parent=88 // loop_footer_branch
            %1110 = sbr.rel target = $region91
          $region96: #{custom-call.1} parent=88 // loop_exit
            _
        $region89: #{custom-call.1} parent=73 // pred_fallthru
          _
      $region74: #{custom-call.1} parent=69 // pred_fallthru
        _
      // Predicated region
      $region75: #{custom-call.1} parent=69 // pred_check
        _
      $region76: #{custom-call.1} parent=69 // pred_check_branch
        %1095 = sbr.rel (0) target = $region78
      $region77: #{custom-call.1} parent=69 // pred_region
        loop: start=0, step=1, limit=1
        $region79: #{custom-call.1} parent=77 // loop_pre_header
          _
        $region80: #{custom-call.1} parent=77 // loop_header
          %s1098 = sphi 0, %s1102
          %p1099 = scmp.ge.s32.totalorder %s1098, 1
          %s1103 = sphi [#allocation10], [#allocation10]
          %s1104 = sphi %s2, %s2
        $region81: #{custom-call.1} parent=77 // loop_header_branch
          %1101 = sbr.rel (%p1099) target = $region85
        $region82: #{custom-call.1} parent=77 // loop_body
          %v1105 = vld [vmem:[%s1103] sm:$0x3]
          %1106 = vst [vmem:[%s1104] sm:$0x3] %v1105
        $region83: #{custom-call.1} parent=77 // loop_footer
          %s1102 = sadd.s32 1, %s1098
        $region84: #{custom-call.1} parent=77 // loop_footer_branch
          %1097 = sbr.rel target = $region80
        $region85: #{custom-call.1} parent=77 // loop_exit
          _
      $region78: #{custom-call.1} parent=69 // pred_fallthru
        _
    $region70: #{custom-call.1} parent=1 // pred_fallthru
      _
    %1120 = vnop

// kernel: forward.6
$region0: #{forward.6}
  #allocation0 [shape = 'u32[]', space=smem, size = 0x4, offset = 0x4, fixed_abs, tag = 'smem constant byte address 0x4 - core index']
  #allocation1 [shape = 'u32[144,128]{1,0:T(1,128)}', space=vmem, size = 0x12000, scoped, tag = 'internal scratch']
  %s0 = inlined_call_operand.vmem [shape: f32[2,8,5], index: 0, kind: input, shape index: {}]
  %s1 = inlined_call_operand.vmem [shape: f32[2,5,8], index: 1, kind: input, shape index: {}]
  %s2 = inlined_call_operand.vmem [shape: f32[2,8,8], index: 2, kind: output, shape index: {0}]
  %s3 = inlined_call_operand.vmem [shape: f32[2,8,8], index: 3, kind: output, shape index: {1}]
  %s4 = inlined_call_operand.vmem [shape: f32[2,4,8,8], index: 4, kind: output, shape index: {2}]
  %5 = xla_tuple %s2, %s3, %s4
  %s6 = sld [smem:[#allocation0]]
  $region57: #{forward.6} parent=0
    _
  %s8 = ssub.s32 1, %s6
  %s9 = scalar_select 0, %s8, %s6
  loop: start=0, step=1, limit=4
  $region2: #{forward.6} parent=0 // loop_pre_header
    _
  $region3: #{forward.6} parent=0 // loop_header
    %s11 = sphi 0, %s15
    %p12 = scmp.ge.s32.totalorder %s11, 4
    %s21 = sphi 0, %s23
    %s24 = sphi 0, %s21
    %s25 = sphi 0, %s24
    %s41 = sphi 0, %s25
    %s47 = sphi 0, %s49
    %s50 = sphi 0, %s47
    %s51 = sphi 0, %s50
    %s67 = sphi 0, %s51
    %s73 = sphi 0, %s75
    %s76 = sphi 0, %s73
    %s77 = sphi 0, %s76
    %s93 = sphi 0, %s77
    %s99 = sphi 0, %s101
    %s102 = sphi 0, %s99
    %s103 = sphi 0, %s102
    %s119 = sphi 0, %s103
    %s125 = sphi 0, %s127
    %s128 = sphi 0, %s125
    %s129 = sphi 0, %s128
    %s145 = sphi 0, %s129
  $region4: #{forward.6} parent=0 // loop_header_branch
    %14 = sbr.rel (%p12) target = $region8
  $region5: #{forward.6} parent=0 // loop_body
    %s16 = ssub.s32 %s11, 1
    %s17 = ssub.s32 %s11, 2
    %s18 = sadd.s32 %s11, 1
    %s19 = ssub.s32 %s11, %s18
    %p20 = scmp.eq.s32.totalorder %s19, 0
    %s22 = sadd.s32 %s21, 1
    %s23 = scalar_select %p20, %s21, %s22
    %p26 = pneg %p20
    %p27 = scmp.eq.s32.totalorder %s11, 1
    %p28 = por %p26, %p27
    %p29 = scmp.ne.s32.totalorder %s21, %s24
    %p30 = scmp.eq.s32.totalorder %s11, 0
    %p31 = por %p29, %p30
    %p32 = scmp.ne.s32.totalorder %s21, %s24
    %p33 = scmp.eq.s32.totalorder %s16, 1
    %p34 = por %p32, %p33
    %p35 = scmp.ne.s32.totalorder %s24, %s25
    %p36 = scmp.eq.s32.totalorder %s16, 0
    %p37 = por %p35, %p36
    %p38 = scmp.ne.s32.totalorder %s24, %s25
    %p39 = scmp.eq.s32.totalorder %s17, 1
    %p40 = por %p38, %p39
    %p42 = scmp.ne.s32.totalorder %s25, %s41
    %p43 = scmp.eq.s32.totalorder %s17, 0
    %p44 = por %p42, %p43
    %s45 = ssub.s32 %s11, %s18
    %p46 = scmp.eq.s32.totalorder %s45, 0
    %s48 = sadd.s32 %s47, 1
    %s49 = scalar_select %p46, %s47, %s48
    %p52 = pneg %p46
    %p53 = scmp.eq.s32.totalorder %s11, 1
    %p54 = por %p52, %p53
    %p55 = scmp.ne.s32.totalorder %s47, %s50
    %p56 = scmp.eq.s32.totalorder %s11, 0
    %p57 = por %p55, %p56
    %p58 = scmp.ne.s32.totalorder %s47, %s50
    %p59 = scmp.eq.s32.totalorder %s16, 1
    %p60 = por %p58, %p59
    %p61 = scmp.ne.s32.totalorder %s50, %s51
    %p62 = scmp.eq.s32.totalorder %s16, 0
    %p63 = por %p61, %p62
    %p64 = scmp.ne.s32.totalorder %s50, %s51
    %p65 = scmp.eq.s32.totalorder %s17, 1
    %p66 = por %p64, %p65
    %p68 = scmp.ne.s32.totalorder %s51, %s67
    %p69 = scmp.eq.s32.totalorder %s17, 0
    %p70 = por %p68, %p69
    %s71 = ssub.s32 %s11, %s18
    %p72 = scmp.eq.s32.totalorder %s71, 0
    %s74 = sadd.s32 %s73, 1
    %s75 = scalar_select %p72, %s73, %s74
    %p78 = pneg %p72
    %p79 = scmp.eq.s32.totalorder %s11, 1
    %p80 = por %p78, %p79
    %p81 = scmp.ne.s32.totalorder %s73, %s76
    %p82 = scmp.eq.s32.totalorder %s11, 0
    %p83 = por %p81, %p82
    %p84 = scmp.ne.s32.totalorder %s73, %s76
    %p85 = scmp.eq.s32.totalorder %s16, 1
    %p86 = por %p84, %p85
    %p87 = scmp.ne.s32.totalorder %s76, %s77
    %p88 = scmp.eq.s32.totalorder %s16, 0
    %p89 = por %p87, %p88
    %p90 = scmp.ne.s32.totalorder %s76, %s77
    %p91 = scmp.eq.s32.totalorder %s17, 1
    %p92 = por %p90, %p91
    %p94 = scmp.ne.s32.totalorder %s77, %s93
    %p95 = scmp.eq.s32.totalorder %s17, 0
    %p96 = por %p94, %p95
    %s97 = ssub.s32 %s11, %s18
    %p98 = scmp.eq.s32.totalorder %s97, 0
    %s100 = sadd.s32 %s99, 1
    %s101 = scalar_select %p98, %s99, %s100
    %p104 = pneg %p98
    %p105 = scmp.eq.s32.totalorder %s11, 1
    %p106 = por %p104, %p105
    %p107 = scmp.ne.s32.totalorder %s99, %s102
    %p108 = scmp.eq.s32.totalorder %s11, 0
    %p109 = por %p107, %p108
    %p110 = scmp.ne.s32.totalorder %s99, %s102
    %p111 = scmp.eq.s32.totalorder %s16, 1
    %p112 = por %p110, %p111
    %p113 = scmp.ne.s32.totalorder %s102, %s103
    %p114 = scmp.eq.s32.totalorder %s16, 0
    %p115 = por %p113, %p114
    %p116 = scmp.ne.s32.totalorder %s102, %s103
    %p117 = scmp.eq.s32.totalorder %s17, 1
    %p118 = por %p116, %p117
    %p120 = scmp.ne.s32.totalorder %s103, %s119
    %p121 = scmp.eq.s32.totalorder %s17, 0
    %p122 = por %p120, %p121
    %s123 = ssub.s32 %s11, %s18
    %p124 = scmp.eq.s32.totalorder %s123, 0
    %s126 = sadd.s32 %s125, 1
    %s127 = scalar_select %p124, %s125, %s126
    %p130 = pneg %p124
    %p131 = scmp.eq.s32.totalorder %s11, 1
    %p132 = por %p130, %p131
    %p133 = scmp.ne.s32.totalorder %s125, %s128
    %p134 = scmp.eq.s32.totalorder %s11, 0
    %p135 = por %p133, %p134
    %p136 = scmp.ne.s32.totalorder %s125, %s128
    %p137 = scmp.eq.s32.totalorder %s16, 1
    %p138 = por %p136, %p137
    %p139 = scmp.ne.s32.totalorder %s128, %s129
    %p140 = scmp.eq.s32.totalorder %s16, 0
    %p141 = por %p139, %p140
    %p142 = scmp.ne.s32.totalorder %s128, %s129
    %p143 = scmp.eq.s32.totalorder %s17, 1
    %p144 = por %p142, %p143
    %p146 = scmp.ne.s32.totalorder %s129, %s145
    %p147 = scmp.eq.s32.totalorder %s17, 0
    %p148 = por %p146, %p147
    %p149 = scmp.le.s32.totalorder 1, %s11
    %p150 = scmp.lt.s32.totalorder %s11, 3
    %p151 = pnand %p149, %p150
    %p152 = pneg %p151
    // Predicated region
    $region9: #{forward.6} parent=5 // pred_check
      _
    $region10: #{forward.6} parent=5 // pred_check_branch
      %154 = sbr.rel (%p151) target = $region12
    $region11: #{forward.6} parent=5 // pred_region
      %s155 = ssub.s32 %s11, 1
    $region12: #{forward.6} parent=5 // pred_fallthru
      _
    %p156 = scmp.lt.s32.totalorder %s11, 2
    // Predicated region
    $region13: #{forward.6} parent=5 // pred_check
      %p157 = pneg %p156
    $region14: #{forward.6} parent=5 // pred_check_branch
      %159 = sbr.rel (%p157) target = $region16
    $region15: #{forward.6} parent=5 // pred_region
      // Predicated region
      $region17: #{forward.6} parent=15 // pred_check
        %p160 = pneg %p31
      $region18: #{forward.6} parent=15 // pred_check_branch
        %162 = sbr.rel (%p160) target = $region20
      $region19: #{forward.6} parent=15 // pred_region
        %p163 = scmp.lt.s32.totalorder %s11, 1
        %s164 = scalar_select %p163, %s11, 1
        %s165 = smul.addr %s164, 8
        %s166 = scalar_lea.vmem %s0, %s165
      $region20: #{forward.6} parent=15 // pred_fallthru
        _
      // Predicated region
      $region21: #{forward.6} parent=15 // pred_check
        %p167 = pneg %p57
      $region22: #{forward.6} parent=15 // pred_check_branch
        %169 = sbr.rel (%p167) target = $region24
      $region23: #{forward.6} parent=15 // pred_region
        %p170 = scmp.lt.s32.totalorder %s11, 1
        %s171 = scalar_select %p170, %s11, 1
        %s172 = smul.addr %s171, 8
        %s173 = scalar_lea.vmem %s1, %s172
      $region24: #{forward.6} parent=15 // pred_fallthru
        _
    $region16: #{forward.6} parent=5 // pred_fallthru
      _
    %p174 = scmp.le.s32.totalorder 1, %s11
    %p175 = scmp.lt.s32.totalorder %s11, 3
    %p176 = pnand %p174, %p175
    %p177 = pneg %p176
    // Predicated region
    $region25: #{forward.6} parent=5 // pred_check
      _
    $region26: #{forward.6} parent=5 // pred_check_branch
      %179 = sbr.rel (%p176) target = $region28
    $region27: #{forward.6} parent=5 // pred_region
      %s180 = ssub.s32 %s11, 1
      %p181 = scmp.lt.s32.totalorder %s16, 1
      %s182 = scalar_select %p181, %s16, 1
      %s183 = smul.addr %s182, 8
      %s184 = scalar_lea.vmem %s0, %s183
      %p185 = pneg %p37
      %p186 = pneg %p34
      %p187 = scmp.lt.s32.totalorder %s16, 1
      %s188 = scalar_select %p187, %s16, 1
      %s189 = smul.addr %s188, 8
      %s190 = scalar_lea.vmem %s1, %s189
      %p191 = pneg %p63
      %p192 = pneg %p60
      %p193 = pneg %p89
      %p194 = pneg %p86
      %p195 = scmp.lt.s32.totalorder %s16, 1
      %s196 = scalar_select %p195, %s16, 1
      %s197 = smul.addr %s196, 8
      %s198 = scalar_lea.vmem %s2, %s197
      %p199 = pneg %p115
      %p200 = pneg %p112
      %p201 = scmp.lt.s32.totalorder %s16, 1
      %s202 = scalar_select %p201, %s16, 1
      %s203 = smul.addr %s202, 8
      %s204 = scalar_lea.vmem %s3, %s203
      %p205 = pneg %p141
      %p206 = pneg %p138
      %p207 = scmp.lt.s32.totalorder %s16, 1
      %s208 = scalar_select %p207, %s16, 1
      %s209 = smul.addr %s208, 4
      %s210 = smul.addr %s209, 8
      %s211 = scalar_lea.vmem %s4, %s210
      %p212 = scmp.lt.s32.totalorder %s16, 1
      %s213 = scalar_select %p212, %s16, 1
      %s214 = smul.addr %s213, 8
      %s215 = scalar_lea.vmem %s0, %s214
      %p216 = scmp.lt.s32.totalorder %s16, 1
      %s217 = scalar_select %p216, %s16, 1
      %s218 = smul.addr %s217, 8
      %s219 = scalar_lea.vmem %s1, %s218
      %p220 = scmp.lt.s32.totalorder %s16, 1
      %s221 = scalar_select %p220, %s16, 1
      %s222 = smul.addr %s221, 8
      %s223 = scalar_lea.vmem %s2, %s222
      %p224 = scmp.lt.s32.totalorder %s16, 1
      %s225 = scalar_select %p224, %s16, 1
      %s226 = smul.addr %s225, 8
      %s227 = scalar_lea.vmem %s3, %s226
      %p228 = scmp.lt.s32.totalorder %s16, 1
      %s229 = scalar_select %p228, %s16, 1
      %s230 = smul.addr %s229, 4
      %s231 = smul.addr %s230, 8
      %s232 = scalar_lea.vmem %s4, %s231
      %v233 = vld [vmem:[%s215] sm:$0xff]
      %v234 = vld [vmem:[%s219] sm:$0x1f]
      %v235 = vmul.f32 %v233, 4.0
      %v236 = vmax.f32 %v235, 0.0
      %v237 = vmul.f32 %v234, 4.0
      %v238 = vmax.f32 %v237, 0.0
      %240 = vset.pattern.permute.xlu0 2
      %241 = vperm.xlu0 %240, %v233
      %v242 = vpop.permute.xlu0 %241
      %v244 = vlaneseq
      %v245 = vshrl.u32 %v244, 7
      %v246 = vsub.s32 2, %v245
      %v247 = vrot.slane %v234, %v246
      %v248 = vadd.f32 %v242, %v247
      %v249 = vmul.f32 %v248, 0.5
      %250 = vset.pattern.permute.xlu0 4
      %251 = vperm.xlu0 %250, %v233
      %v252 = vpop.permute.xlu0 %251
      %v254 = vlaneseq
      %v255 = vshrl.u32 %v254, 7
      %v256 = vsub.s32 4, %v255
      %v257 = vrot.slane %v234, %v256
      %v258 = vsub.f32 %v252, %v257
      %v259 = vand.u32 2147483647, %v258
      %260 = vset.pattern.permute.xlu0 3
      %261 = vperm.xlu0 %260, %v233
      %v262 = vpop.permute.xlu0 %261
      %v264 = vlaneseq
      %v265 = vshrl.u32 %v264, 7
      %v266 = vsub.s32 3, %v265
      %v267 = vrot.slane %v234, %v266
      %vm268 = vcmp.ne.f32.partialorder %v262, %v267
      %vm269 = vcmp.gt.f32.partialorder %v259, 0.5
      %vm270 = vmor %vm268, %vm269
      %v271 = vlaneseq
      %v272 = vshrl.u32 %v271, 7
      %v273 = vsub.s32 0, %v272
      %v274 = vrot.slane %v238, %v273
      %276 = vset.pattern.permute.xlu0 0
      %277 = vperm.xlu0 %276, %v236
      %v278 = vpop.permute.xlu0 %277
      %vm280 = vcmp.le.f32.partialorder %v274, %v278
      %vm281 = vmor %vm270, %vm280
      %v282 = vlaneseq
      %v283 = vshrl.u32 %v282, 7
      %v284 = vsub.s32 1, %v283
      %v285 = vrot.slane %v238, %v284
      %286 = vset.pattern.permute.xlu0 1
      %287 = vperm.xlu0 %286, %v236
      %v288 = vpop.permute.xlu0 %287
      %vm290 = vcmp.le.f32.partialorder %v285, %v288
      %vm291 = vmor %vm281, %vm290
      %v292 = vsel %vm291, -1.0, %v249
      %vm293 = vcmask 64512
      %294 = vst.msk [vmem:[%s223] sm:$0xff] %vm293, %v292
      %295 = vst.msk [vmem:[%s227] sm:$0xff] %vm293, %v262
      %296 = vst.msk [vmem:[%s232] sm:$0xff] %vm293, %v278
      %s297 = scalar_lea.vmem %s232, 8
      %298 = vst.msk [vmem:[%s297] sm:$0xff] %vm293, %v288
      %s299 = scalar_lea.vmem %s232, 16
      %300 = vst.msk [vmem:[%s299] sm:$0xff] %vm293, %v274
      %s301 = scalar_lea.vmem %s232, 24
      %302 = vst.msk [vmem:[%s301] sm:$0xff] %vm293, %v285
      %p303 = scmp.lt.s32.totalorder %s16, 1
      %s304 = scalar_select %p303, %s16, 1
      %s305 = smul.addr %s304, 8
      %s306 = scalar_lea.vmem %s2, %s305
      %p307 = scmp.lt.s32.totalorder %s16, 1
      %s308 = scalar_select %p307, %s16, 1
      %s309 = smul.addr %s308, 8
      %s310 = scalar_lea.vmem %s3, %s309
      %p311 = scmp.lt.s32.totalorder %s16, 1
      %s312 = scalar_select %p311, %s16, 1
      %s313 = smul.addr %s312, 4
      %s314 = smul.addr %s313, 8
      %s315 = scalar_lea.vmem %s4, %s314
      // Predicated region
      $region29: #{forward.6} parent=27 // pred_check
        %p316 = pneg %p86
      $region30: #{forward.6} parent=27 // pred_check_branch
        %318 = sbr.rel (%p316) target = $region32
      $region31: #{forward.6} parent=27 // pred_region
        _
      $region32: #{forward.6} parent=27 // pred_fallthru
        _
      // Predicated region
      $region33: #{forward.6} parent=27 // pred_check
        %p319 = pneg %p112
      $region34: #{forward.6} parent=27 // pred_check_branch
        %321 = sbr.rel (%p319) target = $region36
      $region35: #{forward.6} parent=27 // pred_region
        _
      $region36: #{forward.6} parent=27 // pred_fallthru
        _
      // Predicated region
      $region37: #{forward.6} parent=27 // pred_check
        %p322 = pneg %p138
      $region38: #{forward.6} parent=27 // pred_check_branch
        %324 = sbr.rel (%p322) target = $region40
      $region39: #{forward.6} parent=27 // pred_region
        _
      $region40: #{forward.6} parent=27 // pred_fallthru
        _
    $region28: #{forward.6} parent=5 // pred_fallthru
      _
    %p325 = scmp.le.s32.totalorder 2, %s11
    // Predicated region
    $region41: #{forward.6} parent=5 // pred_check
      %p326 = pneg %p325
    $region42: #{forward.6} parent=5 // pred_check_branch
      %328 = sbr.rel (%p326) target = $region44
    $region43: #{forward.6} parent=5 // pred_region
      %s329 = ssub.s32 %s11, 2
      // Predicated region
      $region45: #{forward.6} parent=43 // pred_check
        %p330 = pneg %p92
      $region46: #{forward.6} parent=43 // pred_check_branch
        %332 = sbr.rel (%p330) target = $region48
      $region47: #{forward.6} parent=43 // pred_region
        %p333 = scmp.lt.s32.totalorder %s17, 1
        %s334 = scalar_select %p333, %s17, 1
        %s335 = smul.addr %s334, 8
        %s336 = scalar_lea.vmem %s2, %s335
      $region48: #{forward.6} parent=43 // pred_fallthru
        _
      // Predicated region
      $region49: #{forward.6} parent=43 // pred_check
        %p337 = pneg %p118
      $region50: #{forward.6} parent=43 // pred_check_branch
        %339 = sbr.rel (%p337) target = $region52
      $region51: #{forward.6} parent=43 // pred_region
        %p340 = scmp.lt.s32.totalorder %s17, 1
        %s341 = scalar_select %p340, %s17, 1
        %s342 = smul.addr %s341, 8
        %s343 = scalar_lea.vmem %s3, %s342
      $region52: #{forward.6} parent=43 // pred_fallthru
        _
      // Predicated region
      $region53: #{forward.6} parent=43 // pred_check
        %p344 = pneg %p144
      $region54: #{forward.6} parent=43 // pred_check_branch
        %346 = sbr.rel (%p344) target = $region56
      $region55: #{forward.6} parent=43 // pred_region
        %p347 = scmp.lt.s32.totalorder %s17, 1
        %s348 = scalar_select %p347, %s17, 1
        %s349 = smul.addr %s348, 4
        %s350 = smul.addr %s349, 8
        %s351 = scalar_lea.vmem %s4, %s350
      $region56: #{forward.6} parent=43 // pred_fallthru
        _
    $region44: #{forward.6} parent=5 // pred_fallthru
      _
  $region6: #{forward.6} parent=0 // loop_footer
    %s15 = sadd.s32 1, %s11
  $region7: #{forward.6} parent=0 // loop_footer_branch
    %10 = sbr.rel target = $region3
  $region8: #{forward.6} parent=0 // loop_exit
    _

// kernel: forward.7
$region0: #{forward.7}
  #allocation0 [shape = 'u32[]', space=smem, size = 0x4, offset = 0x4, fixed_abs, tag = 'smem constant byte address 0x4 - core index']
  #allocation1 [shape = 'u32[144,128]{1,0:T(1,128)}', space=vmem, size = 0x12000, scoped, tag = 'internal scratch']
  %s0 = inlined_call_operand.vmem [shape: f32[2,32,8], index: 0, kind: input, shape index: {}]
  %s1 = inlined_call_operand.vmem [shape: f32[2,8,32], index: 1, kind: input, shape index: {}]
  %s2 = inlined_call_operand.vmem [shape: f32[2,16,8], index: 2, kind: output, shape index: {}]
  %s3 = sld [smem:[#allocation0]]
  $region48: #{forward.7} parent=0
    _
  %s5 = ssub.s32 1, %s3
  %s6 = scalar_select 0, %s5, %s3
  loop: start=0, step=1, limit=4
  $region2: #{forward.7} parent=0 // loop_pre_header
    _
  $region3: #{forward.7} parent=0 // loop_header
    %s8 = sphi 0, %s12
    %p9 = scmp.ge.s32.totalorder %s8, 4
    %s18 = sphi 0, %s20
    %s21 = sphi 0, %s18
    %s22 = sphi 0, %s21
    %s38 = sphi 0, %s22
    %s44 = sphi 0, %s46
    %s47 = sphi 0, %s44
    %s48 = sphi 0, %s47
    %s64 = sphi 0, %s48
    %s70 = sphi 0, %s72
    %s73 = sphi 0, %s70
    %s74 = sphi 0, %s73
    %s90 = sphi 0, %s74
  $region4: #{forward.7} parent=0 // loop_header_branch
    %11 = sbr.rel (%p9) target = $region8
  $region5: #{forward.7} parent=0 // loop_body
    %s13 = ssub.s32 %s8, 1
    %s14 = ssub.s32 %s8, 2
    %s15 = sadd.s32 %s8, 1
    %s16 = ssub.s32 %s8, %s15
    %p17 = scmp.eq.s32.totalorder %s16, 0
    %s19 = sadd.s32 %s18, 1
    %s20 = scalar_select %p17, %s18, %s19
    %p23 = pneg %p17
    %p24 = scmp.eq.s32.totalorder %s8, 1
    %p25 = por %p23, %p24
    %p26 = scmp.ne.s32.totalorder %s18, %s21
    %p27 = scmp.eq.s32.totalorder %s8, 0
    %p28 = por %p26, %p27
    %p29 = scmp.ne.s32.totalorder %s18, %s21
    %p30 = scmp.eq.s32.totalorder %s13, 1
    %p31 = por %p29, %p30
    %p32 = scmp.ne.s32.totalorder %s21, %s22
    %p33 = scmp.eq.s32.totalorder %s13, 0
    %p34 = por %p32, %p33
    %p35 = scmp.ne.s32.totalorder %s21, %s22
    %p36 = scmp.eq.s32.totalorder %s14, 1
    %p37 = por %p35, %p36
    %p39 = scmp.ne.s32.totalorder %s22, %s38
    %p40 = scmp.eq.s32.totalorder %s14, 0
    %p41 = por %p39, %p40
    %s42 = ssub.s32 %s8, %s15
    %p43 = scmp.eq.s32.totalorder %s42, 0
    %s45 = sadd.s32 %s44, 1
    %s46 = scalar_select %p43, %s44, %s45
    %p49 = pneg %p43
    %p50 = scmp.eq.s32.totalorder %s8, 1
    %p51 = por %p49, %p50
    %p52 = scmp.ne.s32.totalorder %s44, %s47
    %p53 = scmp.eq.s32.totalorder %s8, 0
    %p54 = por %p52, %p53
    %p55 = scmp.ne.s32.totalorder %s44, %s47
    %p56 = scmp.eq.s32.totalorder %s13, 1
    %p57 = por %p55, %p56
    %p58 = scmp.ne.s32.totalorder %s47, %s48
    %p59 = scmp.eq.s32.totalorder %s13, 0
    %p60 = por %p58, %p59
    %p61 = scmp.ne.s32.totalorder %s47, %s48
    %p62 = scmp.eq.s32.totalorder %s14, 1
    %p63 = por %p61, %p62
    %p65 = scmp.ne.s32.totalorder %s48, %s64
    %p66 = scmp.eq.s32.totalorder %s14, 0
    %p67 = por %p65, %p66
    %s68 = ssub.s32 %s8, %s15
    %p69 = scmp.eq.s32.totalorder %s68, 0
    %s71 = sadd.s32 %s70, 1
    %s72 = scalar_select %p69, %s70, %s71
    %p75 = pneg %p69
    %p76 = scmp.eq.s32.totalorder %s8, 1
    %p77 = por %p75, %p76
    %p78 = scmp.ne.s32.totalorder %s70, %s73
    %p79 = scmp.eq.s32.totalorder %s8, 0
    %p80 = por %p78, %p79
    %p81 = scmp.ne.s32.totalorder %s70, %s73
    %p82 = scmp.eq.s32.totalorder %s13, 1
    %p83 = por %p81, %p82
    %p84 = scmp.ne.s32.totalorder %s73, %s74
    %p85 = scmp.eq.s32.totalorder %s13, 0
    %p86 = por %p84, %p85
    %p87 = scmp.ne.s32.totalorder %s73, %s74
    %p88 = scmp.eq.s32.totalorder %s14, 1
    %p89 = por %p87, %p88
    %p91 = scmp.ne.s32.totalorder %s74, %s90
    %p92 = scmp.eq.s32.totalorder %s14, 0
    %p93 = por %p91, %p92
    %p94 = scmp.le.s32.totalorder 1, %s8
    %p95 = scmp.lt.s32.totalorder %s8, 3
    %p96 = pnand %p94, %p95
    %p97 = pneg %p96
    // Predicated region
    $region9: #{forward.7} parent=5 // pred_check
      _
    $region10: #{forward.7} parent=5 // pred_check_branch
      %99 = sbr.rel (%p96) target = $region12
    $region11: #{forward.7} parent=5 // pred_region
      %s100 = ssub.s32 %s8, 1
    $region12: #{forward.7} parent=5 // pred_fallthru
      _
    %p101 = scmp.lt.s32.totalorder %s8, 2
    // Predicated region
    $region13: #{forward.7} parent=5 // pred_check
      %p102 = pneg %p101
    $region14: #{forward.7} parent=5 // pred_check_branch
      %104 = sbr.rel (%p102) target = $region16
    $region15: #{forward.7} parent=5 // pred_region
      // Predicated region
      $region17: #{forward.7} parent=15 // pred_check
        %p105 = pneg %p28
      $region18: #{forward.7} parent=15 // pred_check_branch
        %107 = sbr.rel (%p105) target = $region20
      $region19: #{forward.7} parent=15 // pred_region
        %p108 = scmp.lt.s32.totalorder %s8, 1
        %s109 = scalar_select %p108, %s8, 1
        %s110 = smul.addr %s109, 4
        %s111 = smul.addr %s110, 8
        %s112 = scalar_lea.vmem %s0, %s111
      $region20: #{forward.7} parent=15 // pred_fallthru
        _
      // Predicated region
      $region21: #{forward.7} parent=15 // pred_check
        %p113 = pneg %p54
      $region22: #{forward.7} parent=15 // pred_check_branch
        %115 = sbr.rel (%p113) target = $region24
      $region23: #{forward.7} parent=15 // pred_region
        %p116 = scmp.lt.s32.totalorder %s8, 1
        %s117 = scalar_select %p116, %s8, 1
        %s118 = smul.addr %s117, 8
        %s119 = scalar_lea.vmem %s1, %s118
      $region24: #{forward.7} parent=15 // pred_fallthru
        _
    $region16: #{forward.7} parent=5 // pred_fallthru
      _
    %p120 = scmp.le.s32.totalorder 1, %s8
    %p121 = scmp.lt.s32.totalorder %s8, 3
    %p122 = pnand %p120, %p121
    %p123 = pneg %p122
    // Predicated region
    $region25: #{forward.7} parent=5 // pred_check
      _
    $region26: #{forward.7} parent=5 // pred_check_branch
      %125 = sbr.rel (%p122) target = $region28
    $region27: #{forward.7} parent=5 // pred_region
      %s126 = ssub.s32 %s8, 1
      %p127 = scmp.lt.s32.totalorder %s13, 1
      %s128 = scalar_select %p127, %s13, 1
      %s129 = smul.addr %s128, 4
      %s130 = smul.addr %s129, 8
      %s131 = scalar_lea.vmem %s0, %s130
      %p132 = pneg %p34
      %p133 = pneg %p31
      %p134 = scmp.lt.s32.totalorder %s13, 1
      %s135 = scalar_select %p134, %s13, 1
      %s136 = smul.addr %s135, 8
      %s137 = scalar_lea.vmem %s1, %s136
      %p138 = pneg %p60
      %p139 = pneg %p57
      %p140 = pneg %p86
      %p141 = pneg %p83
      %p142 = scmp.lt.s32.totalorder %s13, 1
      %s143 = scalar_select %p142, %s13, 1
      %s144 = smul.addr %s143, 2
      %s145 = smul.addr %s144, 8
      %s146 = scalar_lea.vmem %s2, %s145
      %p147 = scmp.lt.s32.totalorder %s13, 1
      %s148 = scalar_select %p147, %s13, 1
      %s149 = smul.addr %s148, 4
      %s150 = smul.addr %s149, 8
      %s151 = scalar_lea.vmem %s0, %s150
      %p152 = scmp.lt.s32.totalorder %s13, 1
      %s153 = scalar_select %p152, %s13, 1
      %s154 = smul.addr %s153, 8
      %s155 = scalar_lea.vmem %s1, %s154
      %p156 = scmp.lt.s32.totalorder %s13, 1
      %s157 = scalar_select %p156, %s13, 1
      %s158 = smul.addr %s157, 2
      %s159 = smul.addr %s158, 8
      %s160 = scalar_lea.vmem %s2, %s159
      %v161 = vld [vmem:[%s155] sm:$0xff]
      %v163 = vrot.slane %v161, 6
      %v165 = vsub.f32 %v161, %v163
      %v166 = vmax.f32 %v165, 0.0
      %v168 = vrot.slane %v166, 1
      %v170 = vmul.f32 %v166, %v168
      %v171 = vlaneseq
      %v172 = vand.u32 %v171, 127
      %vm173 = vcmp.eq.s32.totalorder %v172, 5
      %v174 = vsel %vm173, -1.0, 0.0
      %vm175 = vcmp.gt.f32.partialorder %v161, 0.05
      %v176 = vsel %vm175, %v161, -inf
      %v178 = vrot.slane %v176, 4
      loop: start=0, step=1, limit=16
      $region29: #{forward.7} parent=27 // loop_pre_header
        _
      $region30: #{forward.7} parent=27 // loop_header
        %s181 = sphi 0, %s185
        %p182 = scmp.ge.s32.totalorder %s181, 16
        %v186 = vphi %v178, %v306
      $region31: #{forward.7} parent=27 // loop_header_branch
        %184 = sbr.rel (%p182) target = $region35
      $region32: #{forward.7} parent=27 // loop_body
        %vm187 = vcmask 253952
        %v188 = vsel %vm187, %v186, -inf
        %189 = vmax.xlane.f32.xlu0 %v188
        %v190 = vpop.xlane.xlu0 %189
        %v191 = vrot.slane %v190, 4
        %v192 = vmax.f32 %v190, %v191
        %v193 = vrot.slane %v192, 2
        %v194 = vmax.f32 %v192, %v193
        %v195 = vrot.slane %v194, 1
        %v196 = vmax.f32 %v194, %v195
        %s197 = vtos %v196
        %p198 = scmp.gt.f32.partialorder %s197, -inf
        %v199 = vstv %s197
        %vm200 = vcmp.eq.f32.partialorder %v186, %v199
        %v201 = vsel %vm200, %v172, 32
        %v202 = vsel %vm187, %v201, 2147483647
        %v203 = vand.u32 %v202, 65535
        %v204 = vshra.s32 %v202, 16
        %v205 = vcvt.s32.f32 %v203
        %v206 = vcvt.s32.f32 %v204
        %207 = vmin.xlane.f32.xlu0 %v206
        %v208 = vpop.xlane.xlu0 %207
        %vm209 = vcmp.eq.f32.partialorder %v206, %v208
        %v210 = vsel %vm209, %v205, inf
        %211 = vmin.xlane.f32.xlu0 %v210
        %v212 = vpop.xlane.xlu0 %211
        %v213 = vcvt.f32.s32 %v212
        %v214 = vcvt.f32.s32 %v208
        %v215 = vshll.u32 %v214, 16
        %v216 = vadd.s32 %v215, %v213
        %v217 = vrot.slane %v216, 4
        %vm218 = vcmp.lt.s32.totalorder %v216, %v217
        %v219 = vsel %vm218, %v216, %v217
        %v220 = vrot.slane %v219, 2
        %vm221 = vcmp.lt.s32.totalorder %v219, %v220
        %v222 = vsel %vm221, %v219, %v220
        %v223 = vrot.slane %v222, 1
        %vm224 = vcmp.lt.s32.totalorder %v222, %v223
        %v225 = vsel %vm224, %v222, %v223
        %s226 = vtos %v225
        %s227 = scalar_lea.vmem %s151, %s226
        %v228 = vld [vmem:[%s227] sm:$0x1]
        %230 = vset.pattern.permute.xlu0 0
        %231 = vperm.xlu0 %230, %v228
        %v232 = vpop.permute.xlu0 %231
        %v234 = vmax.f32 %v232, %v161
        %235 = vset.pattern.permute.xlu0 1
        %236 = vperm.xlu0 %235, %v228
        %v237 = vpop.permute.xlu0 %236
        %v239 = vrot.slane %v161, 1
        %v241 = vmax.f32 %v237, %v239
        %242 = vset.pattern.permute.xlu0 2
        %243 = vperm.xlu0 %242, %v228
        %v244 = vpop.permute.xlu0 %243
        %v246 = vrot.slane %v161, 2
        %v248 = vmin.f32 %v244, %v246
        %249 = vset.pattern.permute.xlu0 3
        %250 = vperm.xlu0 %249, %v228
        %v251 = vpop.permute.xlu0 %250
        %v253 = vrot.slane %v161, 3
        %v255 = vmin.f32 %v251, %v253
        %v256 = vsub.f32 %v248, %v234
        %v257 = vmax.f32 %v256, 0.0
        %v258 = vsub.f32 %v255, %v241
        %v259 = vmax.f32 %v258, 0.0
        %v260 = vmul.f32 %v257, %v259
        %261 = vrot.lane.b32.xlu0 %v228, 2
        %v262 = vpop.permute.xlu0 %261
        %v264 = vsub.f32 %v228, %v262
        %v265 = vmax.f32 %v264, 0.0
        %267 = vrot.lane.b32.xlu0 %v265, 127
        %v268 = vpop.permute.xlu0 %267
        %v270 = vmul.f32 %v265, %v268
        %272 = vset.pattern.permute.xlu0 2
        %273 = vperm.xlu0 %272, %v270
        %v274 = vpop.permute.xlu0 %273
        %v275 = vrot.slane %v274, 6
        %v277 = vadd.f32 %v170, %v275
        %v279 = vrot.slane %v260, 6
        %v281 = vsub.f32 %v277, %v279
        %v282 = vmax.f32 %v281, 1e-06
        %v284 = vrot.slane %v282, 2
        %v286 = vrcp.pop %v284
        %v287 = vmul.f32 %v260, %v286
        %vm288 = vcmp.ge.f32.partialorder %v287, 0.5
        %289 = vset.pattern.permute.xlu0 5
        %290 = vperm.xlu0 %289, %v228
        %v291 = vpop.permute.xlu0 %290
        %v292 = vrot.slane %v291, 3
        %vm294 = vcmp.eq.f32.partialorder %v161, %v292
        %v295 = vsel %vm294, 1, 0
        %v296 = vrot.slane %v295, 5
        %vm297 = vcmp.ne.s32.totalorder %v296, 0
        %vm298 = vmand %vm288, %vm297
        %v299 = vstv %s226
        %vm300 = vcmp.eq.s32.totalorder %v172, %v299
        %vm301 = vmor %vm298, %vm300
        %s302 = scalar_select %p198, 1, 0
        %v303 = vstv %s302
        %vm304 = vcmp.eq.s32.totalorder %v303, 1
        %vm305 = vmand %vm304, %vm301
        %v306 = vsel %vm305, -inf, %v186
        %v307 = vsel %vm304, %v228, %v174
        %s308 = scalar_lea.vmem %s160, %s181
        %vm309 = vcmask 57344
        %310 = vst.msk [vmem:[%s308] sm:$0x1] %vm309, %v307
      $region33: #{forward.7} parent=27 // loop_footer
        %s185 = sadd.s32 1, %s181
      $region34: #{forward.7} parent=27 // loop_footer_branch
        %180 = sbr.rel target = $region30
      $region35: #{forward.7} parent=27 // loop_exit
        _
      %p311 = scmp.lt.s32.totalorder %s13, 1
      %s312 = scalar_select %p311, %s13, 1
      %s313 = smul.addr %s312, 2
      %s314 = smul.addr %s313, 8
      %s315 = scalar_lea.vmem %s2, %s314
      // Predicated region
      $region36: #{forward.7} parent=27 // pred_check
        %p316 = pneg %p83
      $region37: #{forward.7} parent=27 // pred_check_branch
        %318 = sbr.rel (%p316) target = $region39
      $region38: #{forward.7} parent=27 // pred_region
        _
      $region39: #{forward.7} parent=27 // pred_fallthru
        _
    $region28: #{forward.7} parent=5 // pred_fallthru
      _
    %p319 = scmp.le.s32.totalorder 2, %s8
    // Predicated region
    $region40: #{forward.7} parent=5 // pred_check
      %p320 = pneg %p319
    $region41: #{forward.7} parent=5 // pred_check_branch
      %322 = sbr.rel (%p320) target = $region43
    $region42: #{forward.7} parent=5 // pred_region
      %s323 = ssub.s32 %s8, 2
      // Predicated region
      $region44: #{forward.7} parent=42 // pred_check
        %p324 = pneg %p89
      $region45: #{forward.7} parent=42 // pred_check_branch
        %326 = sbr.rel (%p324) target = $region47
      $region46: #{forward.7} parent=42 // pred_region
        %p327 = scmp.lt.s32.totalorder %s14, 1
        %s328 = scalar_select %p327, %s14, 1
        %s329 = smul.addr %s328, 2
        %s330 = smul.addr %s329, 8
        %s331 = scalar_lea.vmem %s2, %s330
      $region47: #{forward.7} parent=42 // pred_fallthru
        _
    $region43: #{forward.7} parent=5 // pred_fallthru
      _
  $region6: #{forward.7} parent=0 // loop_footer
    %s12 = sadd.s32 1, %s8
  $region7: #{forward.7} parent=0 // loop_footer_branch
    %7 = sbr.rel target = $region3
  $region8: #{forward.7} parent=0 // loop_exit
    _

</llo_original>
